<compile_context>
chip_gen: v7x
topology: tpu7x:2x2x1
jax: 0.10.0
libtpu: 0.0.40
codegen_flags: <defaults>
</compile_context>

<pallas_src>
import functools

import jax
import jax.numpy as jnp
from jax import lax
from jax.experimental import pallas as pl
from jax.experimental.pallas import tpu as pltpu


# ---------------------------------------------------------------------------
# Fused kernel: one (batch, row-tile) step of the whole bottleneck block.
# ---------------------------------------------------------------------------

def _bottleneck_kernel(x_ref, xt_ref, xb_ref, w1_ref, w2_ref, w3_ref,
                       o_ref, t1_ref, *, TH, W, d):
    """
    x_ref  : (1, TH*W, Cin)   core pixels of this row tile (also the residual)
    xt_ref : (1, d*W,  Cin)   d image rows just above the tile (ignored at i==0)
    xb_ref : (1, d*W,  Cin)   d image rows just below the tile (ignored at last i)
    w1_ref : (Cin, P)         conv1 1x1
    w2_ref : (3, 3, P, P)     conv2 3x3, HWIO
    w3_ref : (P, 4P)          conv3 1x1
    o_ref  : (1, TH*W, 4P)
    t1_ref : ((TH+2d)*W, P)   VMEM scratch: conv1 output (+ReLU) for the tile
                              rows plus d halo rows above/below, flattened over
                              (row, width).  All conv2 taps read it at offsets
                              that are multiples of d*W (sublane aligned).
    """
    i = pl.program_id(1)
    ni = pl.num_programs(1)

    M = TH * W
    dW = d * W
    P = w1_ref.shape[1]
    f32 = jnp.float32
    dt = t1_ref.dtype

    w1 = w1_ref[...]

    # ---- conv1 (1x1) + ReLU into the halo|core|halo scratch ------------------
    t1_core = jnp.maximum(
        jnp.dot(x_ref[0], w1, preferred_element_type=f32), 0.0)
    t1_ref[dW:dW + M] = t1_core.astype(dt)

    # Halo rows: conv1 of the d rows above/below the tile; at the image border
    # they are conv2's zero padding, realized by scaling with a 0/1 scalar so
    # each halo is exactly one unconditional store (low vst pressure on v5e;
    # and every step fully rewrites its scratch, which keeps ("parallel",
    # "parallel") per-core sharding on v7x correct).
    top_ok = (i > 0).astype(f32)
    bot_ok = (i < ni - 1).astype(f32)
    th = jnp.maximum(jnp.dot(xt_ref[0], w1, preferred_element_type=f32), 0.0)
    t1_ref[0:dW] = (th * top_ok).astype(dt)
    bh = jnp.maximum(jnp.dot(xb_ref[0], w1, preferred_element_type=f32), 0.0)
    t1_ref[dW + M:2 * dW + M] = (bh * bot_ok).astype(dt)

    # ---- conv2 (3x3, stride 1, padding = dilation = d) + ReLU -----------------
    # In the flat scratch, tap (kh, kw) for output pixel q = r*W + w lives at
    # row q + kh*d*W + (kw-1)*d.  Reads are taken at the aligned kh*d*W offsets
    # only; the +-d column offset of kw != 1 is applied after the matmul as a
    # row-roll of the per-kw partial sum (a row permutation of the LHS commutes
    # with the matmul), so the shift runs on the XLU and every VMEM load stays
    # sublane aligned.  Wrap-around at the image's left/right edge is masked.
    w_idx = lax.broadcasted_iota(jnp.int32, (M, 1), 0) % W
    acc2 = jnp.zeros((M, P), f32)
    for kw in range(3):
        a = jnp.zeros((M, P), f32)
        for kh in range(3):
            start = kh * dW                               # static, % 8 == 0
            a = a + jnp.dot(t1_ref[start:start + M], w2_ref[kh, kw],
                            preferred_element_type=f32)
        if kw == 0:
            a = pltpu.roll(a, d, axis=0)                  # out[q] <- a[q - d]
            a = jnp.where(w_idx >= d, a, 0.0)
        elif kw == 2:
            a = pltpu.roll(a, M - d, axis=0)              # out[q] <- a[q + d]
            a = jnp.where(w_idx < W - d, a, 0.0)
        acc2 = acc2 + a
    t2 = jnp.maximum(acc2, 0.0).astype(dt)

    # ---- conv3 (1x1) + residual + ReLU ----------------------------------------
    y = jnp.dot(t2, w3_ref[...], preferred_element_type=f32)
    y = y + x_ref[0].astype(f32)       # late re-read of the resident x block
    o_ref[0] = jnp.maximum(y, 0.0).astype(o_ref.dtype)


# ---------------------------------------------------------------------------
# VMEM budgeting / tile selection
# ---------------------------------------------------------------------------

def _vmem_budget():
    """(physical per-core VMEM, vmem_limit_bytes to request)."""
    try:
        cap = int(pltpu.get_tpu_info().vmem_capacity_bytes)
    except Exception:
        cap = 0
    if cap <= 0:
        cap = 64 * 1024 * 1024                    # conservative: v7x per-TC
    # v7x (64 MiB) -> 48 MiB; v5e/v6e (128 MiB) -> 96 MiB.
    limit = min((cap * 3) // 4, 96 * 1024 * 1024)
    return cap, limit


def _auto_block_rows(N, H, W, Cin, P, C4, d, act_isz, w_isz, usable_bytes):
    """Largest row tile whose VMEM footprint fits; prefer an even 2-TC grid."""
    cands = [t for t in range(d, H + 1, d) if H % t == 0]
    if not cands:
        return H

    def footprint(th):
        m = th * W
        dw = d * W
        acts = 2 * (m * Cin + m * C4 + 2 * dw * Cin) * act_isz   # double-buffered
        weights = (Cin * P + 9 * P * P + P * C4) * w_isz         # single-buffered
        scratch = (th + 2 * d) * W * P * act_isz
        temps = (3 * m * P + m * C4) * 4                         # f32 accumulators
        return acts + weights + scratch + temps

    fitting = [t for t in cands if footprint(t) <= usable_bytes]
    if not fitting:
        return min(cands)
    best = max(fitting)
    even = [t for t in fitting if (N * (H // t)) % 2 == 0]       # v7x 2-TC balance
    if even and max(even) * 2 >= best:
        return max(even)
    return best


# ---------------------------------------------------------------------------
# Wrappers
# ---------------------------------------------------------------------------

def bottleneck_forward_nhwc(x_nhwc, w1, w2, w3, dilation=1, block_rows=None):
    N, H, W, Cin = x_nhwc.shape
    P = w1.shape[1]
    C4 = w3.shape[1]
    d = int(dilation)
    assert C4 == Cin, "downsample=None requires inplanes == planes * expansion"
    assert w1.shape == (Cin, P) and w2.shape == (3, 3, P, P) and w3.shape == (P, C4)
    # TODO(synk): W % 8 != 0 (e.g. 28/14/7-wide ResNet maps) needs width padding
    # to a multiple of 8 before calling this kernel.
    assert W % 8 == 0, "W must be a multiple of 8 (sublane tiling)"
    assert H % d == 0, "dilation must divide H"

    act_isz = jnp.dtype(x_nhwc.dtype).itemsize
    w_isz = jnp.dtype(w1.dtype).itemsize
    _, vmem_limit = _vmem_budget()
    usable = (vmem_limit * 3) // 4                     # ~25% headroom

    if block_rows is None:
        TH = _auto_block_rows(N, H, W, Cin, P, C4, d, act_isz, w_isz, usable)
    else:
        TH = int(block_rows)
    assert H % TH == 0 and TH % d == 0, \
        "block_rows must divide H and be a multiple of dilation"

    M = TH * W
    dW = d * W
    HW = H * W
    r = TH // d
    n_rt = H // TH

    xf = x_nhwc.reshape(N, HW, Cin)
    kern = functools.partial(_bottleneck_kernel, TH=TH, W=W, d=d)

    top_map = lambda n, i: (n, jnp.maximum(i * r - 1, 0), 0)
    bot_map = lambda n, i: (n, jnp.minimum((i + 1) * r, H // d - 1), 0)

    def build(single_buffer_weights):
        sbw = single_buffer_weights and hasattr(pl, "Buffered")

        def wspec(shape):
            zmap = lambda n, i: (0,) * len(shape)
            if sbw:
                # Constant index_map => never a second block to prefetch; a
                # single buffer saves one full weight copy of VMEM.
                return pl.BlockSpec(shape, zmap, pipeline_mode=pl.Buffered(1))
            return pl.BlockSpec(shape, zmap)

        return pl.pallas_call(
            kern,
            out_shape=jax.ShapeDtypeStruct((N, HW, C4), x_nhwc.dtype),
            grid=(N, n_rt),
            in_specs=[
                pl.BlockSpec((1, M, Cin), lambda n, i: (n, i, 0)),   # core rows
                pl.BlockSpec((1, dW, Cin), top_map),                 # top halo
                pl.BlockSpec((1, dW, Cin), bot_map),                 # bottom halo
                wspec((Cin, P)),                                     # w1
                wspec((3, 3, P, P)),                                 # w2
                wspec((P, C4)),                                      # w3
            ],
            out_specs=pl.BlockSpec((1, M, C4), lambda n, i: (n, i, 0)),
            scratch_shapes=[pltpu.VMEM(((TH + 2 * d) * W, P), x_nhwc.dtype)],
            compiler_params=pltpu.CompilerParams(
                dimension_semantics=("parallel", "parallel"),
                vmem_limit_bytes=int(vmem_limit),
            ),
        )

    args = (xf, xf, xf, w1, w2, w3)
    try:
        out = build(True)(*args)
    except Exception:
        # pipeline_mode=pl.Buffered(1) unsupported on this build: fall back to
        # default (double-buffered) weight specs.
        out = build(False)(*args)
    return out.reshape(N, H, W, C4)


def bottleneck_forward(x_nchw, w1, w2, w3, dilation=1, block_rows=None):
    # TODO(synk): stride > 1 / a downsample branch are not implemented; this
    # covers the module's default stride=1, downsample=None path.
    # (In an NHWC pipeline call bottleneck_forward_nhwc directly and drop these
    #  two full-tensor transposes from the hot path — the early stages are
    #  HBM-bound and the transposes roughly double HBM traffic per call.)
    x = jnp.transpose(x_nchw, (0, 2, 3, 1))          # NCHW -> NHWC
    out = bottleneck_forward_nhwc(x, w1, w2, w3, dilation=dilation,
                                  block_rows=block_rows)
    return jnp.transpose(out, (0, 3, 1, 2))          # NHWC -> NCHW


def init_params(key, inplanes, planes):
    k1, k2, k3 = jax.random.split(key, 3)

    def kaiming(k, shape, fan_in):
        return jax.random.normal(k, shape, jnp.float32) * (2.0 / fan_in) ** 0.5

    w1 = kaiming(k1, (inplanes, planes), inplanes)           # conv1: 1x1 (Cin, P)
    w2 = kaiming(k2, (3, 3, planes, planes), 9 * planes)     # conv2: HWIO
    w3 = kaiming(k3, (planes, planes * 4), planes)           # conv3: 1x1 (P, 4P)
    return w1, w2, w3


# Pure-JAX reference for validation.
def bottleneck_reference(x_nchw, w1, w2, w3, dilation=1):
    x = jnp.transpose(x_nchw, (0, 2, 3, 1))
    dn = ("NHWC", "HWIO", "NHWC")
    o = lax.conv_general_dilated(x, w1.reshape(1, 1, *w1.shape), (1, 1),
                                 "VALID", dimension_numbers=dn)
    o = jnp.maximum(o, 0.0)
    o = lax.conv_general_dilated(o, w2, (1, 1),
                                 [(dilation, dilation), (dilation, dilation)],
                                 rhs_dilation=(dilation, dilation),
                                 dimension_numbers=dn)
    o = jnp.maximum(o, 0.0)
    o = lax.conv_general_dilated(o, w3.reshape(1, 1, *w3.shape), (1, 1),
                                 "VALID", dimension_numbers=dn)
    o = jnp.maximum(o + x, 0.0)
    return jnp.transpose(o, (0, 3, 1, 2))


if __name__ == "__main__":
    key = jax.random.PRNGKey(0)
    kx, kp = jax.random.split(key)

    # Small shapes consistent with the module: inplanes = planes * expansion
    # so that downsample=None (residual = x) is shape-valid.
    N, planes, H, W = 2, 4, 16, 16
    inplanes = planes * 4  # 16

    x = jax.random.normal(kx, (N, inplanes, H, W), jnp.float32)  # NCHW
    w1, w2, w3 = init_params(kp, inplanes, planes)
    ref = bottleneck_reference(x, w1, w2, w3, dilation=1)

    # f32, dilation=1, explicit row tiling (2 batches x 4 row tiles: halos live).
    out = bottleneck_forward(x, w1, w2, w3, dilation=1, block_rows=4)
    out = jax.block_until_ready(out)
    assert out.shape == (N, planes * 4, H, W)
    assert jnp.allclose(out, ref, atol=1e-4, rtol=1e-4), "f32 mismatch vs reference"

    # f32, dilation=1, auto tile selection (VMEM-budget-derived block size).
    out_auto = bottleneck_forward(x, w1, w2, w3, dilation=1, block_rows=None)
    out_auto = jax.block_until_ready(out_auto)
    assert jnp.allclose(out_auto, ref, atol=1e-4, rtol=1e-4), "auto-tile mismatch"

    # f32, dilation=2 (padding = dilation, as in the module).
    out2 = bottleneck_forward(x, w1, w2, w3, dilation=2, block_rows=8)
    out2 = jax.block_until_ready(out2)
    ref2 = bottleneck_reference(x, w1, w2, w3, dilation=2)
    assert jnp.allclose(out2, ref2, atol=1e-4, rtol=1e-4), "dilation=2 mismatch"

    # bf16 activations/weights (f32 accumulation inside the kernel).
    xb = x.astype(jnp.bfloat16)
    w1b, w2b, w3b = (w.astype(jnp.bfloat16) for w in (w1, w2, w3))
    outb = bottleneck_forward(xb, w1b, w2b, w3b, dilation=1, block_rows=4)
    outb = jax.block_until_ready(outb)
    assert outb.dtype == jnp.bfloat16
    assert jnp.allclose(outb.astype(jnp.float32), ref, atol=0.15, rtol=0.15), \
        "bf16 mismatch vs reference"

    print("KERNEL_OK")
</pallas_src>

<mosaic_0001>
module attributes {stable_mosaic.version = 11 : i64} {
  func.func @_bottleneck_kernel(%arg0: i32, %arg1: i32, %arg2: memref<1x64x16xf32, #tpu.memory_space<vmem>>, %arg3: memref<1x16x16xf32, #tpu.memory_space<vmem>>, %arg4: memref<1x16x16xf32, #tpu.memory_space<vmem>>, %arg5: memref<16x4xf32, #tpu.memory_space<vmem>>, %arg6: memref<3x3x4x4xf32, #tpu.memory_space<vmem>>, %arg7: memref<4x16xf32, #tpu.memory_space<vmem>>, %arg8: memref<1x64x16xf32, #tpu.memory_space<vmem>>, %arg9: memref<96x4xf32, #tpu.memory_space<vmem>>) attributes {dimension_semantics = [#tpu.dimension_semantics<parallel>, #tpu.dimension_semantics<parallel>], iteration_bounds = array<i64: 2, 4>, scalar_prefetch = 0 : i64, scratch_operands = 1 : i64, tpu.core_type = #tpu.core_type<tc>, window_params = [{transform_indices = @transform_0, window_bounds = array<i64: 1, 64, 16>}, {transform_indices = @transform_1, window_bounds = array<i64: 1, 16, 16>}, {transform_indices = @transform_2, window_bounds = array<i64: 1, 16, 16>}, {pipeline_mode = #tpu.pipeline_mode<synchronous>, transform_indices = @transform_3, window_bounds = array<i64: 16, 4>}, {pipeline_mode = #tpu.pipeline_mode<synchronous>, transform_indices = @transform_4, window_bounds = array<i64: 3, 3, 4, 4>}, {pipeline_mode = #tpu.pipeline_mode<synchronous>, transform_indices = @transform_5, window_bounds = array<i64: 4, 16>}, {transform_indices = @transform_6, window_bounds = array<i64: 1, 64, 16>}]} {
    %c0 = arith.constant 0 : index
    %c0_0 = arith.constant 0 : index
    %0 = vector.load %arg5[%c0, %c0_0] : memref<16x4xf32, #tpu.memory_space<vmem>>, vector<16x4xf32>
    %c0_1 = arith.constant 0 : index
    %c0_2 = arith.constant 0 : index
    %c0_3 = arith.constant 0 : index
    %1 = vector.load %arg2[%c0_1, %c0_2, %c0_3] : memref<1x64x16xf32, #tpu.memory_space<vmem>>, vector<1x64x16xf32>
    %2 = vector.shape_cast %1 : vector<1x64x16xf32> to vector<64x16xf32>
    %cst = arith.constant dense<0.000000e+00> : vector<64x4xf32>
    %3 = tpu.matmul %2, %0, %cst {dimension_numbers = #tpu.dot_dimension_numbers<[1], [0], [0], [1], [0, 0, 1, 1], [], []>} : vector<64x16xf32>, vector<16x4xf32>, vector<64x4xf32> -> vector<64x4xf32>
    %cst_4 = arith.constant 0.000000e+00 : f32
    %4 = vector.broadcast %cst_4 : f32 to vector<64x4xf32>
    %5 = arith.maximumf %3, %4 : vector<64x4xf32>
    %c16 = arith.constant 16 : index
    %c0_5 = arith.constant 0 : index
    %6 = vector.load %arg9[%c16, %c0_5] : memref<96x4xf32, #tpu.memory_space<vmem>>, vector<64x4xf32>
    tpu.vector_store %arg9[%c16, %c0_5], %5 {strides = array<i32>} : memref<96x4xf32, #tpu.memory_space<vmem>>, vector<64x4xf32>,
    %c0_i32 = arith.constant 0 : i32
    %7 = arith.cmpi sgt, %arg1, %c0_i32 : i32
    %8 = arith.extui %7 : i1 to i32
    %9 = arith.sitofp %8 : i32 to f32
    %c3_i32 = arith.constant 3 : i32
    %10 = arith.cmpi slt, %arg1, %c3_i32 : i32
    %11 = arith.extui %10 : i1 to i32
    %12 = arith.sitofp %11 : i32 to f32
    %c0_6 = arith.constant 0 : index
    %c0_7 = arith.constant 0 : index
    %c0_8 = arith.constant 0 : index
    %13 = vector.load %arg3[%c0_6, %c0_7, %c0_8] : memref<1x16x16xf32, #tpu.memory_space<vmem>>, vector<1x16x16xf32>
    %14 = vector.shape_cast %13 : vector<1x16x16xf32> to vector<16x16xf32>
    %cst_9 = arith.constant dense<0.000000e+00> : vector<16x4xf32>
    %15 = tpu.matmul %14, %0, %cst_9 {dimension_numbers = #tpu.dot_dimension_numbers<[1], [0], [0], [1], [0, 0, 1, 1], [], []>} : vector<16x16xf32>, vector<16x4xf32>, vector<16x4xf32> -> vector<16x4xf32>
    %cst_10 = arith.constant 0.000000e+00 : f32
    %16 = vector.broadcast %cst_10 : f32 to vector<16x4xf32>
    %17 = arith.maximumf %15, %16 : vector<16x4xf32>
    %18 = vector.broadcast %9 : f32 to vector<16x4xf32>
    %19 = arith.mulf %17, %18 : vector<16x4xf32>
    %c0_11 = arith.constant 0 : index
    %c0_12 = arith.constant 0 : index
    %20 = vector.load %arg9[%c0_11, %c0_12] : memref<96x4xf32, #tpu.memory_space<vmem>>, vector<16x4xf32>
    tpu.vector_store %arg9[%c0_11, %c0_12], %19 {strides = array<i32>} : memref<96x4xf32, #tpu.memory_space<vmem>>, vector<16x4xf32>,
    %c0_13 = arith.constant 0 : index
    %c0_14 = arith.constant 0 : index
    %c0_15 = arith.constant 0 : index
    %21 = vector.load %arg4[%c0_13, %c0_14, %c0_15] : memref<1x16x16xf32, #tpu.memory_space<vmem>>, vector<1x16x16xf32>
    %22 = vector.shape_cast %21 : vector<1x16x16xf32> to vector<16x16xf32>
    %cst_16 = arith.constant dense<0.000000e+00> : vector<16x4xf32>
    %23 = tpu.matmul %22, %0, %cst_16 {dimension_numbers = #tpu.dot_dimension_numbers<[1], [0], [0], [1], [0, 0, 1, 1], [], []>} : vector<16x16xf32>, vector<16x4xf32>, vector<16x4xf32> -> vector<16x4xf32>
    %cst_17 = arith.constant 0.000000e+00 : f32
    %24 = vector.broadcast %cst_17 : f32 to vector<16x4xf32>
    %25 = arith.maximumf %23, %24 : vector<16x4xf32>
    %26 = vector.broadcast %12 : f32 to vector<16x4xf32>
    %27 = arith.mulf %25, %26 : vector<16x4xf32>
    %c80 = arith.constant 80 : index
    %c0_18 = arith.constant 0 : index
    %28 = vector.load %arg9[%c80, %c0_18] : memref<96x4xf32, #tpu.memory_space<vmem>>, vector<16x4xf32>
    tpu.vector_store %arg9[%c80, %c0_18], %27 {strides = array<i32>} : memref<96x4xf32, #tpu.memory_space<vmem>>, vector<16x4xf32>,
    %29 = tpu.iota {dimensions = array<i32: 0>} : vector<64x1xi32>
    %c16_i32 = arith.constant 16 : i32
    %c0_i32_19 = arith.constant 0 : i32
    %30 = arith.cmpi eq, %c16_i32, %c0_i32_19 : i32
    %c1_i32 = arith.constant 1 : i32
    %31 = arith.select %30, %c1_i32, %c16_i32 : i32
    %32 = vector.broadcast %31 : i32 to vector<64x1xi32>
    %33 = arith.remsi %29, %32 : vector<64x1xi32>
    %c0_i32_20 = arith.constant 0 : i32
    %34 = vector.broadcast %c0_i32_20 : i32 to vector<64x1xi32>
    %35 = arith.cmpi ne, %33, %34 : vector<64x1xi32>
    %c0_i32_21 = arith.constant 0 : i32
    %36 = vector.broadcast %c0_i32_21 : i32 to vector<64x1xi32>
    %37 = arith.cmpi slt, %33, %36 : vector<64x1xi32>
    %c0_i32_22 = arith.constant 0 : i32
    %38 = arith.cmpi slt, %31, %c0_i32_22 : i32
    %39 = vector.broadcast %38 : i1 to vector<64x1xi1>
    %40 = vector.broadcast %39 : vector<64x1xi1> to vector<64x1xi1>
    %41 = arith.xori %37, %40 : vector<64x1xi1>
    %42 = arith.andi %41, %35 : vector<64x1xi1>
    %43 = vector.broadcast %31 : i32 to vector<64x1xi32>
    %44 = arith.addi %33, %43 : vector<64x1xi32>
    %45 = arith.select %42, %44, %33 : vector<64x1xi1>, vector<64x1xi32>
    %cst_23 = arith.constant 0.000000e+00 : f32
    %46 = vector.broadcast %cst_23 : f32 to vector<64x4xf32>
    %cst_24 = arith.constant 0.000000e+00 : f32
    %47 = vector.broadcast %cst_24 : f32 to vector<64x4xf32>
    %c0_25 = arith.constant 0 : index
    %c0_26 = arith.constant 0 : index
    %48 = vector.load %arg9[%c0_25, %c0_26] : memref<96x4xf32, #tpu.memory_space<vmem>>, vector<64x4xf32>
    %c0_27 = arith.constant 0 : index
    %c0_28 = arith.constant 0 : index
    %c0_29 = arith.constant 0 : index
    %c0_30 = arith.constant 0 : index
    %49 = vector.load %arg6[%c0_27, %c0_28, %c0_29, %c0_30] : memref<3x3x4x4xf32, #tpu.memory_space<vmem>>, vector<1x1x4x4xf32>
    %50 = vector.shape_cast %49 : vector<1x1x4x4xf32> to vector<4x4xf32>
    %cst_31 = arith.constant dense<0.000000e+00> : vector<64x4xf32>
    %51 = tpu.matmul %48, %50, %cst_31 {dimension_numbers = #tpu.dot_dimension_numbers<[1], [0], [0], [1], [0, 0, 1, 1], [], []>} : vector<64x4xf32>, vector<4x4xf32>, vector<64x4xf32> -> vector<64x4xf32>
    %52 = arith.addf %47, %51 : vector<64x4xf32>
    %c16_32 = arith.constant 16 : index
    %c0_33 = arith.constant 0 : index
    %53 = vector.load %arg9[%c16_32, %c0_33] : memref<96x4xf32, #tpu.memory_space<vmem>>, vector<64x4xf32>
    %c1 = arith.constant 1 : index
    %c0_34 = arith.constant 0 : index
    %c0_35 = arith.constant 0 : index
    %c0_36 = arith.constant 0 : index
    %54 = vector.load %arg6[%c1, %c0_34, %c0_35, %c0_36] : memref<3x3x4x4xf32, #tpu.memory_space<vmem>>, vector<1x1x4x4xf32>
    %55 = vector.shape_cast %54 : vector<1x1x4x4xf32> to vector<4x4xf32>
    %cst_37 = arith.constant dense<0.000000e+00> : vector<64x4xf32>
    %56 = tpu.matmul %53, %55, %cst_37 {dimension_numbers = #tpu.dot_dimension_numbers<[1], [0], [0], [1], [0, 0, 1, 1], [], []>} : vector<64x4xf32>, vector<4x4xf32>, vector<64x4xf32> -> vector<64x4xf32>
    %57 = arith.addf %52, %56 : vector<64x4xf32>
    %c32 = arith.constant 32 : index
    %c0_38 = arith.constant 0 : index
    %58 = vector.load %arg9[%c32, %c0_38] : memref<96x4xf32, #tpu.memory_space<vmem>>, vector<64x4xf32>
    %c2 = arith.constant 2 : index
    %c0_39 = arith.constant 0 : index
    %c0_40 = arith.constant 0 : index
    %c0_41 = arith.constant 0 : index
    %59 = vector.load %arg6[%c2, %c0_39, %c0_40, %c0_41] : memref<3x3x4x4xf32, #tpu.memory_space<vmem>>, vector<1x1x4x4xf32>
    %60 = vector.shape_cast %59 : vector<1x1x4x4xf32> to vector<4x4xf32>
    %cst_42 = arith.constant dense<0.000000e+00> : vector<64x4xf32>
    %61 = tpu.matmul %58, %60, %cst_42 {dimension_numbers = #tpu.dot_dimension_numbers<[1], [0], [0], [1], [0, 0, 1, 1], [], []>} : vector<64x4xf32>, vector<4x4xf32>, vector<64x4xf32> -> vector<64x4xf32>
    %62 = arith.addf %57, %61 : vector<64x4xf32>
    %c1_i32_43 = arith.constant 1 : i32
    %63 = tpu.dynamic_rotate %62 by %c1_i32_43 dim 0 : vector<64x4xf32>, i32 -> vector<64x4xf32>
    %c1_i32_44 = arith.constant 1 : i32
    %64 = vector.broadcast %c1_i32_44 : i32 to vector<64x1xi32>
    %65 = arith.cmpi sge, %45, %64 : vector<64x1xi32>
    %cst_45 = arith.constant 0.000000e+00 : f32
    %66 = vector.shape_cast %65 : vector<64x1xi1> to vector<64x1xi1>
    %67 = vector.broadcast %66 : vector<64x1xi1> to vector<64x4xi1>
    %68 = vector.broadcast %cst_45 : f32 to vector<64x4xf32>
    %69 = arith.select %67, %63, %68 : vector<64x4xi1>, vector<64x4xf32>
    %70 = arith.addf %46, %69 : vector<64x4xf32>
    %cst_46 = arith.constant 0.000000e+00 : f32
    %71 = vector.broadcast %cst_46 : f32 to vector<64x4xf32>
    %c0_47 = arith.constant 0 : index
    %c0_48 = arith.constant 0 : index
    %72 = vector.load %arg9[%c0_47, %c0_48] : memref<96x4xf32, #tpu.memory_space<vmem>>, vector<64x4xf32>
    %c0_49 = arith.constant 0 : index
    %c1_50 = arith.constant 1 : index
    %c0_51 = arith.constant 0 : index
    %c0_52 = arith.constant 0 : index
    %73 = vector.load %arg6[%c0_49, %c1_50, %c0_51, %c0_52] : memref<3x3x4x4xf32, #tpu.memory_space<vmem>>, vector<1x1x4x4xf32>
    %74 = vector.shape_cast %73 : vector<1x1x4x4xf32> to vector<4x4xf32>
    %cst_53 = arith.constant dense<0.000000e+00> : vector<64x4xf32>
    %75 = tpu.matmul %72, %74, %cst_53 {dimension_numbers = #tpu.dot_dimension_numbers<[1], [0], [0], [1], [0, 0, 1, 1], [], []>} : vector<64x4xf32>, vector<4x4xf32>, vector<64x4xf32> -> vector<64x4xf32>
    %76 = arith.addf %71, %75 : vector<64x4xf32>
    %c16_54 = arith.constant 16 : index
    %c0_55 = arith.constant 0 : index
    %77 = vector.load %arg9[%c16_54, %c0_55] : memref<96x4xf32, #tpu.memory_space<vmem>>, vector<64x4xf32>
    %c1_56 = arith.constant 1 : index
    %c1_57 = arith.constant 1 : index
    %c0_58 = arith.constant 0 : index
    %c0_59 = arith.constant 0 : index
    %78 = vector.load %arg6[%c1_56, %c1_57, %c0_58, %c0_59] : memref<3x3x4x4xf32, #tpu.memory_space<vmem>>, vector<1x1x4x4xf32>
    %79 = vector.shape_cast %78 : vector<1x1x4x4xf32> to vector<4x4xf32>
    %cst_60 = arith.constant dense<0.000000e+00> : vector<64x4xf32>
    %80 = tpu.matmul %77, %79, %cst_60 {dimension_numbers = #tpu.dot_dimension_numbers<[1], [0], [0], [1], [0, 0, 1, 1], [], []>} : vector<64x4xf32>, vector<4x4xf32>, vector<64x4xf32> -> vector<64x4xf32>
    %81 = arith.addf %76, %80 : vector<64x4xf32>
    %c32_61 = arith.constant 32 : index
    %c0_62 = arith.constant 0 : index
    %82 = vector.load %arg9[%c32_61, %c0_62] : memref<96x4xf32, #tpu.memory_space<vmem>>, vector<64x4xf32>
    %c2_63 = arith.constant 2 : index
    %c1_64 = arith.constant 1 : index
    %c0_65 = arith.constant 0 : index
    %c0_66 = arith.constant 0 : index
    %83 = vector.load %arg6[%c2_63, %c1_64, %c0_65, %c0_66] : memref<3x3x4x4xf32, #tpu.memory_space<vmem>>, vector<1x1x4x4xf32>
    %84 = vector.shape_cast %83 : vector<1x1x4x4xf32> to vector<4x4xf32>
    %cst_67 = arith.constant dense<0.000000e+00> : vector<64x4xf32>
    %85 = tpu.matmul %82, %84, %cst_67 {dimension_numbers = #tpu.dot_dimension_numbers<[1], [0], [0], [1], [0, 0, 1, 1], [], []>} : vector<64x4xf32>, vector<4x4xf32>, vector<64x4xf32> -> vector<64x4xf32>
    %86 = arith.addf %81, %85 : vector<64x4xf32>
    %87 = arith.addf %70, %86 : vector<64x4xf32>
    %cst_68 = arith.constant 0.000000e+00 : f32
    %88 = vector.broadcast %cst_68 : f32 to vector<64x4xf32>
    %c0_69 = arith.constant 0 : index
    %c0_70 = arith.constant 0 : index
    %89 = vector.load %arg9[%c0_69, %c0_70] : memref<96x4xf32, #tpu.memory_space<vmem>>, vector<64x4xf32>
    %c0_71 = arith.constant 0 : index
    %c2_72 = arith.constant 2 : index
    %c0_73 = arith.constant 0 : index
    %c0_74 = arith.constant 0 : index
    %90 = vector.load %arg6[%c0_71, %c2_72, %c0_73, %c0_74] : memref<3x3x4x4xf32, #tpu.memory_space<vmem>>, vector<1x1x4x4xf32>
    %91 = vector.shape_cast %90 : vector<1x1x4x4xf32> to vector<4x4xf32>
    %cst_75 = arith.constant dense<0.000000e+00> : vector<64x4xf32>
    %92 = tpu.matmul %89, %91, %cst_75 {dimension_numbers = #tpu.dot_dimension_numbers<[1], [0], [0], [1], [0, 0, 1, 1], [], []>} : vector<64x4xf32>, vector<4x4xf32>, vector<64x4xf32> -> vector<64x4xf32>
    %93 = arith.addf %88, %92 : vector<64x4xf32>
    %c16_76 = arith.constant 16 : index
    %c0_77 = arith.constant 0 : index
    %94 = vector.load %arg9[%c16_76, %c0_77] : memref<96x4xf32, #tpu.memory_space<vmem>>, vector<64x4xf32>
    %c1_78 = arith.constant 1 : index
    %c2_79 = arith.constant 2 : index
    %c0_80 = arith.constant 0 : index
    %c0_81 = arith.constant 0 : index
    %95 = vector.load %arg6[%c1_78, %c2_79, %c0_80, %c0_81] : memref<3x3x4x4xf32, #tpu.memory_space<vmem>>, vector<1x1x4x4xf32>
    %96 = vector.shape_cast %95 : vector<1x1x4x4xf32> to vector<4x4xf32>
    %cst_82 = arith.constant dense<0.000000e+00> : vector<64x4xf32>
    %97 = tpu.matmul %94, %96, %cst_82 {dimension_numbers = #tpu.dot_dimension_numbers<[1], [0], [0], [1], [0, 0, 1, 1], [], []>} : vector<64x4xf32>, vector<4x4xf32>, vector<64x4xf32> -> vector<64x4xf32>
    %98 = arith.addf %93, %97 : vector<64x4xf32>
    %c32_83 = arith.constant 32 : index
    %c0_84 = arith.constant 0 : index
    %99 = vector.load %arg9[%c32_83, %c0_84] : memref<96x4xf32, #tpu.memory_space<vmem>>, vector<64x4xf32>
    %c2_85 = arith.constant 2 : index
    %c2_86 = arith.constant 2 : index
    %c0_87 = arith.constant 0 : index
    %c0_88 = arith.constant 0 : index
    %100 = vector.load %arg6[%c2_85, %c2_86, %c0_87, %c0_88] : memref<3x3x4x4xf32, #tpu.memory_space<vmem>>, vector<1x1x4x4xf32>
    %101 = vector.shape_cast %100 : vector<1x1x4x4xf32> to vector<4x4xf32>
    %cst_89 = arith.constant dense<0.000000e+00> : vector<64x4xf32>
    %102 = tpu.matmul %99, %101, %cst_89 {dimension_numbers = #tpu.dot_dimension_numbers<[1], [0], [0], [1], [0, 0, 1, 1], [], []>} : vector<64x4xf32>, vector<4x4xf32>, vector<64x4xf32> -> vector<64x4xf32>
    %103 = arith.addf %98, %102 : vector<64x4xf32>
    %c63_i32 = arith.constant 63 : i32
    %104 = tpu.dynamic_rotate %103 by %c63_i32 dim 0 : vector<64x4xf32>, i32 -> vector<64x4xf32>
    %c15_i32 = arith.constant 15 : i32
    %105 = vector.broadcast %c15_i32 : i32 to vector<64x1xi32>
    %106 = arith.cmpi slt, %45, %105 : vector<64x1xi32>
    %cst_90 = arith.constant 0.000000e+00 : f32
    %107 = vector.shape_cast %106 : vector<64x1xi1> to vector<64x1xi1>
    %108 = vector.broadcast %107 : vector<64x1xi1> to vector<64x4xi1>
    %109 = vector.broadcast %cst_90 : f32 to vector<64x4xf32>
    %110 = arith.select %108, %104, %109 : vector<64x4xi1>, vector<64x4xf32>
    %111 = arith.addf %87, %110 : vector<64x4xf32>
    %cst_91 = arith.constant 0.000000e+00 : f32
    %112 = vector.broadcast %cst_91 : f32 to vector<64x4xf32>
    %113 = arith.maximumf %111, %112 : vector<64x4xf32>
    %c0_92 = arith.constant 0 : index
    %c0_93 = arith.constant 0 : index
    %114 = vector.load %arg7[%c0_92, %c0_93] : memref<4x16xf32, #tpu.memory_space<vmem>>, vector<4x16xf32>
    %cst_94 = arith.constant dense<0.000000e+00> : vector<64x16xf32>
    %115 = tpu.matmul %113, %114, %cst_94 {dimension_numbers = #tpu.dot_dimension_numbers<[1], [0], [0], [1], [0, 0, 1, 1], [], []>} : vector<64x4xf32>, vector<4x16xf32>, vector<64x16xf32> -> vector<64x16xf32>
    %c0_95 = arith.constant 0 : index
    %c0_96 = arith.constant 0 : index
    %c0_97 = arith.constant 0 : index
    %116 = vector.load %arg2[%c0_95, %c0_96, %c0_97] : memref<1x64x16xf32, #tpu.memory_space<vmem>>, vector<1x64x16xf32>
    %117 = vector.shape_cast %116 : vector<1x64x16xf32> to vector<64x16xf32>
    %118 = arith.addf %115, %117 : vector<64x16xf32>
    %cst_98 = arith.constant 0.000000e+00 : f32
    %119 = vector.broadcast %cst_98 : f32 to vector<64x16xf32>
    %120 = arith.maximumf %118, %119 : vector<64x16xf32>
    %c0_99 = arith.constant 0 : index
    %c0_100 = arith.constant 0 : index
    %c0_101 = arith.constant 0 : index
    %121 = vector.load %arg8[%c0_99, %c0_100, %c0_101] : memref<1x64x16xf32, #tpu.memory_space<vmem>>, vector<1x64x16xf32>
    %122 = vector.shape_cast %121 : vector<1x64x16xf32> to vector<64x16xf32>
    %123 = vector.shape_cast %120 : vector<64x16xf32> to vector<1x64x16xf32>
    tpu.vector_store %arg8[%c0_99, %c0_100, %c0_101], %123 {strides = array<i32>} : memref<1x64x16xf32, #tpu.memory_space<vmem>>, vector<1x64x16xf32>,
    return
  }
  func.func @transform_0(%arg0: i32, %arg1: i32) -> (i32, i32, i32) {
    %c0_i32 = arith.constant 0 : i32
    %c0_i32_0 = arith.constant 0 : i32
    return %arg0, %arg1, %c0_i32 : i32, i32, i32
  }
  func.func @transform_1(%arg0: i32, %arg1: i32) -> (i32, i32, i32) {
    %c4_i32 = arith.constant 4 : i32
    %0 = arith.muli %arg1, %c4_i32 : i32
    %c1_i32 = arith.constant 1 : i32
    %1 = arith.subi %0, %c1_i32 : i32
    %c0_i32 = arith.constant 0 : i32
    %2 = arith.maxsi %1, %c0_i32 : i32
    %c0_i32_0 = arith.constant 0 : i32
    %c0_i32_1 = arith.constant 0 : i32
    return %arg0, %2, %c0_i32_0 : i32, i32, i32
  }
  func.func @transform_2(%arg0: i32, %arg1: i32) -> (i32, i32, i32) {
    %c1_i32 = arith.constant 1 : i32
    %0 = arith.addi %arg1, %c1_i32 : i32
    %c4_i32 = arith.constant 4 : i32
    %1 = arith.muli %0, %c4_i32 : i32
    %c15_i32 = arith.constant 15 : i32
    %2 = arith.minsi %1, %c15_i32 : i32
    %c0_i32 = arith.constant 0 : i32
    %c0_i32_0 = arith.constant 0 : i32
    return %arg0, %2, %c0_i32 : i32, i32, i32
  }
  func.func @transform_3(%arg0: i32, %arg1: i32) -> (i32, i32) {
    %c0_i32 = arith.constant 0 : i32
    %c0_i32_0 = arith.constant 0 : i32
    %c0_i32_1 = arith.constant 0 : i32
    return %c0_i32, %c0_i32_0 : i32, i32
  }
  func.func @transform_4(%arg0: i32, %arg1: i32) -> (i32, i32, i32, i32) {
    %c0_i32 = arith.constant 0 : i32
    %c0_i32_0 = arith.constant 0 : i32
    %c0_i32_1 = arith.constant 0 : i32
    %c0_i32_2 = arith.constant 0 : i32
    %c0_i32_3 = arith.constant 0 : i32
    return %c0_i32, %c0_i32_0, %c0_i32_1, %c0_i32_2 : i32, i32, i32, i32
  }
  func.func @transform_5(%arg0: i32, %arg1: i32) -> (i32, i32) {
    %c0_i32 = arith.constant 0 : i32
    %c0_i32_0 = arith.constant 0 : i32
    %c0_i32_1 = arith.constant 0 : i32
    return %c0_i32, %c0_i32_0 : i32, i32
  }
  func.func @transform_6(%arg0: i32, %arg1: i32) -> (i32, i32, i32) {
    %c0_i32 = arith.constant 0 : i32
    %c0_i32_0 = arith.constant 0 : i32
    return %arg0, %arg1, %c0_i32 : i32, i32, i32
  }
}

module attributes {stable_mosaic.version = 11 : i64} {
  func.func @_bottleneck_kernel(%arg0: i32, %arg1: i32, %arg2: memref<1x64x16xf32, #tpu.memory_space<vmem>>, %arg3: memref<1x16x16xf32, #tpu.memory_space<vmem>>, %arg4: memref<1x16x16xf32, #tpu.memory_space<vmem>>, %arg5: memref<16x4xf32, #tpu.memory_space<vmem>>, %arg6: memref<3x3x4x4xf32, #tpu.memory_space<vmem>>, %arg7: memref<4x16xf32, #tpu.memory_space<vmem>>, %arg8: memref<1x64x16xf32, #tpu.memory_space<vmem>>, %arg9: memref<96x4xf32, #tpu.memory_space<vmem>>) attributes {dimension_semantics = [#tpu.dimension_semantics<parallel>, #tpu.dimension_semantics<parallel>], iteration_bounds = array<i64: 2, 4>, scalar_prefetch = 0 : i64, scratch_operands = 1 : i64, tpu.core_type = #tpu.core_type<tc>, window_params = [{transform_indices = @transform_0, window_bounds = array<i64: 1, 64, 16>}, {transform_indices = @transform_1, window_bounds = array<i64: 1, 16, 16>}, {transform_indices = @transform_2, window_bounds = array<i64: 1, 16, 16>}, {pipeline_mode = #tpu.pipeline_mode<synchronous>, transform_indices = @transform_3, window_bounds = array<i64: 16, 4>}, {pipeline_mode = #tpu.pipeline_mode<synchronous>, transform_indices = @transform_4, window_bounds = array<i64: 3, 3, 4, 4>}, {pipeline_mode = #tpu.pipeline_mode<synchronous>, transform_indices = @transform_5, window_bounds = array<i64: 4, 16>}, {transform_indices = @transform_6, window_bounds = array<i64: 1, 64, 16>}]} {
    %c0 = arith.constant 0 : index
    %c0_0 = arith.constant 0 : index
    %0 = vector.load %arg5[%c0, %c0_0] : memref<16x4xf32, #tpu.memory_space<vmem>>, vector<16x4xf32>
    %c0_1 = arith.constant 0 : index
    %c0_2 = arith.constant 0 : index
    %c0_3 = arith.constant 0 : index
    %1 = vector.load %arg2[%c0_1, %c0_2, %c0_3] : memref<1x64x16xf32, #tpu.memory_space<vmem>>, vector<1x64x16xf32>
    %2 = vector.shape_cast %1 : vector<1x64x16xf32> to vector<64x16xf32>
    %cst = arith.constant dense<0.000000e+00> : vector<64x4xf32>
    %3 = tpu.matmul %2, %0, %cst {dimension_numbers = #tpu.dot_dimension_numbers<[1], [0], [0], [1], [0, 0, 1, 1], [], []>} : vector<64x16xf32>, vector<16x4xf32>, vector<64x4xf32> -> vector<64x4xf32>
    %cst_4 = arith.constant 0.000000e+00 : f32
    %4 = vector.broadcast %cst_4 : f32 to vector<64x4xf32>
    %5 = arith.maximumf %3, %4 : vector<64x4xf32>
    %c16 = arith.constant 16 : index
    %c0_5 = arith.constant 0 : index
    %6 = vector.load %arg9[%c16, %c0_5] : memref<96x4xf32, #tpu.memory_space<vmem>>, vector<64x4xf32>
    tpu.vector_store %arg9[%c16, %c0_5], %5 {strides = array<i32>} : memref<96x4xf32, #tpu.memory_space<vmem>>, vector<64x4xf32>,
    %c0_i32 = arith.constant 0 : i32
    %7 = arith.cmpi sgt, %arg1, %c0_i32 : i32
    %8 = arith.extui %7 : i1 to i32
    %9 = arith.sitofp %8 : i32 to f32
    %c3_i32 = arith.constant 3 : i32
    %10 = arith.cmpi slt, %arg1, %c3_i32 : i32
    %11 = arith.extui %10 : i1 to i32
    %12 = arith.sitofp %11 : i32 to f32
    %c0_6 = arith.constant 0 : index
    %c0_7 = arith.constant 0 : index
    %c0_8 = arith.constant 0 : index
    %13 = vector.load %arg3[%c0_6, %c0_7, %c0_8] : memref<1x16x16xf32, #tpu.memory_space<vmem>>, vector<1x16x16xf32>
    %14 = vector.shape_cast %13 : vector<1x16x16xf32> to vector<16x16xf32>
    %cst_9 = arith.constant dense<0.000000e+00> : vector<16x4xf32>
    %15 = tpu.matmul %14, %0, %cst_9 {dimension_numbers = #tpu.dot_dimension_numbers<[1], [0], [0], [1], [0, 0, 1, 1], [], []>} : vector<16x16xf32>, vector<16x4xf32>, vector<16x4xf32> -> vector<16x4xf32>
    %cst_10 = arith.constant 0.000000e+00 : f32
    %16 = vector.broadcast %cst_10 : f32 to vector<16x4xf32>
    %17 = arith.maximumf %15, %16 : vector<16x4xf32>
    %18 = vector.broadcast %9 : f32 to vector<16x4xf32>
    %19 = arith.mulf %17, %18 : vector<16x4xf32>
    %c0_11 = arith.constant 0 : index
    %c0_12 = arith.constant 0 : index
    %20 = vector.load %arg9[%c0_11, %c0_12] : memref<96x4xf32, #tpu.memory_space<vmem>>, vector<16x4xf32>
    tpu.vector_store %arg9[%c0_11, %c0_12], %19 {strides = array<i32>} : memref<96x4xf32, #tpu.memory_space<vmem>>, vector<16x4xf32>,
    %c0_13 = arith.constant 0 : index
    %c0_14 = arith.constant 0 : index
    %c0_15 = arith.constant 0 : index
    %21 = vector.load %arg4[%c0_13, %c0_14, %c0_15] : memref<1x16x16xf32, #tpu.memory_space<vmem>>, vector<1x16x16xf32>
    %22 = vector.shape_cast %21 : vector<1x16x16xf32> to vector<16x16xf32>
    %cst_16 = arith.constant dense<0.000000e+00> : vector<16x4xf32>
    %23 = tpu.matmul %22, %0, %cst_16 {dimension_numbers = #tpu.dot_dimension_numbers<[1], [0], [0], [1], [0, 0, 1, 1], [], []>} : vector<16x16xf32>, vector<16x4xf32>, vector<16x4xf32> -> vector<16x4xf32>
    %cst_17 = arith.constant 0.000000e+00 : f32
    %24 = vector.broadcast %cst_17 : f32 to vector<16x4xf32>
    %25 = arith.maximumf %23, %24 : vector<16x4xf32>
    %26 = vector.broadcast %12 : f32 to vector<16x4xf32>
    %27 = arith.mulf %25, %26 : vector<16x4xf32>
    %c80 = arith.constant 80 : index
    %c0_18 = arith.constant 0 : index
    %28 = vector.load %arg9[%c80, %c0_18] : memref<96x4xf32, #tpu.memory_space<vmem>>, vector<16x4xf32>
    tpu.vector_store %arg9[%c80, %c0_18], %27 {strides = array<i32>} : memref<96x4xf32, #tpu.memory_space<vmem>>, vector<16x4xf32>,
    %29 = tpu.iota {dimensions = array<i32: 0>} : vector<64x1xi32>
    %c16_i32 = arith.constant 16 : i32
    %c0_i32_19 = arith.constant 0 : i32
    %30 = arith.cmpi eq, %c16_i32, %c0_i32_19 : i32
    %c1_i32 = arith.constant 1 : i32
    %31 = arith.select %30, %c1_i32, %c16_i32 : i32
    %32 = vector.broadcast %31 : i32 to vector<64x1xi32>
    %33 = arith.remsi %29, %32 : vector<64x1xi32>
    %c0_i32_20 = arith.constant 0 : i32
    %34 = vector.broadcast %c0_i32_20 : i32 to vector<64x1xi32>
    %35 = arith.cmpi ne, %33, %34 : vector<64x1xi32>
    %c0_i32_21 = arith.constant 0 : i32
    %36 = vector.broadcast %c0_i32_21 : i32 to vector<64x1xi32>
    %37 = arith.cmpi slt, %33, %36 : vector<64x1xi32>
    %c0_i32_22 = arith.constant 0 : i32
    %38 = arith.cmpi slt, %31, %c0_i32_22 : i32
    %39 = vector.broadcast %38 : i1 to vector<64x1xi1>
    %40 = vector.broadcast %39 : vector<64x1xi1> to vector<64x1xi1>
    %41 = arith.xori %37, %40 : vector<64x1xi1>
    %42 = arith.andi %41, %35 : vector<64x1xi1>
    %43 = vector.broadcast %31 : i32 to vector<64x1xi32>
    %44 = arith.addi %33, %43 : vector<64x1xi32>
    %45 = arith.select %42, %44, %33 : vector<64x1xi1>, vector<64x1xi32>
    %cst_23 = arith.constant 0.000000e+00 : f32
    %46 = vector.broadcast %cst_23 : f32 to vector<64x4xf32>
    %cst_24 = arith.constant 0.000000e+00 : f32
    %47 = vector.broadcast %cst_24 : f32 to vector<64x4xf32>
    %c0_25 = arith.constant 0 : index
    %c0_26 = arith.constant 0 : index
    %48 = vector.load %arg9[%c0_25, %c0_26] : memref<96x4xf32, #tpu.memory_space<vmem>>, vector<64x4xf32>
    %c0_27 = arith.constant 0 : index
    %c0_28 = arith.constant 0 : index
    %c0_29 = arith.constant 0 : index
    %c0_30 = arith.constant 0 : index
    %49 = vector.load %arg6[%c0_27, %c0_28, %c0_29, %c0_30] : memref<3x3x4x4xf32, #tpu.memory_space<vmem>>, vector<1x1x4x4xf32>
    %50 = vector.shape_cast %49 : vector<1x1x4x4xf32> to vector<4x4xf32>
    %cst_31 = arith.constant dense<0.000000e+00> : vector<64x4xf32>
    %51 = tpu.matmul %48, %50, %cst_31 {dimension_numbers = #tpu.dot_dimension_numbers<[1], [0], [0], [1], [0, 0, 1, 1], [], []>} : vector<64x4xf32>, vector<4x4xf32>, vector<64x4xf32> -> vector<64x4xf32>
    %52 = arith.addf %47, %51 : vector<64x4xf32>
    %c16_32 = arith.constant 16 : index
    %c0_33 = arith.constant 0 : index
    %53 = vector.load %arg9[%c16_32, %c0_33] : memref<96x4xf32, #tpu.memory_space<vmem>>, vector<64x4xf32>
    %c1 = arith.constant 1 : index
    %c0_34 = arith.constant 0 : index
    %c0_35 = arith.constant 0 : index
    %c0_36 = arith.constant 0 : index
    %54 = vector.load %arg6[%c1, %c0_34, %c0_35, %c0_36] : memref<3x3x4x4xf32, #tpu.memory_space<vmem>>, vector<1x1x4x4xf32>
    %55 = vector.shape_cast %54 : vector<1x1x4x4xf32> to vector<4x4xf32>
    %cst_37 = arith.constant dense<0.000000e+00> : vector<64x4xf32>
    %56 = tpu.matmul %53, %55, %cst_37 {dimension_numbers = #tpu.dot_dimension_numbers<[1], [0], [0], [1], [0, 0, 1, 1], [], []>} : vector<64x4xf32>, vector<4x4xf32>, vector<64x4xf32> -> vector<64x4xf32>
    %57 = arith.addf %52, %56 : vector<64x4xf32>
    %c32 = arith.constant 32 : index
    %c0_38 = arith.constant 0 : index
    %58 = vector.load %arg9[%c32, %c0_38] : memref<96x4xf32, #tpu.memory_space<vmem>>, vector<64x4xf32>
    %c2 = arith.constant 2 : index
    %c0_39 = arith.constant 0 : index
    %c0_40 = arith.constant 0 : index
    %c0_41 = arith.constant 0 : index
    %59 = vector.load %arg6[%c2, %c0_39, %c0_40, %c0_41] : memref<3x3x4x4xf32, #tpu.memory_space<vmem>>, vector<1x1x4x4xf32>
    %60 = vector.shape_cast %59 : vector<1x1x4x4xf32> to vector<4x4xf32>
    %cst_42 = arith.constant dense<0.000000e+00> : vector<64x4xf32>
    %61 = tpu.matmul %58, %60, %cst_42 {dimension_numbers = #tpu.dot_dimension_numbers<[1], [0], [0], [1], [0, 0, 1, 1], [], []>} : vector<64x4xf32>, vector<4x4xf32>, vector<64x4xf32> -> vector<64x4xf32>
    %62 = arith.addf %57, %61 : vector<64x4xf32>
    %c1_i32_43 = arith.constant 1 : i32
    %63 = tpu.dynamic_rotate %62 by %c1_i32_43 dim 0 : vector<64x4xf32>, i32 -> vector<64x4xf32>
    %c1_i32_44 = arith.constant 1 : i32
    %64 = vector.broadcast %c1_i32_44 : i32 to vector<64x1xi32>
    %65 = arith.cmpi sge, %45, %64 : vector<64x1xi32>
    %cst_45 = arith.constant 0.000000e+00 : f32
    %66 = vector.shape_cast %65 : vector<64x1xi1> to vector<64x1xi1>
    %67 = vector.broadcast %66 : vector<64x1xi1> to vector<64x4xi1>
    %68 = vector.broadcast %cst_45 : f32 to vector<64x4xf32>
    %69 = arith.select %67, %63, %68 : vector<64x4xi1>, vector<64x4xf32>
    %70 = arith.addf %46, %69 : vector<64x4xf32>
    %cst_46 = arith.constant 0.000000e+00 : f32
    %71 = vector.broadcast %cst_46 : f32 to vector<64x4xf32>
    %c0_47 = arith.constant 0 : index
    %c0_48 = arith.constant 0 : index
    %72 = vector.load %arg9[%c0_47, %c0_48] : memref<96x4xf32, #tpu.memory_space<vmem>>, vector<64x4xf32>
    %c0_49 = arith.constant 0 : index
    %c1_50 = arith.constant 1 : index
    %c0_51 = arith.constant 0 : index
    %c0_52 = arith.constant 0 : index
    %73 = vector.load %arg6[%c0_49, %c1_50, %c0_51, %c0_52] : memref<3x3x4x4xf32, #tpu.memory_space<vmem>>, vector<1x1x4x4xf32>
    %74 = vector.shape_cast %73 : vector<1x1x4x4xf32> to vector<4x4xf32>
    %cst_53 = arith.constant dense<0.000000e+00> : vector<64x4xf32>
    %75 = tpu.matmul %72, %74, %cst_53 {dimension_numbers = #tpu.dot_dimension_numbers<[1], [0], [0], [1], [0, 0, 1, 1], [], []>} : vector<64x4xf32>, vector<4x4xf32>, vector<64x4xf32> -> vector<64x4xf32>
    %76 = arith.addf %71, %75 : vector<64x4xf32>
    %c16_54 = arith.constant 16 : index
    %c0_55 = arith.constant 0 : index
    %77 = vector.load %arg9[%c16_54, %c0_55] : memref<96x4xf32, #tpu.memory_space<vmem>>, vector<64x4xf32>
    %c1_56 = arith.constant 1 : index
    %c1_57 = arith.constant 1 : index
    %c0_58 = arith.constant 0 : index
    %c0_59 = arith.constant 0 : index
    %78 = vector.load %arg6[%c1_56, %c1_57, %c0_58, %c0_59] : memref<3x3x4x4xf32, #tpu.memory_space<vmem>>, vector<1x1x4x4xf32>
    %79 = vector.shape_cast %78 : vector<1x1x4x4xf32> to vector<4x4xf32>
    %cst_60 = arith.constant dense<0.000000e+00> : vector<64x4xf32>
    %80 = tpu.matmul %77, %79, %cst_60 {dimension_numbers = #tpu.dot_dimension_numbers<[1], [0], [0], [1], [0, 0, 1, 1], [], []>} : vector<64x4xf32>, vector<4x4xf32>, vector<64x4xf32> -> vector<64x4xf32>
    %81 = arith.addf %76, %80 : vector<64x4xf32>
    %c32_61 = arith.constant 32 : index
    %c0_62 = arith.constant 0 : index
    %82 = vector.load %arg9[%c32_61, %c0_62] : memref<96x4xf32, #tpu.memory_space<vmem>>, vector<64x4xf32>
    %c2_63 = arith.constant 2 : index
    %c1_64 = arith.constant 1 : index
    %c0_65 = arith.constant 0 : index
    %c0_66 = arith.constant 0 : index
    %83 = vector.load %arg6[%c2_63, %c1_64, %c0_65, %c0_66] : memref<3x3x4x4xf32, #tpu.memory_space<vmem>>, vector<1x1x4x4xf32>
    %84 = vector.shape_cast %83 : vector<1x1x4x4xf32> to vector<4x4xf32>
    %cst_67 = arith.constant dense<0.000000e+00> : vector<64x4xf32>
    %85 = tpu.matmul %82, %84, %cst_67 {dimension_numbers = #tpu.dot_dimension_numbers<[1], [0], [0], [1], [0, 0, 1, 1], [], []>} : vector<64x4xf32>, vector<4x4xf32>, vector<64x4xf32> -> vector<64x4xf32>
    %86 = arith.addf %81, %85 : vector<64x4xf32>
    %87 = arith.addf %70, %86 : vector<64x4xf32>
    %cst_68 = arith.constant 0.000000e+00 : f32
    %88 = vector.broadcast %cst_68 : f32 to vector<64x4xf32>
    %c0_69 = arith.constant 0 : index
    %c0_70 = arith.constant 0 : index
    %89 = vector.load %arg9[%c0_69, %c0_70] : memref<96x4xf32, #tpu.memory_space<vmem>>, vector<64x4xf32>
    %c0_71 = arith.constant 0 : index
    %c2_72 = arith.constant 2 : index
    %c0_73 = arith.constant 0 : index
    %c0_74 = arith.constant 0 : index
    %90 = vector.load %arg6[%c0_71, %c2_72, %c0_73, %c0_74] : memref<3x3x4x4xf32, #tpu.memory_space<vmem>>, vector<1x1x4x4xf32>
    %91 = vector.shape_cast %90 : vector<1x1x4x4xf32> to vector<4x4xf32>
    %cst_75 = arith.constant dense<0.000000e+00> : vector<64x4xf32>
    %92 = tpu.matmul %89, %91, %cst_75 {dimension_numbers = #tpu.dot_dimension_numbers<[1], [0], [0], [1], [0, 0, 1, 1], [], []>} : vector<64x4xf32>, vector<4x4xf32>, vector<64x4xf32> -> vector<64x4xf32>
    %93 = arith.addf %88, %92 : vector<64x4xf32>
    %c16_76 = arith.constant 16 : index
    %c0_77 = arith.constant 0 : index
    %94 = vector.load %arg9[%c16_76, %c0_77] : memref<96x4xf32, #tpu.memory_space<vmem>>, vector<64x4xf32>
    %c1_78 = arith.constant 1 : index
    %c2_79 = arith.constant 2 : index
    %c0_80 = arith.constant 0 : index
    %c0_81 = arith.constant 0 : index
    %95 = vector.load %arg6[%c1_78, %c2_79, %c0_80, %c0_81] : memref<3x3x4x4xf32, #tpu.memory_space<vmem>>, vector<1x1x4x4xf32>
    %96 = vector.shape_cast %95 : vector<1x1x4x4xf32> to vector<4x4xf32>
    %cst_82 = arith.constant dense<0.000000e+00> : vector<64x4xf32>
    %97 = tpu.matmul %94, %96, %cst_82 {dimension_numbers = #tpu.dot_dimension_numbers<[1], [0], [0], [1], [0, 0, 1, 1], [], []>} : vector<64x4xf32>, vector<4x4xf32>, vector<64x4xf32> -> vector<64x4xf32>
    %98 = arith.addf %93, %97 : vector<64x4xf32>
    %c32_83 = arith.constant 32 : index
    %c0_84 = arith.constant 0 : index
    %99 = vector.load %arg9[%c32_83, %c0_84] : memref<96x4xf32, #tpu.memory_space<vmem>>, vector<64x4xf32>
    %c2_85 = arith.constant 2 : index
    %c2_86 = arith.constant 2 : index
    %c0_87 = arith.constant 0 : index
    %c0_88 = arith.constant 0 : index
    %100 = vector.load %arg6[%c2_85, %c2_86, %c0_87, %c0_88] : memref<3x3x4x4xf32, #tpu.memory_space<vmem>>, vector<1x1x4x4xf32>
    %101 = vector.shape_cast %100 : vector<1x1x4x4xf32> to vector<4x4xf32>
    %cst_89 = arith.constant dense<0.000000e+00> : vector<64x4xf32>
    %102 = tpu.matmul %99, %101, %cst_89 {dimension_numbers = #tpu.dot_dimension_numbers<[1], [0], [0], [1], [0, 0, 1, 1], [], []>} : vector<64x4xf32>, vector<4x4xf32>, vector<64x4xf32> -> vector<64x4xf32>
    %103 = arith.addf %98, %102 : vector<64x4xf32>
    %c63_i32 = arith.constant 63 : i32
    %104 = tpu.dynamic_rotate %103 by %c63_i32 dim 0 : vector<64x4xf32>, i32 -> vector<64x4xf32>
    %c15_i32 = arith.constant 15 : i32
    %105 = vector.broadcast %c15_i32 : i32 to vector<64x1xi32>
    %106 = arith.cmpi slt, %45, %105 : vector<64x1xi32>
    %cst_90 = arith.constant 0.000000e+00 : f32
    %107 = vector.shape_cast %106 : vector<64x1xi1> to vector<64x1xi1>
    %108 = vector.broadcast %107 : vector<64x1xi1> to vector<64x4xi1>
    %109 = vector.broadcast %cst_90 : f32 to vector<64x4xf32>
    %110 = arith.select %108, %104, %109 : vector<64x4xi1>, vector<64x4xf32>
    %111 = arith.addf %87, %110 : vector<64x4xf32>
    %cst_91 = arith.constant 0.000000e+00 : f32
    %112 = vector.broadcast %cst_91 : f32 to vector<64x4xf32>
    %113 = arith.maximumf %111, %112 : vector<64x4xf32>
    %c0_92 = arith.constant 0 : index
    %c0_93 = arith.constant 0 : index
    %114 = vector.load %arg7[%c0_92, %c0_93] : memref<4x16xf32, #tpu.memory_space<vmem>>, vector<4x16xf32>
    %cst_94 = arith.constant dense<0.000000e+00> : vector<64x16xf32>
    %115 = tpu.matmul %113, %114, %cst_94 {dimension_numbers = #tpu.dot_dimension_numbers<[1], [0], [0], [1], [0, 0, 1, 1], [], []>} : vector<64x4xf32>, vector<4x16xf32>, vector<64x16xf32> -> vector<64x16xf32>
    %c0_95 = arith.constant 0 : index
    %c0_96 = arith.constant 0 : index
    %c0_97 = arith.constant 0 : index
    %116 = vector.load %arg2[%c0_95, %c0_96, %c0_97] : memref<1x64x16xf32, #tpu.memory_space<vmem>>, vector<1x64x16xf32>
    %117 = vector.shape_cast %116 : vector<1x64x16xf32> to vector<64x16xf32>
    %118 = arith.addf %115, %117 : vector<64x16xf32>
    %cst_98 = arith.constant 0.000000e+00 : f32
    %119 = vector.broadcast %cst_98 : f32 to vector<64x16xf32>
    %120 = arith.maximumf %118, %119 : vector<64x16xf32>
    %c0_99 = arith.constant 0 : index
    %c0_100 = arith.constant 0 : index
    %c0_101 = arith.constant 0 : index
    %121 = vector.load %arg8[%c0_99, %c0_100, %c0_101] : memref<1x64x16xf32, #tpu.memory_space<vmem>>, vector<1x64x16xf32>
    %122 = vector.shape_cast %121 : vector<1x64x16xf32> to vector<64x16xf32>
    %123 = vector.shape_cast %120 : vector<64x16xf32> to vector<1x64x16xf32>
    tpu.vector_store %arg8[%c0_99, %c0_100, %c0_101], %123 {strides = array<i32>} : memref<1x64x16xf32, #tpu.memory_space<vmem>>, vector<1x64x16xf32>,
    return
  }
  func.func @transform_0(%arg0: i32, %arg1: i32) -> (i32, i32, i32) {
    %c0_i32 = arith.constant 0 : i32
    %c0_i32_0 = arith.constant 0 : i32
    return %arg0, %arg1, %c0_i32 : i32, i32, i32
  }
  func.func @transform_1(%arg0: i32, %arg1: i32) -> (i32, i32, i32) {
    %c4_i32 = arith.constant 4 : i32
    %0 = arith.muli %arg1, %c4_i32 : i32
    %c1_i32 = arith.constant 1 : i32
    %1 = arith.subi %0, %c1_i32 : i32
    %c0_i32 = arith.constant 0 : i32
    %2 = arith.maxsi %1, %c0_i32 : i32
    %c0_i32_0 = arith.constant 0 : i32
    %c0_i32_1 = arith.constant 0 : i32
    return %arg0, %2, %c0_i32_0 : i32, i32, i32
  }
  func.func @transform_2(%arg0: i32, %arg1: i32) -> (i32, i32, i32) {
    %c1_i32 = arith.constant 1 : i32
    %0 = arith.addi %arg1, %c1_i32 : i32
    %c4_i32 = arith.constant 4 : i32
    %1 = arith.muli %0, %c4_i32 : i32
    %c15_i32 = arith.constant 15 : i32
    %2 = arith.minsi %1, %c15_i32 : i32
    %c0_i32 = arith.constant 0 : i32
    %c0_i32_0 = arith.constant 0 : i32
    return %arg0, %2, %c0_i32 : i32, i32, i32
  }
  func.func @transform_3(%arg0: i32, %arg1: i32) -> (i32, i32) {
    %c0_i32 = arith.constant 0 : i32
    %c0_i32_0 = arith.constant 0 : i32
    %c0_i32_1 = arith.constant 0 : i32
    return %c0_i32, %c0_i32_0 : i32, i32
  }
  func.func @transform_4(%arg0: i32, %arg1: i32) -> (i32, i32, i32, i32) {
    %c0_i32 = arith.constant 0 : i32
    %c0_i32_0 = arith.constant 0 : i32
    %c0_i32_1 = arith.constant 0 : i32
    %c0_i32_2 = arith.constant 0 : i32
    %c0_i32_3 = arith.constant 0 : i32
    return %c0_i32, %c0_i32_0, %c0_i32_1, %c0_i32_2 : i32, i32, i32, i32
  }
  func.func @transform_5(%arg0: i32, %arg1: i32) -> (i32, i32) {
    %c0_i32 = arith.constant 0 : i32
    %c0_i32_0 = arith.constant 0 : i32
    %c0_i32_1 = arith.constant 0 : i32
    return %c0_i32, %c0_i32_0 : i32, i32
  }
  func.func @transform_6(%arg0: i32, %arg1: i32) -> (i32, i32, i32) {
    %c0_i32 = arith.constant 0 : i32
    %c0_i32_0 = arith.constant 0 : i32
    return %arg0, %arg1, %c0_i32 : i32, i32, i32
  }
}

</mosaic_0001>

<llo_original>
// kernel: tpu_custom_call.1
$region0: #{tpu_custom_call.1}
  #allocation0 [shape = 'u32[]', space=smem, size = 0x4, offset = 0x4, fixed_abs, tag = 'smem constant byte address 0x4 - core index']
  #allocation1 [shape = 'u32[144,128]{1,0:T(1,128)}', space=vmem, size = 0x12000, scoped, tag = 'internal scratch']
  #allocation2 [shape = 'f32[96,4]{1,0:T(8,128)}', space=vmem, size = 0xc000, scoped, tag = 'scratch operand']
  %s0 = inlined_call_operand.vmem [shape: f32[2,256,16], index: 0, kind: input, shape index: {}]
  %s1 = inlined_call_operand.vmem [shape: f32[2,256,16], index: 1, kind: input, shape index: {}]
  %s2 = inlined_call_operand.vmem [shape: f32[2,256,16], index: 2, kind: input, shape index: {}]
  %s3 = inlined_call_operand.vmem [shape: f32[16,4], index: 3, kind: input, shape index: {}]
  %s4 = inlined_call_operand.vmem [shape: f32[3,3,4,4], index: 4, kind: input, shape index: {}]
  %s5 = inlined_call_operand.vmem [shape: f32[4,16], index: 5, kind: input, shape index: {}]
  %s6 = inlined_call_operand.vmem [shape: f32[2,256,16], index: 6, kind: output, shape index: {}]
  %s7 = sld [smem:[#allocation0]]
  $region57: #{tpu_custom_call.1} parent=0
    _
  %s9 = ssub.s32 1, %s7
  %s10 = scalar_select 0, %s9, %s7
  loop: start=0, step=1, limit=10
  $region2: #{tpu_custom_call.1} parent=0 // loop_pre_header
    _
  $region3: #{tpu_custom_call.1} parent=0 // loop_header
    %s12 = sphi 0, %s16
    %p13 = scmp.ge.s32.totalorder %s12, 10
    %s19 = sphi 0, %s31
    %s20 = sphi 0, %s27
    %s21 = sphi 0, %s19
    %s22 = sphi 0, %s20
    %s23 = sphi 0, %s21
    %s24 = sphi 0, %s22
    %s36 = sphi 0, %s38
    %s39 = sphi 0, %s36
    %s40 = sphi 0, %s39
    %s56 = sphi 0, %s40
    %s72 = sphi 0, %s74
    %s75 = sphi 0, %s72
    %s76 = sphi 0, %s75
    %s92 = sphi 0, %s76
    %s108 = sphi 0, %s110
    %s111 = sphi 0, %s108
    %s112 = sphi 0, %s111
    %s128 = sphi 0, %s112
    %s132 = sphi 0, %s132
    %s134 = sphi 0, %s132
    %s135 = sphi 0, %s134
    %s149 = sphi 0, %s135
    %s153 = sphi 0, %s153
    %s155 = sphi 0, %s153
    %s156 = sphi 0, %s155
    %s170 = sphi 0, %s156
    %s174 = sphi 0, %s174
    %s176 = sphi 0, %s174
    %s177 = sphi 0, %s176
    %s191 = sphi 0, %s177
    %s199 = sphi 0, %s201
    %s202 = sphi 0, %s199
    %s203 = sphi 0, %s202
    %s219 = sphi 0, %s203
  $region4: #{tpu_custom_call.1} parent=0 // loop_header_branch
    %15 = sbr.rel (%p13) target = $region8
  $region5: #{tpu_custom_call.1} parent=0 // loop_body
    %s17 = ssub.s32 %s12, 1
    %s18 = ssub.s32 %s12, 2
    %s25 = sadd.s32 1, %s20
    %p26 = scmp.ge.s32.totalorder %s25, 4
    %s27 = scalar_select %p26, 0, %s25
    %s28 = sadd.s32 1, %s19
    %s29 = scalar_select %p26, %s28, %s19
    %p30 = scmp.ge.s32.totalorder %s29, 2
    %s31 = scalar_select %p30, 0, %s29
    %s32 = ssub.s32 %s19, %s31
    %s33 = ssub.s32 %s20, %s27
    %s34 = sor.u32 %s32, %s33
    %p35 = scmp.eq.s32.totalorder %s34, 0
    %s37 = sadd.s32 %s36, 1
    %s38 = scalar_select %p35, %s36, %s37
    %p41 = pneg %p35
    %p42 = scmp.eq.s32.totalorder %s12, 7
    %p43 = por %p41, %p42
    %p44 = scmp.ne.s32.totalorder %s36, %s39
    %p45 = scmp.eq.s32.totalorder %s12, 0
    %p46 = por %p44, %p45
    %p47 = scmp.ne.s32.totalorder %s36, %s39
    %p48 = scmp.eq.s32.totalorder %s17, 7
    %p49 = por %p47, %p48
    %p50 = scmp.ne.s32.totalorder %s39, %s40
    %p51 = scmp.eq.s32.totalorder %s17, 0
    %p52 = por %p50, %p51
    %p53 = scmp.ne.s32.totalorder %s39, %s40
    %p54 = scmp.eq.s32.totalorder %s18, 7
    %p55 = por %p53, %p54
    %p57 = scmp.ne.s32.totalorder %s40, %s56
    %p58 = scmp.eq.s32.totalorder %s18, 0
    %p59 = por %p57, %p58
    %s60 = smul.u32 %s20, 4
    %s61 = ssub.s32 %s60, 1
    %p62 = scmp.gt.s32.totalorder %s61, 0
    %s63 = scalar_select %p62, %s61, 0
    %s64 = smul.u32 %s27, 4
    %s65 = ssub.s32 %s64, 1
    %p66 = scmp.gt.s32.totalorder %s65, 0
    %s67 = scalar_select %p66, %s65, 0
    %s68 = ssub.s32 %s19, %s31
    %s69 = ssub.s32 %s63, %s67
    %s70 = sor.u32 %s68, %s69
    %p71 = scmp.eq.s32.totalorder %s70, 0
    %s73 = sadd.s32 %s72, 1
    %s74 = scalar_select %p71, %s72, %s73
    %p77 = pneg %p71
    %p78 = scmp.eq.s32.totalorder %s12, 7
    %p79 = por %p77, %p78
    %p80 = scmp.ne.s32.totalorder %s72, %s75
    %p81 = scmp.eq.s32.totalorder %s12, 0
    %p82 = por %p80, %p81
    %p83 = scmp.ne.s32.totalorder %s72, %s75
    %p84 = scmp.eq.s32.totalorder %s17, 7
    %p85 = por %p83, %p84
    %p86 = scmp.ne.s32.totalorder %s75, %s76
    %p87 = scmp.eq.s32.totalorder %s17, 0
    %p88 = por %p86, %p87
    %p89 = scmp.ne.s32.totalorder %s75, %s76
    %p90 = scmp.eq.s32.totalorder %s18, 7
    %p91 = por %p89, %p90
    %p93 = scmp.ne.s32.totalorder %s76, %s92
    %p94 = scmp.eq.s32.totalorder %s18, 0
    %p95 = por %p93, %p94
    %s96 = sadd.s32 %s20, 1
    %s97 = smul.u32 %s96, 4
    %p98 = scmp.lt.s32.totalorder %s97, 15
    %s99 = scalar_select %p98, %s97, 15
    %s100 = sadd.s32 %s27, 1
    %s101 = smul.u32 %s100, 4
    %p102 = scmp.lt.s32.totalorder %s101, 15
    %s103 = scalar_select %p102, %s101, 15
    %s104 = ssub.s32 %s19, %s31
    %s105 = ssub.s32 %s99, %s103
    %s106 = sor.u32 %s104, %s105
    %p107 = scmp.eq.s32.totalorder %s106, 0
    %s109 = sadd.s32 %s108, 1
    %s110 = scalar_select %p107, %s108, %s109
    %p113 = pneg %p107
    %p114 = scmp.eq.s32.totalorder %s12, 7
    %p115 = por %p113, %p114
    %p116 = scmp.ne.s32.totalorder %s108, %s111
    %p117 = scmp.eq.s32.totalorder %s12, 0
    %p118 = por %p116, %p117
    %p119 = scmp.ne.s32.totalorder %s108, %s111
    %p120 = scmp.eq.s32.totalorder %s17, 7
    %p121 = por %p119, %p120
    %p122 = scmp.ne.s32.totalorder %s111, %s112
    %p123 = scmp.eq.s32.totalorder %s17, 0
    %p124 = por %p122, %p123
    %p125 = scmp.ne.s32.totalorder %s111, %s112
    %p126 = scmp.eq.s32.totalorder %s18, 7
    %p127 = por %p125, %p126
    %p129 = scmp.ne.s32.totalorder %s112, %s128
    %p130 = scmp.eq.s32.totalorder %s18, 0
    %p131 = por %p129, %p130
    %s133 = sadd.s32 %s132, 1
    %p136 = scmp.eq.s32.totalorder %s12, 7
    %p137 = scmp.ne.s32.totalorder %s132, %s134
    %p138 = scmp.eq.s32.totalorder %s12, 0
    %p139 = por %p137, %p138
    %p140 = scmp.ne.s32.totalorder %s132, %s134
    %p141 = scmp.eq.s32.totalorder %s17, 7
    %p142 = por %p140, %p141
    %p143 = scmp.ne.s32.totalorder %s134, %s135
    %p144 = scmp.eq.s32.totalorder %s17, 0
    %p145 = por %p143, %p144
    %p146 = scmp.ne.s32.totalorder %s134, %s135
    %p147 = scmp.eq.s32.totalorder %s18, 7
    %p148 = por %p146, %p147
    %p150 = scmp.ne.s32.totalorder %s135, %s149
    %p151 = scmp.eq.s32.totalorder %s18, 0
    %p152 = por %p150, %p151
    %s154 = sadd.s32 %s153, 1
    %p157 = scmp.eq.s32.totalorder %s12, 7
    %p158 = scmp.ne.s32.totalorder %s153, %s155
    %p159 = scmp.eq.s32.totalorder %s12, 0
    %p160 = por %p158, %p159
    %p161 = scmp.ne.s32.totalorder %s153, %s155
    %p162 = scmp.eq.s32.totalorder %s17, 7
    %p163 = por %p161, %p162
    %p164 = scmp.ne.s32.totalorder %s155, %s156
    %p165 = scmp.eq.s32.totalorder %s17, 0
    %p166 = por %p164, %p165
    %p167 = scmp.ne.s32.totalorder %s155, %s156
    %p168 = scmp.eq.s32.totalorder %s18, 7
    %p169 = por %p167, %p168
    %p171 = scmp.ne.s32.totalorder %s156, %s170
    %p172 = scmp.eq.s32.totalorder %s18, 0
    %p173 = por %p171, %p172
    %s175 = sadd.s32 %s174, 1
    %p178 = scmp.eq.s32.totalorder %s12, 7
    %p179 = scmp.ne.s32.totalorder %s174, %s176
    %p180 = scmp.eq.s32.totalorder %s12, 0
    %p181 = por %p179, %p180
    %p182 = scmp.ne.s32.totalorder %s174, %s176
    %p183 = scmp.eq.s32.totalorder %s17, 7
    %p184 = por %p182, %p183
    %p185 = scmp.ne.s32.totalorder %s176, %s177
    %p186 = scmp.eq.s32.totalorder %s17, 0
    %p187 = por %p185, %p186
    %p188 = scmp.ne.s32.totalorder %s176, %s177
    %p189 = scmp.eq.s32.totalorder %s18, 7
    %p190 = por %p188, %p189
    %p192 = scmp.ne.s32.totalorder %s177, %s191
    %p193 = scmp.eq.s32.totalorder %s18, 0
    %p194 = por %p192, %p193
    %s195 = ssub.s32 %s19, %s31
    %s196 = ssub.s32 %s20, %s27
    %s197 = sor.u32 %s195, %s196
    %p198 = scmp.eq.s32.totalorder %s197, 0
    %s200 = sadd.s32 %s199, 1
    %s201 = scalar_select %p198, %s199, %s200
    %p204 = pneg %p198
    %p205 = scmp.eq.s32.totalorder %s12, 7
    %p206 = por %p204, %p205
    %p207 = scmp.ne.s32.totalorder %s199, %s202
    %p208 = scmp.eq.s32.totalorder %s12, 0
    %p209 = por %p207, %p208
    %p210 = scmp.ne.s32.totalorder %s199, %s202
    %p211 = scmp.eq.s32.totalorder %s17, 7
    %p212 = por %p210, %p211
    %p213 = scmp.ne.s32.totalorder %s202, %s203
    %p214 = scmp.eq.s32.totalorder %s17, 0
    %p215 = por %p213, %p214
    %p216 = scmp.ne.s32.totalorder %s202, %s203
    %p217 = scmp.eq.s32.totalorder %s18, 7
    %p218 = por %p216, %p217
    %p220 = scmp.ne.s32.totalorder %s203, %s219
    %p221 = scmp.eq.s32.totalorder %s18, 0
    %p222 = por %p220, %p221
    %p223 = scmp.le.s32.totalorder 1, %s12
    %p224 = scmp.lt.s32.totalorder %s12, 9
    %p225 = pnand %p223, %p224
    %p226 = pneg %p225
    // Predicated region
    $region9: #{tpu_custom_call.1} parent=5 // pred_check
      _
    $region10: #{tpu_custom_call.1} parent=5 // pred_check_branch
      %228 = sbr.rel (%p225) target = $region12
    $region11: #{tpu_custom_call.1} parent=5 // pred_region
      %s229 = ssub.s32 %s12, 1
      // Predicated region
      $region13: #{tpu_custom_call.1} parent=11 // pred_check
        %p230 = pneg %p145
      $region14: #{tpu_custom_call.1} parent=11 // pred_check_branch
        %232 = sbr.rel (%p230) target = $region16
      $region15: #{tpu_custom_call.1} parent=11 // pred_region
        _
      $region16: #{tpu_custom_call.1} parent=11 // pred_fallthru
        _
      // Predicated region
      $region17: #{tpu_custom_call.1} parent=11 // pred_check
        %p233 = pneg %p166
      $region18: #{tpu_custom_call.1} parent=11 // pred_check_branch
        %235 = sbr.rel (%p233) target = $region20
      $region19: #{tpu_custom_call.1} parent=11 // pred_region
        _
      $region20: #{tpu_custom_call.1} parent=11 // pred_fallthru
        _
      // Predicated region
      $region21: #{tpu_custom_call.1} parent=11 // pred_check
        %p236 = pneg %p187
      $region22: #{tpu_custom_call.1} parent=11 // pred_check_branch
        %238 = sbr.rel (%p236) target = $region24
      $region23: #{tpu_custom_call.1} parent=11 // pred_region
        _
      $region24: #{tpu_custom_call.1} parent=11 // pred_fallthru
        _
    $region12: #{tpu_custom_call.1} parent=5 // pred_fallthru
      _
    %p239 = scmp.lt.s32.totalorder %s12, 8
    // Predicated region
    $region25: #{tpu_custom_call.1} parent=5 // pred_check
      %p240 = pneg %p239
    $region26: #{tpu_custom_call.1} parent=5 // pred_check_branch
      %242 = sbr.rel (%p240) target = $region28
    $region27: #{tpu_custom_call.1} parent=5 // pred_region
      // Predicated region
      $region29: #{tpu_custom_call.1} parent=27 // pred_check
        %p243 = pneg %p46
      $region30: #{tpu_custom_call.1} parent=27 // pred_check_branch
        %245 = sbr.rel (%p243) target = $region32
      $region31: #{tpu_custom_call.1} parent=27 // pred_region
        %s246 = smul.u32 8, %s20
        %p247 = scmp.lt.s32.totalorder %s19, 1
        %s248 = scalar_select %p247, %s19, 1
        %p249 = scmp.lt.s32.totalorder %s246, 31
        %s250 = scalar_select %p249, %s246, 31
        %s251 = smul.addr %s248, 32
        %s252 = sadd.s32 %s250, %s251
        %s253 = smul.addr %s252, 8
        %s254 = scalar_lea.vmem %s0, %s253
        %s255 = smul.u32 8, %s20
      $region32: #{tpu_custom_call.1} parent=27 // pred_fallthru
        _
      // Predicated region
      $region33: #{tpu_custom_call.1} parent=27 // pred_check
        %p256 = pneg %p82
      $region34: #{tpu_custom_call.1} parent=27 // pred_check_branch
        %258 = sbr.rel (%p256) target = $region36
      $region35: #{tpu_custom_call.1} parent=27 // pred_region
        %s259 = smul.u32 %s20, 4
        %s260 = ssub.s32 %s259, 1
        %p261 = scmp.gt.s32.totalorder %s260, 0
        %s262 = scalar_select %p261, %s260, 0
        %s263 = smul.u32 2, %s262
        %p264 = scmp.lt.s32.totalorder %s19, 1
        %s265 = scalar_select %p264, %s19, 1
        %p266 = scmp.lt.s32.totalorder %s263, 31
        %s267 = scalar_select %p266, %s263, 31
        %s268 = smul.addr %s265, 32
        %s269 = sadd.s32 %s267, %s268
        %s270 = smul.addr %s269, 8
        %s271 = scalar_lea.vmem %s1, %s270
        %s272 = smul.u32 %s20, 4
        %s273 = ssub.s32 %s272, 1
        %p274 = scmp.gt.s32.totalorder %s273, 0
        %s275 = scalar_select %p274, %s273, 0
        %s276 = smul.u32 2, %s275
      $region36: #{tpu_custom_call.1} parent=27 // pred_fallthru
        _
      // Predicated region
      $region37: #{tpu_custom_call.1} parent=27 // pred_check
        %p277 = pneg %p118
      $region38: #{tpu_custom_call.1} parent=27 // pred_check_branch
        %279 = sbr.rel (%p277) target = $region40
      $region39: #{tpu_custom_call.1} parent=27 // pred_region
        %s280 = sadd.s32 %s20, 1
        %s281 = smul.u32 %s280, 4
        %p282 = scmp.lt.s32.totalorder %s281, 15
        %s283 = scalar_select %p282, %s281, 15
        %s284 = smul.u32 2, %s283
        %p285 = scmp.lt.s32.totalorder %s19, 1
        %s286 = scalar_select %p285, %s19, 1
        %p287 = scmp.lt.s32.totalorder %s284, 31
        %s288 = scalar_select %p287, %s284, 31
        %s289 = smul.addr %s286, 32
        %s290 = sadd.s32 %s288, %s289
        %s291 = smul.addr %s290, 8
        %s292 = scalar_lea.vmem %s2, %s291
        %s293 = sadd.s32 %s20, 1
        %s294 = smul.u32 %s293, 4
        %p295 = scmp.lt.s32.totalorder %s294, 15
        %s296 = scalar_select %p295, %s294, 15
        %s297 = smul.u32 2, %s296
      $region40: #{tpu_custom_call.1} parent=27 // pred_fallthru
        _
    $region28: #{tpu_custom_call.1} parent=5 // pred_fallthru
      _
    %p298 = scmp.le.s32.totalorder 1, %s12
    %p299 = scmp.lt.s32.totalorder %s12, 9
    %p300 = pnand %p298, %p299
    %p301 = pneg %p300
    // Predicated region
    $region41: #{tpu_custom_call.1} parent=5 // pred_check
      _
    $region42: #{tpu_custom_call.1} parent=5 // pred_check_branch
      %303 = sbr.rel (%p300) target = $region44
    $region43: #{tpu_custom_call.1} parent=5 // pred_region
      %s304 = ssub.s32 %s12, 1
      %s305 = smul.u32 8, %s22
      %p306 = scmp.lt.s32.totalorder %s21, 1
      %s307 = scalar_select %p306, %s21, 1
      %p308 = scmp.lt.s32.totalorder %s305, 31
      %s309 = scalar_select %p308, %s305, 31
      %s310 = smul.addr %s307, 32
      %s311 = sadd.s32 %s309, %s310
      %s312 = smul.addr %s311, 8
      %s313 = scalar_lea.vmem %s0, %s312
      %p314 = pneg %p52
      %p315 = pneg %p49
      %s316 = smul.u32 %s22, 4
      %s317 = ssub.s32 %s316, 1
      %p318 = scmp.gt.s32.totalorder %s317, 0
      %s319 = scalar_select %p318, %s317, 0
      %s320 = smul.u32 2, %s319
      %p321 = scmp.lt.s32.totalorder %s21, 1
      %s322 = scalar_select %p321, %s21, 1
      %p323 = scmp.lt.s32.totalorder %s320, 31
      %s324 = scalar_select %p323, %s320, 31
      %s325 = smul.addr %s322, 32
      %s326 = sadd.s32 %s324, %s325
      %s327 = smul.addr %s326, 8
      %s328 = scalar_lea.vmem %s1, %s327
      %p329 = pneg %p88
      %p330 = pneg %p85
      %s331 = sadd.s32 %s22, 1
      %s332 = smul.u32 %s331, 4
      %p333 = scmp.lt.s32.totalorder %s332, 15
      %s334 = scalar_select %p333, %s332, 15
      %s335 = smul.u32 2, %s334
      %p336 = scmp.lt.s32.totalorder %s21, 1
      %s337 = scalar_select %p336, %s21, 1
      %p338 = scmp.lt.s32.totalorder %s335, 31
      %s339 = scalar_select %p338, %s335, 31
      %s340 = smul.addr %s337, 32
      %s341 = sadd.s32 %s339, %s340
      %s342 = smul.addr %s341, 8
      %s343 = scalar_lea.vmem %s2, %s342
      %p344 = pneg %p124
      %p345 = pneg %p121
      %p346 = pneg %p145
      %p347 = pneg %p142
      %p348 = pneg %p166
      %p349 = pneg %p163
      %p350 = pneg %p187
      %p351 = pneg %p184
      %p352 = pneg %p215
      %p353 = pneg %p212
      %s354 = smul.u32 8, %s22
      %p355 = scmp.lt.s32.totalorder %s21, 1
      %s356 = scalar_select %p355, %s21, 1
      %p357 = scmp.lt.s32.totalorder %s354, 31
      %s358 = scalar_select %p357, %s354, 31
      %s359 = smul.addr %s356, 32
      %s360 = sadd.s32 %s358, %s359
      %s361 = smul.addr %s360, 8
      %s362 = scalar_lea.vmem %s6, %s361
      %s363 = smul.u32 8, %s22
      %p364 = scmp.lt.s32.totalorder %s21, 1
      %s365 = scalar_select %p364, %s21, 1
      %p366 = scmp.lt.s32.totalorder %s363, 31
      %s367 = scalar_select %p366, %s363, 31
      %s368 = smul.addr %s365, 32
      %s369 = sadd.s32 %s367, %s368
      %s370 = smul.addr %s369, 8
      %s371 = scalar_lea.vmem %s0, %s370
      %s372 = smul.u32 8, %s22
      %s373 = smul.u32 %s22, 4
      %s374 = ssub.s32 %s373, 1
      %p375 = scmp.gt.s32.totalorder %s374, 0
      %s376 = scalar_select %p375, %s374, 0
      %s377 = smul.u32 2, %s376
      %p378 = scmp.lt.s32.totalorder %s21, 1
      %s379 = scalar_select %p378, %s21, 1
      %p380 = scmp.lt.s32.totalorder %s377, 31
      %s381 = scalar_select %p380, %s377, 31
      %s382 = smul.addr %s379, 32
      %s383 = sadd.s32 %s381, %s382
      %s384 = smul.addr %s383, 8
      %s385 = scalar_lea.vmem %s1, %s384
      %s386 = smul.u32 %s22, 4
      %s387 = ssub.s32 %s386, 1
      %p388 = scmp.gt.s32.totalorder %s387, 0
      %s389 = scalar_select %p388, %s387, 0
      %s390 = smul.u32 2, %s389
      %s391 = sadd.s32 %s22, 1
      %s392 = smul.u32 %s391, 4
      %p393 = scmp.lt.s32.totalorder %s392, 15
      %s394 = scalar_select %p393, %s392, 15
      %s395 = smul.u32 2, %s394
      %p396 = scmp.lt.s32.totalorder %s21, 1
      %s397 = scalar_select %p396, %s21, 1
      %p398 = scmp.lt.s32.totalorder %s395, 31
      %s399 = scalar_select %p398, %s395, 31
      %s400 = smul.addr %s397, 32
      %s401 = sadd.s32 %s399, %s400
      %s402 = smul.addr %s401, 8
      %s403 = scalar_lea.vmem %s2, %s402
      %s404 = sadd.s32 %s22, 1
      %s405 = smul.u32 %s404, 4
      %p406 = scmp.lt.s32.totalorder %s405, 15
      %s407 = scalar_select %p406, %s405, 15
      %s408 = smul.u32 2, %s407
      %s409 = smul.u32 8, %s22
      %p410 = scmp.lt.s32.totalorder %s21, 1
      %s411 = scalar_select %p410, %s21, 1
      %p412 = scmp.lt.s32.totalorder %s409, 31
      %s413 = scalar_select %p412, %s409, 31
      %s414 = smul.addr %s411, 32
      %s415 = sadd.s32 %s413, %s414
      %s416 = smul.addr %s415, 8
      %s417 = scalar_lea.vmem %s6, %s416
      %s418 = smul.u32 8, %s22
      %v419 = vld [vmem:[%s3] sm:$0xff]
      %v420 = vld [vmem:[%s3 + $0x8] sm:$0xff]
      %v421 = vld [vmem:[%s371] sm:$0xff]
      %v422 = vld [vmem:[%s371 + $0x8] sm:$0xff]
      %v423 = vld [vmem:[%s371 + $0x10] sm:$0xff]
      %v424 = vld [vmem:[%s371 + $0x18] sm:$0xff]
      %v425 = vld [vmem:[%s371 + $0x20] sm:$0xff]
      %v426 = vld [vmem:[%s371 + $0x28] sm:$0xff]
      %v427 = vld [vmem:[%s371 + $0x30] sm:$0xff]
      %v428 = vld [vmem:[%s371 + $0x38] sm:$0xff]
      %vm429 = vcmask 130048
      %v431 = vsel %vm429, %v421, 0
      %v434 = vsel %vm429, %v422, 0
      %v437 = vsel %vm429, %v423, 0
      %v440 = vsel %vm429, %v424, 0
      %v443 = vsel %vm429, %v425, 0
      %v446 = vsel %vm429, %v426, 0
      %v449 = vsel %vm429, %v427, 0
      %v452 = vsel %vm429, %v428, 0
      %454 = vmatprep.subr.mxu0 0.0
      %455 = vmatpush1.msra.mxu0 %v419
      %456 = vmatprep.subr.mxu0 0.0
      %457 = vmatpush1.msra.mxu0 %v420
      %458 = vmatprep.subr.mxu0 0.0
      %459 = vmatpush1.msra.mxu0 0.0
      %460 = vmatprep.subr.mxu0 0.0
      %461 = vmatpush1.msra.mxu0 0.0
      %462 = vmatprep.subr.mxu0 0.0
      %463 = vmatpush1.msra.mxu0 0.0
      %464 = vmatprep.subr.mxu0 0.0
      %465 = vmatpush1.msra.mxu0 0.0
      %466 = vmatprep.subr.mxu0 0.0
      %467 = vmatpush1.msra.mxu0 0.0
      %468 = vmatprep.subr.mxu0 0.0
      %469 = vmatpush1.msra.mxu0 0.0
      %470 = vmatprep.subr.mxu0 0.0
      %471 = vmatpush1.msra.mxu0 0.0
      %472 = vmatprep.subr.mxu0 0.0
      %473 = vmatpush1.msra.mxu0 0.0
      %474 = vmatprep.subr.mxu0 0.0
      %475 = vmatpush1.msra.mxu0 0.0
      %476 = vmatprep.subr.mxu0 0.0
      %477 = vmatpush1.msra.mxu0 0.0
      %478 = vmatprep.subr.mxu0 0.0
      %479 = vmatpush1.msra.mxu0 0.0
      %480 = vmatprep.subr.mxu0 0.0
      %481 = vmatpush1.msra.mxu0 0.0
      %482 = vmatprep.subr.mxu0 0.0
      %483 = vmatpush1.msra.mxu0 0.0
      %484 = vmatprep.subr.mxu0 0.0
      %485 = vmatpush1.msra.mxu0 0.0
      %486 = vmatprep.subr.mxu0 0.0
      %487 = vmatpush1.msra.mxu0 0.0
      %488 = vmatprep.subr.mxu0 0.0
      %489 = vmatpush1.msra.mxu0 0.0
      %490 = vmatprep.subr.mxu0 0.0
      %491 = vmatpush1.msra.mxu0 0.0
      %492 = vmatprep.subr.mxu0 0.0
      %493 = vmatpush1.msra.mxu0 0.0
      %494 = vmatprep.subr.mxu0 0.0
      %495 = vmatpush1.msra.mxu0 0.0
      %496 = vmatprep.subr.mxu0 0.0
      %497 = vmatpush1.msra.mxu0 0.0
      %498 = vmatprep.subr.mxu0 0.0
      %499 = vmatpush1.msra.mxu0 0.0
      %500 = vmatprep.subr.mxu0 0.0
      %501 = vmatpush1.msra.mxu0 0.0
      %502 = vmatprep.subr.mxu0 0.0
      %503 = vmatpush1.msra.mxu0 0.0
      %504 = vmatprep.subr.mxu0 0.0
      %505 = vmatpush1.msra.mxu0 0.0
      %506 = vmatprep.subr.mxu0 0.0
      %507 = vmatpush1.msra.mxu0 0.0
      %508 = vmatprep.subr.mxu0 0.0
      %509 = vmatpush1.msra.mxu0 0.0
      %510 = vmatprep.subr.mxu0 0.0
      %511 = vmatpush1.msra.mxu0 0.0
      %512 = vmatprep.subr.mxu0 0.0
      %513 = vmatpush1.msra.mxu0 0.0
      %514 = vmatprep.subr.mxu0 0.0
      %515 = vmatpush1.msra.mxu0 0.0
      %516 = vmatprep.subr.mxu0 0.0
      %517 = vmatpush1.msra.mxu0 0.0
      %518 = vmatprep.mubr.f32.mxu0 0.0
      %519 = vmatmul.mubr.f32.gmra.mrb[0].mxu0 %v431
      %v520 = vpop.f32.mrb[0].mxu0
      %v521 = vadd.f32 0.0, %v520
      %v522 = vpop.f32.mrb[0].mxu0
      %523 = vmatprep.mubr.f32.mxu0 0.0
      %524 = vmatmul.mubr.f32.gmra.mrb[0].mxu0 %v434
      %v525 = vpop.f32.mrb[0].mxu0
      %v526 = vadd.f32 0.0, %v525
      %v527 = vpop.f32.mrb[0].mxu0
      %528 = vmatprep.mubr.f32.mxu0 0.0
      %529 = vmatmul.mubr.f32.gmra.mrb[0].mxu0 %v437
      %v530 = vpop.f32.mrb[0].mxu0
      %v531 = vadd.f32 0.0, %v530
      %v532 = vpop.f32.mrb[0].mxu0
      %533 = vmatprep.mubr.f32.mxu0 0.0
      %534 = vmatmul.mubr.f32.gmra.mrb[0].mxu0 %v440
      %v535 = vpop.f32.mrb[0].mxu0
      %v536 = vadd.f32 0.0, %v535
      %v537 = vpop.f32.mrb[0].mxu0
      %538 = vmatprep.mubr.f32.mxu0 0.0
      %539 = vmatmul.mubr.f32.gmra.mrb[0].mxu0 %v443
      %v540 = vpop.f32.mrb[0].mxu0
      %v541 = vadd.f32 0.0, %v540
      %v542 = vpop.f32.mrb[0].mxu0
      %543 = vmatprep.mubr.f32.mxu0 0.0
      %544 = vmatmul.mubr.f32.gmra.mrb[0].mxu0 %v446
      %v545 = vpop.f32.mrb[0].mxu0
      %v546 = vadd.f32 0.0, %v545
      %v547 = vpop.f32.mrb[0].mxu0
      %548 = vmatprep.mubr.f32.mxu0 0.0
      %549 = vmatmul.mubr.f32.gmra.mrb[0].mxu0 %v449
      %v550 = vpop.f32.mrb[0].mxu0
      %v551 = vadd.f32 0.0, %v550
      %v552 = vpop.f32.mrb[0].mxu0
      %553 = vmatprep.mubr.f32.mxu0 0.0
      %554 = vmatmul.mubr.f32.gmra.mrb[0].mxu0 %v452
      %v555 = vpop.f32.mrb[0].mxu0
      %v556 = vadd.f32 0.0, %v555
      %v557 = vpop.f32.mrb[0].mxu0
      %558 = vdwg.mxu0
      %v559 = vmax.f32 %v521, 0.0
      %v560 = vmax.f32 %v526, 0.0
      %v561 = vmax.f32 %v531, 0.0
      %v562 = vmax.f32 %v536, 0.0
      %v563 = vmax.f32 %v541, 0.0
      %v564 = vmax.f32 %v546, 0.0
      %v565 = vmax.f32 %v551, 0.0
      %v566 = vmax.f32 %v556, 0.0
      %vm567 = vcmask 31744
      %568 = vst.msk [vmem:[#allocation2 + $0x10] sm:$0xff] %vm567, %v559
      %569 = vst.msk [vmem:[#allocation2 + $0x18] sm:$0xff] %vm567, %v560
      %570 = vst.msk [vmem:[#allocation2 + $0x20] sm:$0xff] %vm567, %v561
      %571 = vst.msk [vmem:[#allocation2 + $0x28] sm:$0xff] %vm567, %v562
      %572 = vst.msk [vmem:[#allocation2 + $0x30] sm:$0xff] %vm567, %v563
      %573 = vst.msk [vmem:[#allocation2 + $0x38] sm:$0xff] %vm567, %v564
      %574 = vst.msk [vmem:[#allocation2 + $0x40] sm:$0xff] %vm567, %v565
      %575 = vst.msk [vmem:[#allocation2 + $0x48] sm:$0xff] %vm567, %v566
      %p576 = scmp.gt.s32.totalorder %s22, 0
      %s577 = scalar_select %p576, 1, 0
      %s578 = scvt.s32.f32 %s577
      %p579 = scmp.lt.s32.totalorder %s22, 3
      %s580 = scalar_select %p579, 1, 0
      %s581 = scvt.s32.f32 %s580
      %v582 = vld [vmem:[%s385] sm:$0xff]
      %v583 = vld [vmem:[%s385 + $0x8] sm:$0xff]
      %v585 = vsel %vm429, %v582, 0
      %v588 = vsel %vm429, %v583, 0
      %590 = vmatprep.subr.mxu0 0.0
      %591 = vmatpush1.msra.mxu0 %v419
      %592 = vmatprep.subr.mxu0 0.0
      %593 = vmatpush1.msra.mxu0 %v420
      %594 = vmatprep.subr.mxu0 0.0
      %595 = vmatpush1.msra.mxu0 0.0
      %596 = vmatprep.subr.mxu0 0.0
      %597 = vmatpush1.msra.mxu0 0.0
      %598 = vmatprep.subr.mxu0 0.0
      %599 = vmatpush1.msra.mxu0 0.0
      %600 = vmatprep.subr.mxu0 0.0
      %601 = vmatpush1.msra.mxu0 0.0
      %602 = vmatprep.subr.mxu0 0.0
      %603 = vmatpush1.msra.mxu0 0.0
      %604 = vmatprep.subr.mxu0 0.0
      %605 = vmatpush1.msra.mxu0 0.0
      %606 = vmatprep.subr.mxu0 0.0
      %607 = vmatpush1.msra.mxu0 0.0
      %608 = vmatprep.subr.mxu0 0.0
      %609 = vmatpush1.msra.mxu0 0.0
      %610 = vmatprep.subr.mxu0 0.0
      %611 = vmatpush1.msra.mxu0 0.0
      %612 = vmatprep.subr.mxu0 0.0
      %613 = vmatpush1.msra.mxu0 0.0
      %614 = vmatprep.subr.mxu0 0.0
      %615 = vmatpush1.msra.mxu0 0.0
      %616 = vmatprep.subr.mxu0 0.0
      %617 = vmatpush1.msra.mxu0 0.0
      %618 = vmatprep.subr.mxu0 0.0
      %619 = vmatpush1.msra.mxu0 0.0
      %620 = vmatprep.subr.mxu0 0.0
      %621 = vmatpush1.msra.mxu0 0.0
      %622 = vmatprep.subr.mxu0 0.0
      %623 = vmatpush1.msra.mxu0 0.0
      %624 = vmatprep.subr.mxu0 0.0
      %625 = vmatpush1.msra.mxu0 0.0
      %626 = vmatprep.subr.mxu0 0.0
      %627 = vmatpush1.msra.mxu0 0.0
      %628 = vmatprep.subr.mxu0 0.0
      %629 = vmatpush1.msra.mxu0 0.0
      %630 = vmatprep.subr.mxu0 0.0
      %631 = vmatpush1.msra.mxu0 0.0
      %632 = vmatprep.subr.mxu0 0.0
      %633 = vmatpush1.msra.mxu0 0.0
      %634 = vmatprep.subr.mxu0 0.0
      %635 = vmatpush1.msra.mxu0 0.0
      %636 = vmatprep.subr.mxu0 0.0
      %637 = vmatpush1.msra.mxu0 0.0
      %638 = vmatprep.subr.mxu0 0.0
      %639 = vmatpush1.msra.mxu0 0.0
      %640 = vmatprep.subr.mxu0 0.0
      %641 = vmatpush1.msra.mxu0 0.0
      %642 = vmatprep.subr.mxu0 0.0
      %643 = vmatpush1.msra.mxu0 0.0
      %644 = vmatprep.subr.mxu0 0.0
      %645 = vmatpush1.msra.mxu0 0.0
      %646 = vmatprep.subr.mxu0 0.0
      %647 = vmatpush1.msra.mxu0 0.0
      %648 = vmatprep.subr.mxu0 0.0
      %649 = vmatpush1.msra.mxu0 0.0
      %650 = vmatprep.subr.mxu0 0.0
      %651 = vmatpush1.msra.mxu0 0.0
      %652 = vmatprep.subr.mxu0 0.0
      %653 = vmatpush1.msra.mxu0 0.0
      %654 = vmatprep.mubr.f32.mxu0 0.0
      %655 = vmatmul.mubr.f32.gmra.mrb[0].mxu0 %v585
      %v656 = vpop.f32.mrb[0].mxu0
      %v657 = vadd.f32 0.0, %v656
      %v658 = vpop.f32.mrb[0].mxu0
      %659 = vmatprep.mubr.f32.mxu0 0.0
      %660 = vmatmul.mubr.f32.gmra.mrb[0].mxu0 %v588
      %v661 = vpop.f32.mrb[0].mxu0
      %v662 = vadd.f32 0.0, %v661
      %v663 = vpop.f32.mrb[0].mxu0
      %664 = vdwg.mxu0
      %v665 = vmax.f32 %v657, 0.0
      %v666 = vmax.f32 %v662, 0.0
      %v667 = vstv %s578
      %v668 = vmul.f32 %v665, %v667
      %v669 = vmul.f32 %v666, %v667
      %670 = vst.msk [vmem:[#allocation2] sm:$0xff] %vm567, %v668
      %671 = vst.msk [vmem:[#allocation2 + $0x8] sm:$0xff] %vm567, %v669
      %v672 = vld [vmem:[%s403] sm:$0xff]
      %v673 = vld [vmem:[%s403 + $0x8] sm:$0xff]
      %v675 = vsel %vm429, %v672, 0
      %v678 = vsel %vm429, %v673, 0
      %680 = vmatprep.subr.mxu0 0.0
      %681 = vmatpush1.msra.mxu0 %v419
      %682 = vmatprep.subr.mxu0 0.0
      %683 = vmatpush1.msra.mxu0 %v420
      %684 = vmatprep.subr.mxu0 0.0
      %685 = vmatpush1.msra.mxu0 0.0
      %686 = vmatprep.subr.mxu0 0.0
      %687 = vmatpush1.msra.mxu0 0.0
      %688 = vmatprep.subr.mxu0 0.0
      %689 = vmatpush1.msra.mxu0 0.0
      %690 = vmatprep.subr.mxu0 0.0
      %691 = vmatpush1.msra.mxu0 0.0
      %692 = vmatprep.subr.mxu0 0.0
      %693 = vmatpush1.msra.mxu0 0.0
      %694 = vmatprep.subr.mxu0 0.0
      %695 = vmatpush1.msra.mxu0 0.0
      %696 = vmatprep.subr.mxu0 0.0
      %697 = vmatpush1.msra.mxu0 0.0
      %698 = vmatprep.subr.mxu0 0.0
      %699 = vmatpush1.msra.mxu0 0.0
      %700 = vmatprep.subr.mxu0 0.0
      %701 = vmatpush1.msra.mxu0 0.0
      %702 = vmatprep.subr.mxu0 0.0
      %703 = vmatpush1.msra.mxu0 0.0
      %704 = vmatprep.subr.mxu0 0.0
      %705 = vmatpush1.msra.mxu0 0.0
      %706 = vmatprep.subr.mxu0 0.0
      %707 = vmatpush1.msra.mxu0 0.0
      %708 = vmatprep.subr.mxu0 0.0
      %709 = vmatpush1.msra.mxu0 0.0
      %710 = vmatprep.subr.mxu0 0.0
      %711 = vmatpush1.msra.mxu0 0.0
      %712 = vmatprep.subr.mxu0 0.0
      %713 = vmatpush1.msra.mxu0 0.0
      %714 = vmatprep.subr.mxu0 0.0
      %715 = vmatpush1.msra.mxu0 0.0
      %716 = vmatprep.subr.mxu0 0.0
      %717 = vmatpush1.msra.mxu0 0.0
      %718 = vmatprep.subr.mxu0 0.0
      %719 = vmatpush1.msra.mxu0 0.0
      %720 = vmatprep.subr.mxu0 0.0
      %721 = vmatpush1.msra.mxu0 0.0
      %722 = vmatprep.subr.mxu0 0.0
      %723 = vmatpush1.msra.mxu0 0.0
      %724 = vmatprep.subr.mxu0 0.0
      %725 = vmatpush1.msra.mxu0 0.0
      %726 = vmatprep.subr.mxu0 0.0
      %727 = vmatpush1.msra.mxu0 0.0
      %728 = vmatprep.subr.mxu0 0.0
      %729 = vmatpush1.msra.mxu0 0.0
      %730 = vmatprep.subr.mxu0 0.0
      %731 = vmatpush1.msra.mxu0 0.0
      %732 = vmatprep.subr.mxu0 0.0
      %733 = vmatpush1.msra.mxu0 0.0
      %734 = vmatprep.subr.mxu0 0.0
      %735 = vmatpush1.msra.mxu0 0.0
      %736 = vmatprep.subr.mxu0 0.0
      %737 = vmatpush1.msra.mxu0 0.0
      %738 = vmatprep.subr.mxu0 0.0
      %739 = vmatpush1.msra.mxu0 0.0
      %740 = vmatprep.subr.mxu0 0.0
      %741 = vmatpush1.msra.mxu0 0.0
      %742 = vmatprep.subr.mxu0 0.0
      %743 = vmatpush1.msra.mxu0 0.0
      %744 = vmatprep.mubr.f32.mxu0 0.0
      %745 = vmatmul.mubr.f32.gmra.mrb[0].mxu0 %v675
      %v746 = vpop.f32.mrb[0].mxu0
      %v747 = vadd.f32 0.0, %v746
      %v748 = vpop.f32.mrb[0].mxu0
      %749 = vmatprep.mubr.f32.mxu0 0.0
      %750 = vmatmul.mubr.f32.gmra.mrb[0].mxu0 %v678
      %v751 = vpop.f32.mrb[0].mxu0
      %v752 = vadd.f32 0.0, %v751
      %v753 = vpop.f32.mrb[0].mxu0
      %754 = vdwg.mxu0
      %v755 = vmax.f32 %v747, 0.0
      %v756 = vmax.f32 %v752, 0.0
      %v757 = vstv %s581
      %v758 = vmul.f32 %v755, %v757
      %v759 = vmul.f32 %v756, %v757
      %760 = vst.msk [vmem:[#allocation2 + $0x50] sm:$0xff] %vm567, %v758
      %761 = vst.msk [vmem:[#allocation2 + $0x58] sm:$0xff] %vm567, %v759
      %v762 = vlaneseq
      %v763 = vshrl.u32 %v762, 7
      %v764 = vadd.s32 %v763, 8
      %v765 = vadd.s32 %v763, 16
      %v766 = vadd.s32 %v763, 24
      %v767 = vadd.s32 %v763, 32
      %v768 = vadd.s32 %v763, 40
      %v769 = vadd.s32 %v763, 48
      %v770 = vadd.s32 %v763, 56
      %vm771 = vcmp.lt.s32.totalorder %v763, 0
      %v772 = vsub.s32 0, %v763
      %v773 = vsel %vm771, %v772, %v763
      %v774 = vshrl.u32 %v773, 4
      %v775 = vand.u32 %v773, 15
      %v776 = vsub.s32 0, %v775
      %v777 = vsel %vm771, %v776, %v775
      %vm778 = vcmp.lt.s32.totalorder %v764, 0
      %v779 = vsub.s32 0, %v764
      %v780 = vsel %vm778, %v779, %v764
      %v781 = vshrl.u32 %v780, 4
      %v782 = vand.u32 %v780, 15
      %v783 = vsub.s32 0, %v782
      %v784 = vsel %vm778, %v783, %v782
      %vm785 = vcmp.lt.s32.totalorder %v765, 0
      %v786 = vsub.s32 0, %v765
      %v787 = vsel %vm785, %v786, %v765
      %v788 = vshrl.u32 %v787, 4
      %v789 = vand.u32 %v787, 15
      %v790 = vsub.s32 0, %v789
      %v791 = vsel %vm785, %v790, %v789
      %vm792 = vcmp.lt.s32.totalorder %v766, 0
      %v793 = vsub.s32 0, %v766
      %v794 = vsel %vm792, %v793, %v766
      %v795 = vshrl.u32 %v794, 4
      %v796 = vand.u32 %v794, 15
      %v797 = vsub.s32 0, %v796
      %v798 = vsel %vm792, %v797, %v796
      %vm799 = vcmp.lt.s32.totalorder %v767, 0
      %v800 = vsub.s32 0, %v767
      %v801 = vsel %vm799, %v800, %v767
      %v802 = vshrl.u32 %v801, 4
      %v803 = vand.u32 %v801, 15
      %v804 = vsub.s32 0, %v803
      %v805 = vsel %vm799, %v804, %v803
      %vm806 = vcmp.lt.s32.totalorder %v768, 0
      %v807 = vsub.s32 0, %v768
      %v808 = vsel %vm806, %v807, %v768
      %v809 = vshrl.u32 %v808, 4
      %v810 = vand.u32 %v808, 15
      %v811 = vsub.s32 0, %v810
      %v812 = vsel %vm806, %v811, %v810
      %vm813 = vcmp.lt.s32.totalorder %v769, 0
      %v814 = vsub.s32 0, %v769
      %v815 = vsel %vm813, %v814, %v769
      %v816 = vshrl.u32 %v815, 4
      %v817 = vand.u32 %v815, 15
      %v818 = vsub.s32 0, %v817
      %v819 = vsel %vm813, %v818, %v817
      %vm820 = vcmp.lt.s32.totalorder %v770, 0
      %v821 = vsub.s32 0, %v770
      %v822 = vsel %vm820, %v821, %v770
      %v823 = vshrl.u32 %v822, 4
      %v824 = vand.u32 %v822, 15
      %v825 = vsub.s32 0, %v824
      %v826 = vsel %vm820, %v825, %v824
      %vm827 = vcmp.ne.s32.totalorder %v777, 0
      %vm828 = vcmp.ne.s32.totalorder %v784, 0
      %vm829 = vcmp.ne.s32.totalorder %v791, 0
      %vm830 = vcmp.ne.s32.totalorder %v798, 0
      %vm831 = vcmp.ne.s32.totalorder %v805, 0
      %vm832 = vcmp.ne.s32.totalorder %v812, 0
      %vm833 = vcmp.ne.s32.totalorder %v819, 0
      %vm834 = vcmp.ne.s32.totalorder %v826, 0
      %vm835 = vcmp.lt.s32.totalorder %v777, 0
      %vm836 = vcmp.lt.s32.totalorder %v784, 0
      %vm837 = vcmp.lt.s32.totalorder %v791, 0
      %vm838 = vcmp.lt.s32.totalorder %v798, 0
      %vm839 = vcmp.lt.s32.totalorder %v805, 0
      %vm840 = vcmp.lt.s32.totalorder %v812, 0
      %vm841 = vcmp.lt.s32.totalorder %v819, 0
      %vm842 = vcmp.lt.s32.totalorder %v826, 0
      %vm843 = vmand %vm835, %vm827
      %vm844 = vmand %vm836, %vm828
      %vm845 = vmand %vm837, %vm829
      %vm846 = vmand %vm838, %vm830
      %vm847 = vmand %vm839, %vm831
      %vm848 = vmand %vm840, %vm832
      %vm849 = vmand %vm841, %vm833
      %vm850 = vmand %vm842, %vm834
      %v851 = vadd.s32 %v777, 16
      %v852 = vadd.s32 %v784, 16
      %v853 = vadd.s32 %v791, 16
      %v854 = vadd.s32 %v798, 16
      %v855 = vadd.s32 %v805, 16
      %v856 = vadd.s32 %v812, 16
      %v857 = vadd.s32 %v819, 16
      %v858 = vadd.s32 %v826, 16
      %v859 = vsel %vm843, %v851, %v777
      %v860 = vsel %vm844, %v852, %v784
      %v861 = vsel %vm845, %v853, %v791
      %v862 = vsel %vm846, %v854, %v798
      %v863 = vsel %vm847, %v855, %v805
      %v864 = vsel %vm848, %v856, %v812
      %v865 = vsel %vm849, %v857, %v819
      %v866 = vsel %vm850, %v858, %v826
      %v867 = vld [vmem:[#allocation2] sm:$0xff]
      %v868 = vld [vmem:[#allocation2 + $0x8] sm:$0xff]
      %v869 = vld [vmem:[#allocation2 + $0x10] sm:$0xff]
      %v870 = vld [vmem:[#allocation2 + $0x18] sm:$0xff]
      %v871 = vld [vmem:[#allocation2 + $0x20] sm:$0xff]
      %v872 = vld [vmem:[#allocation2 + $0x28] sm:$0xff]
      %v873 = vld [vmem:[#allocation2 + $0x30] sm:$0xff]
      %v874 = vld [vmem:[#allocation2 + $0x38] sm:$0xff]
      %v875 = vld [vmem:[%s4] sm:$0xf]
      %v876 = vld [vmem:[#allocation2 + $0x40] sm:$0xff]
      %v877 = vld [vmem:[#allocation2 + $0x48] sm:$0xff]
      %s878 = scalar_lea.vmem %s4, 12
      %v879 = vld [vmem:[%s878] sm:$0xf]
      %v881 = vsel %vm567, %v869, 0
      %v884 = vsel %vm567, %v870, 0
      %v887 = vsel %vm567, %v871, 0
      %v890 = vsel %vm567, %v872, 0
      %v893 = vsel %vm567, %v873, 0
      %v896 = vsel %vm567, %v874, 0
      %v899 = vsel %vm567, %v876, 0
      %v902 = vsel %vm567, %v877, 0
      %vm904 = vcmask 1043456
      %v906 = vsel %vm904, %v879, 0
      %908 = vmatprep.subr.mxu0 0.0
      %909 = vmatpush1.msra.mxu0 %v906
      %910 = vmatprep.subr.mxu0 0.0
      %911 = vmatpush1.msra.mxu0 0.0
      %912 = vmatprep.subr.mxu0 0.0
      %913 = vmatpush1.msra.mxu0 0.0
      %914 = vmatprep.subr.mxu0 0.0
      %915 = vmatpush1.msra.mxu0 0.0
      %916 = vmatprep.subr.mxu0 0.0
      %917 = vmatpush1.msra.mxu0 0.0
      %918 = vmatprep.subr.mxu0 0.0
      %919 = vmatpush1.msra.mxu0 0.0
      %920 = vmatprep.subr.mxu0 0.0
      %921 = vmatpush1.msra.mxu0 0.0
      %922 = vmatprep.subr.mxu0 0.0
      %923 = vmatpush1.msra.mxu0 0.0
      %924 = vmatprep.subr.mxu0 0.0
      %925 = vmatpush1.msra.mxu0 0.0
      %926 = vmatprep.subr.mxu0 0.0
      %927 = vmatpush1.msra.mxu0 0.0
      %928 = vmatprep.subr.mxu0 0.0
      %929 = vmatpush1.msra.mxu0 0.0
      %930 = vmatprep.subr.mxu0 0.0
      %931 = vmatpush1.msra.mxu0 0.0
      %932 = vmatprep.subr.mxu0 0.0
      %933 = vmatpush1.msra.mxu0 0.0
      %934 = vmatprep.subr.mxu0 0.0
      %935 = vmatpush1.msra.mxu0 0.0
      %936 = vmatprep.subr.mxu0 0.0
      %937 = vmatpush1.msra.mxu0 0.0
      %938 = vmatprep.subr.mxu0 0.0
      %939 = vmatpush1.msra.mxu0 0.0
      %940 = vmatprep.subr.mxu0 0.0
      %941 = vmatpush1.msra.mxu0 0.0
      %942 = vmatprep.subr.mxu0 0.0
      %943 = vmatpush1.msra.mxu0 0.0
      %944 = vmatprep.subr.mxu0 0.0
      %945 = vmatpush1.msra.mxu0 0.0
      %946 = vmatprep.subr.mxu0 0.0
      %947 = vmatpush1.msra.mxu0 0.0
      %948 = vmatprep.subr.mxu0 0.0
      %949 = vmatpush1.msra.mxu0 0.0
      %950 = vmatprep.subr.mxu0 0.0
      %951 = vmatpush1.msra.mxu0 0.0
      %952 = vmatprep.subr.mxu0 0.0
      %953 = vmatpush1.msra.mxu0 0.0
      %954 = vmatprep.subr.mxu0 0.0
      %955 = vmatpush1.msra.mxu0 0.0
      %956 = vmatprep.subr.mxu0 0.0
      %957 = vmatpush1.msra.mxu0 0.0
      %958 = vmatprep.subr.mxu0 0.0
      %959 = vmatpush1.msra.mxu0 0.0
      %960 = vmatprep.subr.mxu0 0.0
      %961 = vmatpush1.msra.mxu0 0.0
      %962 = vmatprep.subr.mxu0 0.0
      %963 = vmatpush1.msra.mxu0 0.0
      %964 = vmatprep.subr.mxu0 0.0
      %965 = vmatpush1.msra.mxu0 0.0
      %966 = vmatprep.subr.mxu0 0.0
      %967 = vmatpush1.msra.mxu0 0.0
      %968 = vmatprep.subr.mxu0 0.0
      %969 = vmatpush1.msra.mxu0 0.0
      %970 = vmatprep.subr.mxu0 0.0
      %971 = vmatpush1.msra.mxu0 0.0
      %972 = vmatprep.mubr.f32.mxu0 0.0
      %973 = vmatmul.mubr.f32.gmra.mrb[0].mxu0 %v881
      %v974 = vpop.f32.mrb[0].mxu0
      %v975 = vadd.f32 0.0, %v974
      %v976 = vpop.f32.mrb[0].mxu0
      %977 = vmatprep.mubr.f32.mxu0 0.0
      %978 = vmatmul.mubr.f32.gmra.mrb[0].mxu0 %v884
      %v979 = vpop.f32.mrb[0].mxu0
      %v980 = vadd.f32 0.0, %v979
      %v981 = vpop.f32.mrb[0].mxu0
      %982 = vmatprep.mubr.f32.mxu0 0.0
      %983 = vmatmul.mubr.f32.gmra.mrb[0].mxu0 %v887
      %v984 = vpop.f32.mrb[0].mxu0
      %v985 = vadd.f32 0.0, %v984
      %v986 = vpop.f32.mrb[0].mxu0
      %987 = vmatprep.mubr.f32.mxu0 0.0
      %988 = vmatmul.mubr.f32.gmra.mrb[0].mxu0 %v890
      %v989 = vpop.f32.mrb[0].mxu0
      %v990 = vadd.f32 0.0, %v989
      %v991 = vpop.f32.mrb[0].mxu0
      %992 = vmatprep.mubr.f32.mxu0 0.0
      %993 = vmatmul.mubr.f32.gmra.mrb[0].mxu0 %v893
      %v994 = vpop.f32.mrb[0].mxu0
      %v995 = vadd.f32 0.0, %v994
      %v996 = vpop.f32.mrb[0].mxu0
      %997 = vmatprep.mubr.f32.mxu0 0.0
      %998 = vmatmul.mubr.f32.gmra.mrb[0].mxu0 %v896
      %v999 = vpop.f32.mrb[0].mxu0
      %v1000 = vadd.f32 0.0, %v999
      %v1001 = vpop.f32.mrb[0].mxu0
      %1002 = vmatprep.mubr.f32.mxu0 0.0
      %1003 = vmatmul.mubr.f32.gmra.mrb[0].mxu0 %v899
      %v1004 = vpop.f32.mrb[0].mxu0
      %v1005 = vadd.f32 0.0, %v1004
      %v1006 = vpop.f32.mrb[0].mxu0
      %1007 = vmatprep.mubr.f32.mxu0 0.0
      %1008 = vmatmul.mubr.f32.gmra.mrb[0].mxu0 %v902
      %v1009 = vpop.f32.mrb[0].mxu0
      %v1010 = vadd.f32 0.0, %v1009
      %v1011 = vpop.f32.mrb[0].mxu0
      %1012 = vdwg.mxu0
      %v1014 = vsel %vm567, %v867, 0
      %v1017 = vsel %vm567, %v868, 0
      %v1020 = vsel %vm904, %v875, 0
      %1022 = vmatprep.subr.mxu0 0.0
      %1023 = vmatpush1.msra.mxu0 %v1020
      %1024 = vmatprep.subr.mxu0 0.0
      %1025 = vmatpush1.msra.mxu0 0.0
      %1026 = vmatprep.subr.mxu0 0.0
      %1027 = vmatpush1.msra.mxu0 0.0
      %1028 = vmatprep.subr.mxu0 0.0
      %1029 = vmatpush1.msra.mxu0 0.0
      %1030 = vmatprep.subr.mxu0 0.0
      %1031 = vmatpush1.msra.mxu0 0.0
      %1032 = vmatprep.subr.mxu0 0.0
      %1033 = vmatpush1.msra.mxu0 0.0
      %1034 = vmatprep.subr.mxu0 0.0
      %1035 = vmatpush1.msra.mxu0 0.0
      %1036 = vmatprep.subr.mxu0 0.0
      %1037 = vmatpush1.msra.mxu0 0.0
      %1038 = vmatprep.subr.mxu0 0.0
      %1039 = vmatpush1.msra.mxu0 0.0
      %1040 = vmatprep.subr.mxu0 0.0
      %1041 = vmatpush1.msra.mxu0 0.0
      %1042 = vmatprep.subr.mxu0 0.0
      %1043 = vmatpush1.msra.mxu0 0.0
      %1044 = vmatprep.subr.mxu0 0.0
      %1045 = vmatpush1.msra.mxu0 0.0
      %1046 = vmatprep.subr.mxu0 0.0
      %1047 = vmatpush1.msra.mxu0 0.0
      %1048 = vmatprep.subr.mxu0 0.0
      %1049 = vmatpush1.msra.mxu0 0.0
      %1050 = vmatprep.subr.mxu0 0.0
      %1051 = vmatpush1.msra.mxu0 0.0
      %1052 = vmatprep.subr.mxu0 0.0
      %1053 = vmatpush1.msra.mxu0 0.0
      %1054 = vmatprep.subr.mxu0 0.0
      %1055 = vmatpush1.msra.mxu0 0.0
      %1056 = vmatprep.subr.mxu0 0.0
      %1057 = vmatpush1.msra.mxu0 0.0
      %1058 = vmatprep.subr.mxu0 0.0
      %1059 = vmatpush1.msra.mxu0 0.0
      %1060 = vmatprep.subr.mxu0 0.0
      %1061 = vmatpush1.msra.mxu0 0.0
      %1062 = vmatprep.subr.mxu0 0.0
      %1063 = vmatpush1.msra.mxu0 0.0
      %1064 = vmatprep.subr.mxu0 0.0
      %1065 = vmatpush1.msra.mxu0 0.0
      %1066 = vmatprep.subr.mxu0 0.0
      %1067 = vmatpush1.msra.mxu0 0.0
      %1068 = vmatprep.subr.mxu0 0.0
      %1069 = vmatpush1.msra.mxu0 0.0
      %1070 = vmatprep.subr.mxu0 0.0
      %1071 = vmatpush1.msra.mxu0 0.0
      %1072 = vmatprep.subr.mxu0 0.0
      %1073 = vmatpush1.msra.mxu0 0.0
      %1074 = vmatprep.subr.mxu0 0.0
      %1075 = vmatpush1.msra.mxu0 0.0
      %1076 = vmatprep.subr.mxu0 0.0
      %1077 = vmatpush1.msra.mxu0 0.0
      %1078 = vmatprep.subr.mxu0 0.0
      %1079 = vmatpush1.msra.mxu0 0.0
      %1080 = vmatprep.subr.mxu0 0.0
      %1081 = vmatpush1.msra.mxu0 0.0
      %1082 = vmatprep.subr.mxu0 0.0
      %1083 = vmatpush1.msra.mxu0 0.0
      %1084 = vmatprep.subr.mxu0 0.0
      %1085 = vmatpush1.msra.mxu0 0.0
      %1086 = vmatprep.mubr.f32.mxu0 0.0
      %1087 = vmatmul.mubr.f32.gmra.mrb[0].mxu0 %v1014
      %v1088 = vpop.f32.mrb[0].mxu0
      %v1089 = vadd.f32 %v975, %v1088
      %v1090 = vpop.f32.mrb[0].mxu0
      %1091 = vmatprep.mubr.f32.mxu0 0.0
      %1092 = vmatmul.mubr.f32.gmra.mrb[0].mxu0 %v1017
      %v1093 = vpop.f32.mrb[0].mxu0
      %v1094 = vadd.f32 %v980, %v1093
      %v1095 = vpop.f32.mrb[0].mxu0
      %1096 = vmatprep.mubr.f32.mxu0 0.0
      %1097 = vmatmul.mubr.f32.gmra.mrb[0].mxu0 %v881
      %v1098 = vpop.f32.mrb[0].mxu0
      %v1099 = vadd.f32 %v985, %v1098
      %v1100 = vpop.f32.mrb[0].mxu0
      %1101 = vmatprep.mubr.f32.mxu0 0.0
      %1102 = vmatmul.mubr.f32.gmra.mrb[0].mxu0 %v884
      %v1103 = vpop.f32.mrb[0].mxu0
      %v1104 = vadd.f32 %v990, %v1103
      %v1105 = vpop.f32.mrb[0].mxu0
      %1106 = vmatprep.mubr.f32.mxu0 0.0
      %1107 = vmatmul.mubr.f32.gmra.mrb[0].mxu0 %v887
      %v1108 = vpop.f32.mrb[0].mxu0
      %v1109 = vadd.f32 %v995, %v1108
      %v1110 = vpop.f32.mrb[0].mxu0
      %1111 = vmatprep.mubr.f32.mxu0 0.0
      %1112 = vmatmul.mubr.f32.gmra.mrb[0].mxu0 %v890
      %v1113 = vpop.f32.mrb[0].mxu0
      %v1114 = vadd.f32 %v1000, %v1113
      %v1115 = vpop.f32.mrb[0].mxu0
      %1116 = vmatprep.mubr.f32.mxu0 0.0
      %1117 = vmatmul.mubr.f32.gmra.mrb[0].mxu0 %v893
      %v1118 = vpop.f32.mrb[0].mxu0
      %v1119 = vadd.f32 %v1005, %v1118
      %v1120 = vpop.f32.mrb[0].mxu0
      %1121 = vmatprep.mubr.f32.mxu0 0.0
      %1122 = vmatmul.mubr.f32.gmra.mrb[0].mxu0 %v896
      %v1123 = vpop.f32.mrb[0].mxu0
      %v1124 = vadd.f32 %v1010, %v1123
      %v1125 = vpop.f32.mrb[0].mxu0
      %1126 = vdwg.mxu0
      %v1127 = vld [vmem:[#allocation2 + $0x20] sm:$0xff]
      %v1128 = vld [vmem:[#allocation2 + $0x28] sm:$0xff]
      %v1129 = vld [vmem:[#allocation2 + $0x30] sm:$0xff]
      %v1130 = vld [vmem:[#allocation2 + $0x38] sm:$0xff]
      %v1131 = vld [vmem:[#allocation2 + $0x40] sm:$0xff]
      %v1132 = vld [vmem:[#allocation2 + $0x48] sm:$0xff]
      %v1133 = vld [vmem:[#allocation2 + $0x50] sm:$0xff]
      %v1134 = vld [vmem:[#allocation2 + $0x58] sm:$0xff]
      %s1135 = scalar_lea.vmem %s4, 24
      %v1136 = vld [vmem:[%s1135] sm:$0xf]
      %v1138 = vsel %vm567, %v1127, 0
      %v1141 = vsel %vm567, %v1128, 0
      %v1144 = vsel %vm567, %v1129, 0
      %v1147 = vsel %vm567, %v1130, 0
      %v1150 = vsel %vm567, %v1131, 0
      %v1153 = vsel %vm567, %v1132, 0
      %v1156 = vsel %vm567, %v1133, 0
      %v1159 = vsel %vm567, %v1134, 0
      %v1162 = vsel %vm904, %v1136, 0
      %1164 = vmatprep.subr.mxu0 0.0
      %1165 = vmatpush1.msra.mxu0 %v1162
      %1166 = vmatprep.subr.mxu0 0.0
      %1167 = vmatpush1.msra.mxu0 0.0
      %1168 = vmatprep.subr.mxu0 0.0
      %1169 = vmatpush1.msra.mxu0 0.0
      %1170 = vmatprep.subr.mxu0 0.0
      %1171 = vmatpush1.msra.mxu0 0.0
      %1172 = vmatprep.subr.mxu0 0.0
      %1173 = vmatpush1.msra.mxu0 0.0
      %1174 = vmatprep.subr.mxu0 0.0
      %1175 = vmatpush1.msra.mxu0 0.0
      %1176 = vmatprep.subr.mxu0 0.0
      %1177 = vmatpush1.msra.mxu0 0.0
      %1178 = vmatprep.subr.mxu0 0.0
      %1179 = vmatpush1.msra.mxu0 0.0
      %1180 = vmatprep.subr.mxu0 0.0
      %1181 = vmatpush1.msra.mxu0 0.0
      %1182 = vmatprep.subr.mxu0 0.0
      %1183 = vmatpush1.msra.mxu0 0.0
      %1184 = vmatprep.subr.mxu0 0.0
      %1185 = vmatpush1.msra.mxu0 0.0
      %1186 = vmatprep.subr.mxu0 0.0
      %1187 = vmatpush1.msra.mxu0 0.0
      %1188 = vmatprep.subr.mxu0 0.0
      %1189 = vmatpush1.msra.mxu0 0.0
      %1190 = vmatprep.subr.mxu0 0.0
      %1191 = vmatpush1.msra.mxu0 0.0
      %1192 = vmatprep.subr.mxu0 0.0
      %1193 = vmatpush1.msra.mxu0 0.0
      %1194 = vmatprep.subr.mxu0 0.0
      %1195 = vmatpush1.msra.mxu0 0.0
      %1196 = vmatprep.subr.mxu0 0.0
      %1197 = vmatpush1.msra.mxu0 0.0
      %1198 = vmatprep.subr.mxu0 0.0
      %1199 = vmatpush1.msra.mxu0 0.0
      %1200 = vmatprep.subr.mxu0 0.0
      %1201 = vmatpush1.msra.mxu0 0.0
      %1202 = vmatprep.subr.mxu0 0.0
      %1203 = vmatpush1.msra.mxu0 0.0
      %1204 = vmatprep.subr.mxu0 0.0
      %1205 = vmatpush1.msra.mxu0 0.0
      %1206 = vmatprep.subr.mxu0 0.0
      %1207 = vmatpush1.msra.mxu0 0.0
      %1208 = vmatprep.subr.mxu0 0.0
      %1209 = vmatpush1.msra.mxu0 0.0
      %1210 = vmatprep.subr.mxu0 0.0
      %1211 = vmatpush1.msra.mxu0 0.0
      %1212 = vmatprep.subr.mxu0 0.0
      %1213 = vmatpush1.msra.mxu0 0.0
      %1214 = vmatprep.subr.mxu0 0.0
      %1215 = vmatpush1.msra.mxu0 0.0
      %1216 = vmatprep.subr.mxu0 0.0
      %1217 = vmatpush1.msra.mxu0 0.0
      %1218 = vmatprep.subr.mxu0 0.0
      %1219 = vmatpush1.msra.mxu0 0.0
      %1220 = vmatprep.subr.mxu0 0.0
      %1221 = vmatpush1.msra.mxu0 0.0
      %1222 = vmatprep.subr.mxu0 0.0
      %1223 = vmatpush1.msra.mxu0 0.0
      %1224 = vmatprep.subr.mxu0 0.0
      %1225 = vmatpush1.msra.mxu0 0.0
      %1226 = vmatprep.subr.mxu0 0.0
      %1227 = vmatpush1.msra.mxu0 0.0
      %1228 = vmatprep.mubr.f32.mxu0 0.0
      %1229 = vmatmul.mubr.f32.gmra.mrb[0].mxu0 %v1138
      %v1230 = vpop.f32.mrb[0].mxu0
      %v1231 = vadd.f32 0.0, %v1230
      %v1232 = vpop.f32.mrb[0].mxu0
      %1233 = vmatprep.mubr.f32.mxu0 0.0
      %1234 = vmatmul.mubr.f32.gmra.mrb[0].mxu0 %v1141
      %v1235 = vpop.f32.mrb[0].mxu0
      %v1236 = vadd.f32 0.0, %v1235
      %v1237 = vpop.f32.mrb[0].mxu0
      %1238 = vmatprep.mubr.f32.mxu0 0.0
      %1239 = vmatmul.mubr.f32.gmra.mrb[0].mxu0 %v1144
      %v1240 = vpop.f32.mrb[0].mxu0
      %v1241 = vadd.f32 0.0, %v1240
      %v1242 = vpop.f32.mrb[0].mxu0
      %1243 = vmatprep.mubr.f32.mxu0 0.0
      %1244 = vmatmul.mubr.f32.gmra.mrb[0].mxu0 %v1147
      %v1245 = vpop.f32.mrb[0].mxu0
      %v1246 = vadd.f32 0.0, %v1245
      %v1247 = vpop.f32.mrb[0].mxu0
      %1248 = vmatprep.mubr.f32.mxu0 0.0
      %1249 = vmatmul.mubr.f32.gmra.mrb[0].mxu0 %v1150
      %v1250 = vpop.f32.mrb[0].mxu0
      %v1251 = vadd.f32 0.0, %v1250
      %v1252 = vpop.f32.mrb[0].mxu0
      %1253 = vmatprep.mubr.f32.mxu0 0.0
      %1254 = vmatmul.mubr.f32.gmra.mrb[0].mxu0 %v1153
      %v1255 = vpop.f32.mrb[0].mxu0
      %v1256 = vadd.f32 0.0, %v1255
      %v1257 = vpop.f32.mrb[0].mxu0
      %1258 = vmatprep.mubr.f32.mxu0 0.0
      %1259 = vmatmul.mubr.f32.gmra.mrb[0].mxu0 %v1156
      %v1260 = vpop.f32.mrb[0].mxu0
      %v1261 = vadd.f32 0.0, %v1260
      %v1262 = vpop.f32.mrb[0].mxu0
      %1263 = vmatprep.mubr.f32.mxu0 0.0
      %1264 = vmatmul.mubr.f32.gmra.mrb[0].mxu0 %v1159
      %v1265 = vpop.f32.mrb[0].mxu0
      %v1266 = vadd.f32 0.0, %v1265
      %v1267 = vpop.f32.mrb[0].mxu0
      %1268 = vdwg.mxu0
      %v1269 = vadd.f32 %v1089, %v1231
      %v1270 = vadd.f32 %v1094, %v1236
      %v1271 = vadd.f32 %v1099, %v1241
      %v1272 = vadd.f32 %v1104, %v1246
      %v1273 = vadd.f32 %v1109, %v1251
      %v1274 = vadd.f32 %v1114, %v1256
      %v1275 = vadd.f32 %v1119, %v1261
      %v1276 = vadd.f32 %v1124, %v1266
      %v1277 = vrot.slane %v1269, 7
      %v1278 = vrot.slane %v1270, 7
      %v1279 = vrot.slane %v1271, 7
      %v1280 = vrot.slane %v1272, 7
      %v1281 = vrot.slane %v1273, 7
      %v1282 = vrot.slane %v1274, 7
      %v1283 = vrot.slane %v1275, 7
      %v1284 = vrot.slane %v1276, 7
      %vm1285 = vcmp.lt.s32.totalorder %v763, 1
      %v1286 = vsel %vm1285, %v1283, %v1284
      %v1287 = vsel %vm1285, %v1282, %v1283
      %v1288 = vsel %vm1285, %v1281, %v1282
      %v1289 = vsel %vm1285, %v1280, %v1281
      %v1290 = vsel %vm1285, %v1279, %v1280
      %v1291 = vsel %vm1285, %v1278, %v1279
      %v1292 = vsel %vm1285, %v1277, %v1278
      %v1293 = vsel %vm1285, %v1284, %v1277
      %vm1294 = vcmp.ge.s32.totalorder %v859, 1
      %vm1295 = vcmp.ge.s32.totalorder %v860, 1
      %vm1296 = vcmp.ge.s32.totalorder %v861, 1
      %vm1297 = vcmp.ge.s32.totalorder %v862, 1
      %vm1298 = vcmp.ge.s32.totalorder %v863, 1
      %vm1299 = vcmp.ge.s32.totalorder %v864, 1
      %vm1300 = vcmp.ge.s32.totalorder %v865, 1
      %vm1301 = vcmp.ge.s32.totalorder %v866, 1
      %v1302 = vsel %vm1294, 1, 0
      %v1303 = vsel %vm1295, 1, 0
      %v1304 = vsel %vm1296, 1, 0
      %v1305 = vsel %vm1297, 1, 0
      %v1306 = vsel %vm1298, 1, 0
      %v1307 = vsel %vm1299, 1, 0
      %v1308 = vsel %vm1300, 1, 0
      %v1309 = vsel %vm1301, 1, 0
      %vm1310 = vcmp.eq.s32.totalorder %v1302, 1
      %vm1311 = vcmp.eq.s32.totalorder %v1303, 1
      %vm1312 = vcmp.eq.s32.totalorder %v1304, 1
      %vm1313 = vcmp.eq.s32.totalorder %v1305, 1
      %vm1314 = vcmp.eq.s32.totalorder %v1306, 1
      %vm1315 = vcmp.eq.s32.totalorder %v1307, 1
      %vm1316 = vcmp.eq.s32.totalorder %v1308, 1
      %vm1317 = vcmp.eq.s32.totalorder %v1309, 1
      %v1318 = vsel %vm1310, %v1293, 0.0
      %v1319 = vsel %vm1311, %v1292, 0.0
      %v1320 = vsel %vm1312, %v1291, 0.0
      %v1321 = vsel %vm1313, %v1290, 0.0
      %v1322 = vsel %vm1314, %v1289, 0.0
      %v1323 = vsel %vm1315, %v1288, 0.0
      %v1324 = vsel %vm1316, %v1287, 0.0
      %v1325 = vsel %vm1317, %v1286, 0.0
      %v1326 = vadd.f32 %v1318, 0.0
      %v1327 = vadd.f32 %v1319, 0.0
      %v1328 = vadd.f32 %v1320, 0.0
      %v1329 = vadd.f32 %v1321, 0.0
      %v1330 = vadd.f32 %v1322, 0.0
      %v1331 = vadd.f32 %v1323, 0.0
      %v1332 = vadd.f32 %v1324, 0.0
      %v1333 = vadd.f32 %v1325, 0.0
      %s1334 = scalar_lea.vmem %s4, 4
      %v1335 = vld [vmem:[%s1334] sm:$0xf]
      %s1336 = scalar_lea.vmem %s4, 16
      %v1337 = vld [vmem:[%s1336] sm:$0xf]
      %v1339 = vsel %vm904, %v1337, 0
      %1341 = vmatprep.subr.mxu0 0.0
      %1342 = vmatpush1.msra.mxu0 %v1339
      %1343 = vmatprep.subr.mxu0 0.0
      %1344 = vmatpush1.msra.mxu0 0.0
      %1345 = vmatprep.subr.mxu0 0.0
      %1346 = vmatpush1.msra.mxu0 0.0
      %1347 = vmatprep.subr.mxu0 0.0
      %1348 = vmatpush1.msra.mxu0 0.0
      %1349 = vmatprep.subr.mxu0 0.0
      %1350 = vmatpush1.msra.mxu0 0.0
      %1351 = vmatprep.subr.mxu0 0.0
      %1352 = vmatpush1.msra.mxu0 0.0
      %1353 = vmatprep.subr.mxu0 0.0
      %1354 = vmatpush1.msra.mxu0 0.0
      %1355 = vmatprep.subr.mxu0 0.0
      %1356 = vmatpush1.msra.mxu0 0.0
      %1357 = vmatprep.subr.mxu0 0.0
      %1358 = vmatpush1.msra.mxu0 0.0
      %1359 = vmatprep.subr.mxu0 0.0
      %1360 = vmatpush1.msra.mxu0 0.0
      %1361 = vmatprep.subr.mxu0 0.0
      %1362 = vmatpush1.msra.mxu0 0.0
      %1363 = vmatprep.subr.mxu0 0.0
      %1364 = vmatpush1.msra.mxu0 0.0
      %1365 = vmatprep.subr.mxu0 0.0
      %1366 = vmatpush1.msra.mxu0 0.0
      %1367 = vmatprep.subr.mxu0 0.0
      %1368 = vmatpush1.msra.mxu0 0.0
      %1369 = vmatprep.subr.mxu0 0.0
      %1370 = vmatpush1.msra.mxu0 0.0
      %1371 = vmatprep.subr.mxu0 0.0
      %1372 = vmatpush1.msra.mxu0 0.0
      %1373 = vmatprep.subr.mxu0 0.0
      %1374 = vmatpush1.msra.mxu0 0.0
      %1375 = vmatprep.subr.mxu0 0.0
      %1376 = vmatpush1.msra.mxu0 0.0
      %1377 = vmatprep.subr.mxu0 0.0
      %1378 = vmatpush1.msra.mxu0 0.0
      %1379 = vmatprep.subr.mxu0 0.0
      %1380 = vmatpush1.msra.mxu0 0.0
      %1381 = vmatprep.subr.mxu0 0.0
      %1382 = vmatpush1.msra.mxu0 0.0
      %1383 = vmatprep.subr.mxu0 0.0
      %1384 = vmatpush1.msra.mxu0 0.0
      %1385 = vmatprep.subr.mxu0 0.0
      %1386 = vmatpush1.msra.mxu0 0.0
      %1387 = vmatprep.subr.mxu0 0.0
      %1388 = vmatpush1.msra.mxu0 0.0
      %1389 = vmatprep.subr.mxu0 0.0
      %1390 = vmatpush1.msra.mxu0 0.0
      %1391 = vmatprep.subr.mxu0 0.0
      %1392 = vmatpush1.msra.mxu0 0.0
      %1393 = vmatprep.subr.mxu0 0.0
      %1394 = vmatpush1.msra.mxu0 0.0
      %1395 = vmatprep.subr.mxu0 0.0
      %1396 = vmatpush1.msra.mxu0 0.0
      %1397 = vmatprep.subr.mxu0 0.0
      %1398 = vmatpush1.msra.mxu0 0.0
      %1399 = vmatprep.subr.mxu0 0.0
      %1400 = vmatpush1.msra.mxu0 0.0
      %1401 = vmatprep.subr.mxu0 0.0
      %1402 = vmatpush1.msra.mxu0 0.0
      %1403 = vmatprep.subr.mxu0 0.0
      %1404 = vmatpush1.msra.mxu0 0.0
      %1405 = vmatprep.mubr.f32.mxu0 0.0
      %1406 = vmatmul.mubr.f32.gmra.mrb[0].mxu0 %v881
      %v1407 = vpop.f32.mrb[0].mxu0
      %v1408 = vadd.f32 0.0, %v1407
      %v1409 = vpop.f32.mrb[0].mxu0
      %1410 = vmatprep.mubr.f32.mxu0 0.0
      %1411 = vmatmul.mubr.f32.gmra.mrb[0].mxu0 %v884
      %v1412 = vpop.f32.mrb[0].mxu0
      %v1413 = vadd.f32 0.0, %v1412
      %v1414 = vpop.f32.mrb[0].mxu0
      %1415 = vmatprep.mubr.f32.mxu0 0.0
      %1416 = vmatmul.mubr.f32.gmra.mrb[0].mxu0 %v887
      %v1417 = vpop.f32.mrb[0].mxu0
      %v1418 = vadd.f32 0.0, %v1417
      %v1419 = vpop.f32.mrb[0].mxu0
      %1420 = vmatprep.mubr.f32.mxu0 0.0
      %1421 = vmatmul.mubr.f32.gmra.mrb[0].mxu0 %v890
      %v1422 = vpop.f32.mrb[0].mxu0
      %v1423 = vadd.f32 0.0, %v1422
      %v1424 = vpop.f32.mrb[0].mxu0
      %1425 = vmatprep.mubr.f32.mxu0 0.0
      %1426 = vmatmul.mubr.f32.gmra.mrb[0].mxu0 %v893
      %v1427 = vpop.f32.mrb[0].mxu0
      %v1428 = vadd.f32 0.0, %v1427
      %v1429 = vpop.f32.mrb[0].mxu0
      %1430 = vmatprep.mubr.f32.mxu0 0.0
      %1431 = vmatmul.mubr.f32.gmra.mrb[0].mxu0 %v896
      %v1432 = vpop.f32.mrb[0].mxu0
      %v1433 = vadd.f32 0.0, %v1432
      %v1434 = vpop.f32.mrb[0].mxu0
      %1435 = vmatprep.mubr.f32.mxu0 0.0
      %1436 = vmatmul.mubr.f32.gmra.mrb[0].mxu0 %v899
      %v1437 = vpop.f32.mrb[0].mxu0
      %v1438 = vadd.f32 0.0, %v1437
      %v1439 = vpop.f32.mrb[0].mxu0
      %1440 = vmatprep.mubr.f32.mxu0 0.0
      %1441 = vmatmul.mubr.f32.gmra.mrb[0].mxu0 %v902
      %v1442 = vpop.f32.mrb[0].mxu0
      %v1443 = vadd.f32 0.0, %v1442
      %v1444 = vpop.f32.mrb[0].mxu0
      %1445 = vdwg.mxu0
      %v1447 = vsel %vm904, %v1335, 0
      %1449 = vmatprep.subr.mxu0 0.0
      %1450 = vmatpush1.msra.mxu0 %v1447
      %1451 = vmatprep.subr.mxu0 0.0
      %1452 = vmatpush1.msra.mxu0 0.0
      %1453 = vmatprep.subr.mxu0 0.0
      %1454 = vmatpush1.msra.mxu0 0.0
      %1455 = vmatprep.subr.mxu0 0.0
      %1456 = vmatpush1.msra.mxu0 0.0
      %1457 = vmatprep.subr.mxu0 0.0
      %1458 = vmatpush1.msra.mxu0 0.0
      %1459 = vmatprep.subr.mxu0 0.0
      %1460 = vmatpush1.msra.mxu0 0.0
      %1461 = vmatprep.subr.mxu0 0.0
      %1462 = vmatpush1.msra.mxu0 0.0
      %1463 = vmatprep.subr.mxu0 0.0
      %1464 = vmatpush1.msra.mxu0 0.0
      %1465 = vmatprep.subr.mxu0 0.0
      %1466 = vmatpush1.msra.mxu0 0.0
      %1467 = vmatprep.subr.mxu0 0.0
      %1468 = vmatpush1.msra.mxu0 0.0
      %1469 = vmatprep.subr.mxu0 0.0
      %1470 = vmatpush1.msra.mxu0 0.0
      %1471 = vmatprep.subr.mxu0 0.0
      %1472 = vmatpush1.msra.mxu0 0.0
      %1473 = vmatprep.subr.mxu0 0.0
      %1474 = vmatpush1.msra.mxu0 0.0
      %1475 = vmatprep.subr.mxu0 0.0
      %1476 = vmatpush1.msra.mxu0 0.0
      %1477 = vmatprep.subr.mxu0 0.0
      %1478 = vmatpush1.msra.mxu0 0.0
      %1479 = vmatprep.subr.mxu0 0.0
      %1480 = vmatpush1.msra.mxu0 0.0
      %1481 = vmatprep.subr.mxu0 0.0
      %1482 = vmatpush1.msra.mxu0 0.0
      %1483 = vmatprep.subr.mxu0 0.0
      %1484 = vmatpush1.msra.mxu0 0.0
      %1485 = vmatprep.subr.mxu0 0.0
      %1486 = vmatpush1.msra.mxu0 0.0
      %1487 = vmatprep.subr.mxu0 0.0
      %1488 = vmatpush1.msra.mxu0 0.0
      %1489 = vmatprep.subr.mxu0 0.0
      %1490 = vmatpush1.msra.mxu0 0.0
      %1491 = vmatprep.subr.mxu0 0.0
      %1492 = vmatpush1.msra.mxu0 0.0
      %1493 = vmatprep.subr.mxu0 0.0
      %1494 = vmatpush1.msra.mxu0 0.0
      %1495 = vmatprep.subr.mxu0 0.0
      %1496 = vmatpush1.msra.mxu0 0.0
      %1497 = vmatprep.subr.mxu0 0.0
      %1498 = vmatpush1.msra.mxu0 0.0
      %1499 = vmatprep.subr.mxu0 0.0
      %1500 = vmatpush1.msra.mxu0 0.0
      %1501 = vmatprep.subr.mxu0 0.0
      %1502 = vmatpush1.msra.mxu0 0.0
      %1503 = vmatprep.subr.mxu0 0.0
      %1504 = vmatpush1.msra.mxu0 0.0
      %1505 = vmatprep.subr.mxu0 0.0
      %1506 = vmatpush1.msra.mxu0 0.0
      %1507 = vmatprep.subr.mxu0 0.0
      %1508 = vmatpush1.msra.mxu0 0.0
      %1509 = vmatprep.subr.mxu0 0.0
      %1510 = vmatpush1.msra.mxu0 0.0
      %1511 = vmatprep.subr.mxu0 0.0
      %1512 = vmatpush1.msra.mxu0 0.0
      %1513 = vmatprep.mubr.f32.mxu0 0.0
      %1514 = vmatmul.mubr.f32.gmra.mrb[0].mxu0 %v1014
      %v1515 = vpop.f32.mrb[0].mxu0
      %v1516 = vadd.f32 %v1408, %v1515
      %v1517 = vpop.f32.mrb[0].mxu0
      %1518 = vmatprep.mubr.f32.mxu0 0.0
      %1519 = vmatmul.mubr.f32.gmra.mrb[0].mxu0 %v1017
      %v1520 = vpop.f32.mrb[0].mxu0
      %v1521 = vadd.f32 %v1413, %v1520
      %v1522 = vpop.f32.mrb[0].mxu0
      %1523 = vmatprep.mubr.f32.mxu0 0.0
      %1524 = vmatmul.mubr.f32.gmra.mrb[0].mxu0 %v881
      %v1525 = vpop.f32.mrb[0].mxu0
      %v1526 = vadd.f32 %v1418, %v1525
      %v1527 = vpop.f32.mrb[0].mxu0
      %1528 = vmatprep.mubr.f32.mxu0 0.0
      %1529 = vmatmul.mubr.f32.gmra.mrb[0].mxu0 %v884
      %v1530 = vpop.f32.mrb[0].mxu0
      %v1531 = vadd.f32 %v1423, %v1530
      %v1532 = vpop.f32.mrb[0].mxu0
      %1533 = vmatprep.mubr.f32.mxu0 0.0
      %1534 = vmatmul.mubr.f32.gmra.mrb[0].mxu0 %v887
      %v1535 = vpop.f32.mrb[0].mxu0
      %v1536 = vadd.f32 %v1428, %v1535
      %v1537 = vpop.f32.mrb[0].mxu0
      %1538 = vmatprep.mubr.f32.mxu0 0.0
      %1539 = vmatmul.mubr.f32.gmra.mrb[0].mxu0 %v890
      %v1540 = vpop.f32.mrb[0].mxu0
      %v1541 = vadd.f32 %v1433, %v1540
      %v1542 = vpop.f32.mrb[0].mxu0
      %1543 = vmatprep.mubr.f32.mxu0 0.0
      %1544 = vmatmul.mubr.f32.gmra.mrb[0].mxu0 %v893
      %v1545 = vpop.f32.mrb[0].mxu0
      %v1546 = vadd.f32 %v1438, %v1545
      %v1547 = vpop.f32.mrb[0].mxu0
      %1548 = vmatprep.mubr.f32.mxu0 0.0
      %1549 = vmatmul.mubr.f32.gmra.mrb[0].mxu0 %v896
      %v1550 = vpop.f32.mrb[0].mxu0
      %v1551 = vadd.f32 %v1443, %v1550
      %v1552 = vpop.f32.mrb[0].mxu0
      %1553 = vdwg.mxu0
      %s1554 = scalar_lea.vmem %s4, 28
      %v1555 = vld [vmem:[%s1554] sm:$0xf]
      %v1557 = vsel %vm904, %v1555, 0
      %1559 = vmatprep.subr.mxu0 0.0
      %1560 = vmatpush1.msra.mxu0 %v1557
      %1561 = vmatprep.subr.mxu0 0.0
      %1562 = vmatpush1.msra.mxu0 0.0
      %1563 = vmatprep.subr.mxu0 0.0
      %1564 = vmatpush1.msra.mxu0 0.0
      %1565 = vmatprep.subr.mxu0 0.0
      %1566 = vmatpush1.msra.mxu0 0.0
      %1567 = vmatprep.subr.mxu0 0.0
      %1568 = vmatpush1.msra.mxu0 0.0
      %1569 = vmatprep.subr.mxu0 0.0
      %1570 = vmatpush1.msra.mxu0 0.0
      %1571 = vmatprep.subr.mxu0 0.0
      %1572 = vmatpush1.msra.mxu0 0.0
      %1573 = vmatprep.subr.mxu0 0.0
      %1574 = vmatpush1.msra.mxu0 0.0
      %1575 = vmatprep.subr.mxu0 0.0
      %1576 = vmatpush1.msra.mxu0 0.0
      %1577 = vmatprep.subr.mxu0 0.0
      %1578 = vmatpush1.msra.mxu0 0.0
      %1579 = vmatprep.subr.mxu0 0.0
      %1580 = vmatpush1.msra.mxu0 0.0
      %1581 = vmatprep.subr.mxu0 0.0
      %1582 = vmatpush1.msra.mxu0 0.0
      %1583 = vmatprep.subr.mxu0 0.0
      %1584 = vmatpush1.msra.mxu0 0.0
      %1585 = vmatprep.subr.mxu0 0.0
      %1586 = vmatpush1.msra.mxu0 0.0
      %1587 = vmatprep.subr.mxu0 0.0
      %1588 = vmatpush1.msra.mxu0 0.0
      %1589 = vmatprep.subr.mxu0 0.0
      %1590 = vmatpush1.msra.mxu0 0.0
      %1591 = vmatprep.subr.mxu0 0.0
      %1592 = vmatpush1.msra.mxu0 0.0
      %1593 = vmatprep.subr.mxu0 0.0
      %1594 = vmatpush1.msra.mxu0 0.0
      %1595 = vmatprep.subr.mxu0 0.0
      %1596 = vmatpush1.msra.mxu0 0.0
      %1597 = vmatprep.subr.mxu0 0.0
      %1598 = vmatpush1.msra.mxu0 0.0
      %1599 = vmatprep.subr.mxu0 0.0
      %1600 = vmatpush1.msra.mxu0 0.0
      %1601 = vmatprep.subr.mxu0 0.0
      %1602 = vmatpush1.msra.mxu0 0.0
      %1603 = vmatprep.subr.mxu0 0.0
      %1604 = vmatpush1.msra.mxu0 0.0
      %1605 = vmatprep.subr.mxu0 0.0
      %1606 = vmatpush1.msra.mxu0 0.0
      %1607 = vmatprep.subr.mxu0 0.0
      %1608 = vmatpush1.msra.mxu0 0.0
      %1609 = vmatprep.subr.mxu0 0.0
      %1610 = vmatpush1.msra.mxu0 0.0
      %1611 = vmatprep.subr.mxu0 0.0
      %1612 = vmatpush1.msra.mxu0 0.0
      %1613 = vmatprep.subr.mxu0 0.0
      %1614 = vmatpush1.msra.mxu0 0.0
      %1615 = vmatprep.subr.mxu0 0.0
      %1616 = vmatpush1.msra.mxu0 0.0
      %1617 = vmatprep.subr.mxu0 0.0
      %1618 = vmatpush1.msra.mxu0 0.0
      %1619 = vmatprep.subr.mxu0 0.0
      %1620 = vmatpush1.msra.mxu0 0.0
      %1621 = vmatprep.subr.mxu0 0.0
      %1622 = vmatpush1.msra.mxu0 0.0
      %1623 = vmatprep.mubr.f32.mxu0 0.0
      %1624 = vmatmul.mubr.f32.gmra.mrb[0].mxu0 %v1138
      %v1625 = vpop.f32.mrb[0].mxu0
      %v1626 = vadd.f32 0.0, %v1625
      %v1627 = vpop.f32.mrb[0].mxu0
      %1628 = vmatprep.mubr.f32.mxu0 0.0
      %1629 = vmatmul.mubr.f32.gmra.mrb[0].mxu0 %v1141
      %v1630 = vpop.f32.mrb[0].mxu0
      %v1631 = vadd.f32 0.0, %v1630
      %v1632 = vpop.f32.mrb[0].mxu0
      %1633 = vmatprep.mubr.f32.mxu0 0.0
      %1634 = vmatmul.mubr.f32.gmra.mrb[0].mxu0 %v1144
      %v1635 = vpop.f32.mrb[0].mxu0
      %v1636 = vadd.f32 0.0, %v1635
      %v1637 = vpop.f32.mrb[0].mxu0
      %1638 = vmatprep.mubr.f32.mxu0 0.0
      %1639 = vmatmul.mubr.f32.gmra.mrb[0].mxu0 %v1147
      %v1640 = vpop.f32.mrb[0].mxu0
      %v1641 = vadd.f32 0.0, %v1640
      %v1642 = vpop.f32.mrb[0].mxu0
      %1643 = vmatprep.mubr.f32.mxu0 0.0
      %1644 = vmatmul.mubr.f32.gmra.mrb[0].mxu0 %v1150
      %v1645 = vpop.f32.mrb[0].mxu0
      %v1646 = vadd.f32 0.0, %v1645
      %v1647 = vpop.f32.mrb[0].mxu0
      %1648 = vmatprep.mubr.f32.mxu0 0.0
      %1649 = vmatmul.mubr.f32.gmra.mrb[0].mxu0 %v1153
      %v1650 = vpop.f32.mrb[0].mxu0
      %v1651 = vadd.f32 0.0, %v1650
      %v1652 = vpop.f32.mrb[0].mxu0
      %1653 = vmatprep.mubr.f32.mxu0 0.0
      %1654 = vmatmul.mubr.f32.gmra.mrb[0].mxu0 %v1156
      %v1655 = vpop.f32.mrb[0].mxu0
      %v1656 = vadd.f32 0.0, %v1655
      %v1657 = vpop.f32.mrb[0].mxu0
      %1658 = vmatprep.mubr.f32.mxu0 0.0
      %1659 = vmatmul.mubr.f32.gmra.mrb[0].mxu0 %v1159
      %v1660 = vpop.f32.mrb[0].mxu0
      %v1661 = vadd.f32 0.0, %v1660
      %v1662 = vpop.f32.mrb[0].mxu0
      %1663 = vdwg.mxu0
      %v1664 = vadd.f32 %v1516, %v1626
      %v1665 = vadd.f32 %v1521, %v1631
      %v1666 = vadd.f32 %v1526, %v1636
      %v1667 = vadd.f32 %v1531, %v1641
      %v1668 = vadd.f32 %v1536, %v1646
      %v1669 = vadd.f32 %v1541, %v1651
      %v1670 = vadd.f32 %v1546, %v1656
      %v1671 = vadd.f32 %v1551, %v1661
      %v1672 = vadd.f32 %v1326, %v1664
      %v1673 = vadd.f32 %v1327, %v1665
      %v1674 = vadd.f32 %v1328, %v1666
      %v1675 = vadd.f32 %v1329, %v1667
      %v1676 = vadd.f32 %v1330, %v1668
      %v1677 = vadd.f32 %v1331, %v1669
      %v1678 = vadd.f32 %v1332, %v1670
      %v1679 = vadd.f32 %v1333, %v1671
      %s1680 = scalar_lea.vmem %s4, 8
      %v1681 = vld [vmem:[%s1680] sm:$0xf]
      %s1682 = scalar_lea.vmem %s4, 20
      %v1683 = vld [vmem:[%s1682] sm:$0xf]
      %v1685 = vsel %vm904, %v1683, 0
      %1687 = vmatprep.subr.mxu0 0.0
      %1688 = vmatpush1.msra.mxu0 %v1685
      %1689 = vmatprep.subr.mxu0 0.0
      %1690 = vmatpush1.msra.mxu0 0.0
      %1691 = vmatprep.subr.mxu0 0.0
      %1692 = vmatpush1.msra.mxu0 0.0
      %1693 = vmatprep.subr.mxu0 0.0
      %1694 = vmatpush1.msra.mxu0 0.0
      %1695 = vmatprep.subr.mxu0 0.0
      %1696 = vmatpush1.msra.mxu0 0.0
      %1697 = vmatprep.subr.mxu0 0.0
      %1698 = vmatpush1.msra.mxu0 0.0
      %1699 = vmatprep.subr.mxu0 0.0
      %1700 = vmatpush1.msra.mxu0 0.0
      %1701 = vmatprep.subr.mxu0 0.0
      %1702 = vmatpush1.msra.mxu0 0.0
      %1703 = vmatprep.subr.mxu0 0.0
      %1704 = vmatpush1.msra.mxu0 0.0
      %1705 = vmatprep.subr.mxu0 0.0
      %1706 = vmatpush1.msra.mxu0 0.0
      %1707 = vmatprep.subr.mxu0 0.0
      %1708 = vmatpush1.msra.mxu0 0.0
      %1709 = vmatprep.subr.mxu0 0.0
      %1710 = vmatpush1.msra.mxu0 0.0
      %1711 = vmatprep.subr.mxu0 0.0
      %1712 = vmatpush1.msra.mxu0 0.0
      %1713 = vmatprep.subr.mxu0 0.0
      %1714 = vmatpush1.msra.mxu0 0.0
      %1715 = vmatprep.subr.mxu0 0.0
      %1716 = vmatpush1.msra.mxu0 0.0
      %1717 = vmatprep.subr.mxu0 0.0
      %1718 = vmatpush1.msra.mxu0 0.0
      %1719 = vmatprep.subr.mxu0 0.0
      %1720 = vmatpush1.msra.mxu0 0.0
      %1721 = vmatprep.subr.mxu0 0.0
      %1722 = vmatpush1.msra.mxu0 0.0
      %1723 = vmatprep.subr.mxu0 0.0
      %1724 = vmatpush1.msra.mxu0 0.0
      %1725 = vmatprep.subr.mxu0 0.0
      %1726 = vmatpush1.msra.mxu0 0.0
      %1727 = vmatprep.subr.mxu0 0.0
      %1728 = vmatpush1.msra.mxu0 0.0
      %1729 = vmatprep.subr.mxu0 0.0
      %1730 = vmatpush1.msra.mxu0 0.0
      %1731 = vmatprep.subr.mxu0 0.0
      %1732 = vmatpush1.msra.mxu0 0.0
      %1733 = vmatprep.subr.mxu0 0.0
      %1734 = vmatpush1.msra.mxu0 0.0
      %1735 = vmatprep.subr.mxu0 0.0
      %1736 = vmatpush1.msra.mxu0 0.0
      %1737 = vmatprep.subr.mxu0 0.0
      %1738 = vmatpush1.msra.mxu0 0.0
      %1739 = vmatprep.subr.mxu0 0.0
      %1740 = vmatpush1.msra.mxu0 0.0
      %1741 = vmatprep.subr.mxu0 0.0
      %1742 = vmatpush1.msra.mxu0 0.0
      %1743 = vmatprep.subr.mxu0 0.0
      %1744 = vmatpush1.msra.mxu0 0.0
      %1745 = vmatprep.subr.mxu0 0.0
      %1746 = vmatpush1.msra.mxu0 0.0
      %1747 = vmatprep.subr.mxu0 0.0
      %1748 = vmatpush1.msra.mxu0 0.0
      %1749 = vmatprep.subr.mxu0 0.0
      %1750 = vmatpush1.msra.mxu0 0.0
      %1751 = vmatprep.mubr.f32.mxu0 0.0
      %1752 = vmatmul.mubr.f32.gmra.mrb[0].mxu0 %v881
      %v1753 = vpop.f32.mrb[0].mxu0
      %v1754 = vadd.f32 0.0, %v1753
      %v1755 = vpop.f32.mrb[0].mxu0
      %1756 = vmatprep.mubr.f32.mxu0 0.0
      %1757 = vmatmul.mubr.f32.gmra.mrb[0].mxu0 %v884
      %v1758 = vpop.f32.mrb[0].mxu0
      %v1759 = vadd.f32 0.0, %v1758
      %v1760 = vpop.f32.mrb[0].mxu0
      %1761 = vmatprep.mubr.f32.mxu0 0.0
      %1762 = vmatmul.mubr.f32.gmra.mrb[0].mxu0 %v887
      %v1763 = vpop.f32.mrb[0].mxu0
      %v1764 = vadd.f32 0.0, %v1763
      %v1765 = vpop.f32.mrb[0].mxu0
      %1766 = vmatprep.mubr.f32.mxu0 0.0
      %1767 = vmatmul.mubr.f32.gmra.mrb[0].mxu0 %v890
      %v1768 = vpop.f32.mrb[0].mxu0
      %v1769 = vadd.f32 0.0, %v1768
      %v1770 = vpop.f32.mrb[0].mxu0
      %1771 = vmatprep.mubr.f32.mxu0 0.0
      %1772 = vmatmul.mubr.f32.gmra.mrb[0].mxu0 %v893
      %v1773 = vpop.f32.mrb[0].mxu0
      %v1774 = vadd.f32 0.0, %v1773
      %v1775 = vpop.f32.mrb[0].mxu0
      %1776 = vmatprep.mubr.f32.mxu0 0.0
      %1777 = vmatmul.mubr.f32.gmra.mrb[0].mxu0 %v896
      %v1778 = vpop.f32.mrb[0].mxu0
      %v1779 = vadd.f32 0.0, %v1778
      %v1780 = vpop.f32.mrb[0].mxu0
      %1781 = vmatprep.mubr.f32.mxu0 0.0
      %1782 = vmatmul.mubr.f32.gmra.mrb[0].mxu0 %v899
      %v1783 = vpop.f32.mrb[0].mxu0
      %v1784 = vadd.f32 0.0, %v1783
      %v1785 = vpop.f32.mrb[0].mxu0
      %1786 = vmatprep.mubr.f32.mxu0 0.0
      %1787 = vmatmul.mubr.f32.gmra.mrb[0].mxu0 %v902
      %v1788 = vpop.f32.mrb[0].mxu0
      %v1789 = vadd.f32 0.0, %v1788
      %v1790 = vpop.f32.mrb[0].mxu0
      %1791 = vdwg.mxu0
      %v1793 = vsel %vm904, %v1681, 0
      %1795 = vmatprep.subr.mxu0 0.0
      %1796 = vmatpush1.msra.mxu0 %v1793
      %1797 = vmatprep.subr.mxu0 0.0
      %1798 = vmatpush1.msra.mxu0 0.0
      %1799 = vmatprep.subr.mxu0 0.0
      %1800 = vmatpush1.msra.mxu0 0.0
      %1801 = vmatprep.subr.mxu0 0.0
      %1802 = vmatpush1.msra.mxu0 0.0
      %1803 = vmatprep.subr.mxu0 0.0
      %1804 = vmatpush1.msra.mxu0 0.0
      %1805 = vmatprep.subr.mxu0 0.0
      %1806 = vmatpush1.msra.mxu0 0.0
      %1807 = vmatprep.subr.mxu0 0.0
      %1808 = vmatpush1.msra.mxu0 0.0
      %1809 = vmatprep.subr.mxu0 0.0
      %1810 = vmatpush1.msra.mxu0 0.0
      %1811 = vmatprep.subr.mxu0 0.0
      %1812 = vmatpush1.msra.mxu0 0.0
      %1813 = vmatprep.subr.mxu0 0.0
      %1814 = vmatpush1.msra.mxu0 0.0
      %1815 = vmatprep.subr.mxu0 0.0
      %1816 = vmatpush1.msra.mxu0 0.0
      %1817 = vmatprep.subr.mxu0 0.0
      %1818 = vmatpush1.msra.mxu0 0.0
      %1819 = vmatprep.subr.mxu0 0.0
      %1820 = vmatpush1.msra.mxu0 0.0
      %1821 = vmatprep.subr.mxu0 0.0
      %1822 = vmatpush1.msra.mxu0 0.0
      %1823 = vmatprep.subr.mxu0 0.0
      %1824 = vmatpush1.msra.mxu0 0.0
      %1825 = vmatprep.subr.mxu0 0.0
      %1826 = vmatpush1.msra.mxu0 0.0
      %1827 = vmatprep.subr.mxu0 0.0
      %1828 = vmatpush1.msra.mxu0 0.0
      %1829 = vmatprep.subr.mxu0 0.0
      %1830 = vmatpush1.msra.mxu0 0.0
      %1831 = vmatprep.subr.mxu0 0.0
      %1832 = vmatpush1.msra.mxu0 0.0
      %1833 = vmatprep.subr.mxu0 0.0
      %1834 = vmatpush1.msra.mxu0 0.0
      %1835 = vmatprep.subr.mxu0 0.0
      %1836 = vmatpush1.msra.mxu0 0.0
      %1837 = vmatprep.subr.mxu0 0.0
      %1838 = vmatpush1.msra.mxu0 0.0
      %1839 = vmatprep.subr.mxu0 0.0
      %1840 = vmatpush1.msra.mxu0 0.0
      %1841 = vmatprep.subr.mxu0 0.0
      %1842 = vmatpush1.msra.mxu0 0.0
      %1843 = vmatprep.subr.mxu0 0.0
      %1844 = vmatpush1.msra.mxu0 0.0
      %1845 = vmatprep.subr.mxu0 0.0
      %1846 = vmatpush1.msra.mxu0 0.0
      %1847 = vmatprep.subr.mxu0 0.0
      %1848 = vmatpush1.msra.mxu0 0.0
      %1849 = vmatprep.subr.mxu0 0.0
      %1850 = vmatpush1.msra.mxu0 0.0
      %1851 = vmatprep.subr.mxu0 0.0
      %1852 = vmatpush1.msra.mxu0 0.0
      %1853 = vmatprep.subr.mxu0 0.0
      %1854 = vmatpush1.msra.mxu0 0.0
      %1855 = vmatprep.subr.mxu0 0.0
      %1856 = vmatpush1.msra.mxu0 0.0
      %1857 = vmatprep.subr.mxu0 0.0
      %1858 = vmatpush1.msra.mxu0 0.0
      %1859 = vmatprep.mubr.f32.mxu0 0.0
      %1860 = vmatmul.mubr.f32.gmra.mrb[0].mxu0 %v1014
      %v1861 = vpop.f32.mrb[0].mxu0
      %v1862 = vadd.f32 %v1754, %v1861
      %v1863 = vpop.f32.mrb[0].mxu0
      %1864 = vmatprep.mubr.f32.mxu0 0.0
      %1865 = vmatmul.mubr.f32.gmra.mrb[0].mxu0 %v1017
      %v1866 = vpop.f32.mrb[0].mxu0
      %v1867 = vadd.f32 %v1759, %v1866
      %v1868 = vpop.f32.mrb[0].mxu0
      %1869 = vmatprep.mubr.f32.mxu0 0.0
      %1870 = vmatmul.mubr.f32.gmra.mrb[0].mxu0 %v881
      %v1871 = vpop.f32.mrb[0].mxu0
      %v1872 = vadd.f32 %v1764, %v1871
      %v1873 = vpop.f32.mrb[0].mxu0
      %1874 = vmatprep.mubr.f32.mxu0 0.0
      %1875 = vmatmul.mubr.f32.gmra.mrb[0].mxu0 %v884
      %v1876 = vpop.f32.mrb[0].mxu0
      %v1877 = vadd.f32 %v1769, %v1876
      %v1878 = vpop.f32.mrb[0].mxu0
      %1879 = vmatprep.mubr.f32.mxu0 0.0
      %1880 = vmatmul.mubr.f32.gmra.mrb[0].mxu0 %v887
      %v1881 = vpop.f32.mrb[0].mxu0
      %v1882 = vadd.f32 %v1774, %v1881
      %v1883 = vpop.f32.mrb[0].mxu0
      %1884 = vmatprep.mubr.f32.mxu0 0.0
      %1885 = vmatmul.mubr.f32.gmra.mrb[0].mxu0 %v890
      %v1886 = vpop.f32.mrb[0].mxu0
      %v1887 = vadd.f32 %v1779, %v1886
      %v1888 = vpop.f32.mrb[0].mxu0
      %1889 = vmatprep.mubr.f32.mxu0 0.0
      %1890 = vmatmul.mubr.f32.gmra.mrb[0].mxu0 %v893
      %v1891 = vpop.f32.mrb[0].mxu0
      %v1892 = vadd.f32 %v1784, %v1891
      %v1893 = vpop.f32.mrb[0].mxu0
      %1894 = vmatprep.mubr.f32.mxu0 0.0
      %1895 = vmatmul.mubr.f32.gmra.mrb[0].mxu0 %v896
      %v1896 = vpop.f32.mrb[0].mxu0
      %v1897 = vadd.f32 %v1789, %v1896
      %v1898 = vpop.f32.mrb[0].mxu0
      %1899 = vdwg.mxu0
      %s1900 = scalar_lea.vmem %s4, 32
      %v1901 = vld [vmem:[%s1900] sm:$0xf]
      %v1903 = vsel %vm904, %v1901, 0
      %1905 = vmatprep.subr.mxu0 0.0
      %1906 = vmatpush1.msra.mxu0 %v1903
      %1907 = vmatprep.subr.mxu0 0.0
      %1908 = vmatpush1.msra.mxu0 0.0
      %1909 = vmatprep.subr.mxu0 0.0
      %1910 = vmatpush1.msra.mxu0 0.0
      %1911 = vmatprep.subr.mxu0 0.0
      %1912 = vmatpush1.msra.mxu0 0.0
      %1913 = vmatprep.subr.mxu0 0.0
      %1914 = vmatpush1.msra.mxu0 0.0
      %1915 = vmatprep.subr.mxu0 0.0
      %1916 = vmatpush1.msra.mxu0 0.0
      %1917 = vmatprep.subr.mxu0 0.0
      %1918 = vmatpush1.msra.mxu0 0.0
      %1919 = vmatprep.subr.mxu0 0.0
      %1920 = vmatpush1.msra.mxu0 0.0
      %1921 = vmatprep.subr.mxu0 0.0
      %1922 = vmatpush1.msra.mxu0 0.0
      %1923 = vmatprep.subr.mxu0 0.0
      %1924 = vmatpush1.msra.mxu0 0.0
      %1925 = vmatprep.subr.mxu0 0.0
      %1926 = vmatpush1.msra.mxu0 0.0
      %1927 = vmatprep.subr.mxu0 0.0
      %1928 = vmatpush1.msra.mxu0 0.0
      %1929 = vmatprep.subr.mxu0 0.0
      %1930 = vmatpush1.msra.mxu0 0.0
      %1931 = vmatprep.subr.mxu0 0.0
      %1932 = vmatpush1.msra.mxu0 0.0
      %1933 = vmatprep.subr.mxu0 0.0
      %1934 = vmatpush1.msra.mxu0 0.0
      %1935 = vmatprep.subr.mxu0 0.0
      %1936 = vmatpush1.msra.mxu0 0.0
      %1937 = vmatprep.subr.mxu0 0.0
      %1938 = vmatpush1.msra.mxu0 0.0
      %1939 = vmatprep.subr.mxu0 0.0
      %1940 = vmatpush1.msra.mxu0 0.0
      %1941 = vmatprep.subr.mxu0 0.0
      %1942 = vmatpush1.msra.mxu0 0.0
      %1943 = vmatprep.subr.mxu0 0.0
      %1944 = vmatpush1.msra.mxu0 0.0
      %1945 = vmatprep.subr.mxu0 0.0
      %1946 = vmatpush1.msra.mxu0 0.0
      %1947 = vmatprep.subr.mxu0 0.0
      %1948 = vmatpush1.msra.mxu0 0.0
      %1949 = vmatprep.subr.mxu0 0.0
      %1950 = vmatpush1.msra.mxu0 0.0
      %1951 = vmatprep.subr.mxu0 0.0
      %1952 = vmatpush1.msra.mxu0 0.0
      %1953 = vmatprep.subr.mxu0 0.0
      %1954 = vmatpush1.msra.mxu0 0.0
      %1955 = vmatprep.subr.mxu0 0.0
      %1956 = vmatpush1.msra.mxu0 0.0
      %1957 = vmatprep.subr.mxu0 0.0
      %1958 = vmatpush1.msra.mxu0 0.0
      %1959 = vmatprep.subr.mxu0 0.0
      %1960 = vmatpush1.msra.mxu0 0.0
      %1961 = vmatprep.subr.mxu0 0.0
      %1962 = vmatpush1.msra.mxu0 0.0
      %1963 = vmatprep.subr.mxu0 0.0
      %1964 = vmatpush1.msra.mxu0 0.0
      %1965 = vmatprep.subr.mxu0 0.0
      %1966 = vmatpush1.msra.mxu0 0.0
      %1967 = vmatprep.subr.mxu0 0.0
      %1968 = vmatpush1.msra.mxu0 0.0
      %1969 = vmatprep.mubr.f32.mxu0 0.0
      %1970 = vmatmul.mubr.f32.gmra.mrb[0].mxu0 %v1138
      %v1971 = vpop.f32.mrb[0].mxu0
      %v1972 = vadd.f32 0.0, %v1971
      %v1973 = vpop.f32.mrb[0].mxu0
      %1974 = vmatprep.mubr.f32.mxu0 0.0
      %1975 = vmatmul.mubr.f32.gmra.mrb[0].mxu0 %v1141
      %v1976 = vpop.f32.mrb[0].mxu0
      %v1977 = vadd.f32 0.0, %v1976
      %v1978 = vpop.f32.mrb[0].mxu0
      %1979 = vmatprep.mubr.f32.mxu0 0.0
      %1980 = vmatmul.mubr.f32.gmra.mrb[0].mxu0 %v1144
      %v1981 = vpop.f32.mrb[0].mxu0
      %v1982 = vadd.f32 0.0, %v1981
      %v1983 = vpop.f32.mrb[0].mxu0
      %1984 = vmatprep.mubr.f32.mxu0 0.0
      %1985 = vmatmul.mubr.f32.gmra.mrb[0].mxu0 %v1147
      %v1986 = vpop.f32.mrb[0].mxu0
      %v1987 = vadd.f32 0.0, %v1986
      %v1988 = vpop.f32.mrb[0].mxu0
      %1989 = vmatprep.mubr.f32.mxu0 0.0
      %1990 = vmatmul.mubr.f32.gmra.mrb[0].mxu0 %v1150
      %v1991 = vpop.f32.mrb[0].mxu0
      %v1992 = vadd.f32 0.0, %v1991
      %v1993 = vpop.f32.mrb[0].mxu0
      %1994 = vmatprep.mubr.f32.mxu0 0.0
      %1995 = vmatmul.mubr.f32.gmra.mrb[0].mxu0 %v1153
      %v1996 = vpop.f32.mrb[0].mxu0
      %v1997 = vadd.f32 0.0, %v1996
      %v1998 = vpop.f32.mrb[0].mxu0
      %1999 = vmatprep.mubr.f32.mxu0 0.0
      %2000 = vmatmul.mubr.f32.gmra.mrb[0].mxu0 %v1156
      %v2001 = vpop.f32.mrb[0].mxu0
      %v2002 = vadd.f32 0.0, %v2001
      %v2003 = vpop.f32.mrb[0].mxu0
      %2004 = vmatprep.mubr.f32.mxu0 0.0
      %2005 = vmatmul.mubr.f32.gmra.mrb[0].mxu0 %v1159
      %v2006 = vpop.f32.mrb[0].mxu0
      %v2007 = vadd.f32 0.0, %v2006
      %v2008 = vpop.f32.mrb[0].mxu0
      %2009 = vdwg.mxu0
      %v2010 = vadd.f32 %v1862, %v1972
      %v2011 = vadd.f32 %v1867, %v1977
      %v2012 = vadd.f32 %v1872, %v1982
      %v2013 = vadd.f32 %v1877, %v1987
      %v2014 = vadd.f32 %v1882, %v1992
      %v2015 = vadd.f32 %v1887, %v1997
      %v2016 = vadd.f32 %v1892, %v2002
      %v2017 = vadd.f32 %v1897, %v2007
      %v2018 = vrot.slane %v2010, 1
      %v2019 = vrot.slane %v2011, 1
      %v2020 = vrot.slane %v2012, 1
      %v2021 = vrot.slane %v2013, 1
      %v2022 = vrot.slane %v2014, 1
      %v2023 = vrot.slane %v2015, 1
      %v2024 = vrot.slane %v2016, 1
      %v2025 = vrot.slane %v2017, 1
      %vm2026 = vcmp.lt.s32.totalorder %v763, 7
      %v2027 = vsel %vm2026, %v2024, %v2025
      %v2028 = vsel %vm2026, %v2023, %v2024
      %v2029 = vsel %vm2026, %v2022, %v2023
      %v2030 = vsel %vm2026, %v2021, %v2022
      %v2031 = vsel %vm2026, %v2020, %v2021
      %v2032 = vsel %vm2026, %v2019, %v2020
      %v2033 = vsel %vm2026, %v2018, %v2019
      %v2034 = vsel %vm2026, %v2025, %v2018
      %vm2035 = vcmp.lt.s32.totalorder %v859, 15
      %vm2036 = vcmp.lt.s32.totalorder %v860, 15
      %vm2037 = vcmp.lt.s32.totalorder %v861, 15
      %vm2038 = vcmp.lt.s32.totalorder %v862, 15
      %vm2039 = vcmp.lt.s32.totalorder %v863, 15
      %vm2040 = vcmp.lt.s32.totalorder %v864, 15
      %vm2041 = vcmp.lt.s32.totalorder %v865, 15
      %vm2042 = vcmp.lt.s32.totalorder %v866, 15
      %v2043 = vsel %vm2035, 1, 0
      %v2044 = vsel %vm2036, 1, 0
      %v2045 = vsel %vm2037, 1, 0
      %v2046 = vsel %vm2038, 1, 0
      %v2047 = vsel %vm2039, 1, 0
      %v2048 = vsel %vm2040, 1, 0
      %v2049 = vsel %vm2041, 1, 0
      %v2050 = vsel %vm2042, 1, 0
      %vm2051 = vcmp.eq.s32.totalorder %v2043, 1
      %vm2052 = vcmp.eq.s32.totalorder %v2044, 1
      %vm2053 = vcmp.eq.s32.totalorder %v2045, 1
      %vm2054 = vcmp.eq.s32.totalorder %v2046, 1
      %vm2055 = vcmp.eq.s32.totalorder %v2047, 1
      %vm2056 = vcmp.eq.s32.totalorder %v2048, 1
      %vm2057 = vcmp.eq.s32.totalorder %v2049, 1
      %vm2058 = vcmp.eq.s32.totalorder %v2050, 1
      %v2059 = vsel %vm2051, %v2033, 0.0
      %v2060 = vsel %vm2052, %v2032, 0.0
      %v2061 = vsel %vm2053, %v2031, 0.0
      %v2062 = vsel %vm2054, %v2030, 0.0
      %v2063 = vsel %vm2055, %v2029, 0.0
      %v2064 = vsel %vm2056, %v2028, 0.0
      %v2065 = vsel %vm2057, %v2027, 0.0
      %v2066 = vsel %vm2058, %v2034, 0.0
      %v2067 = vadd.f32 %v1672, %v2059
      %v2068 = vadd.f32 %v1673, %v2060
      %v2069 = vadd.f32 %v1674, %v2061
      %v2070 = vadd.f32 %v1675, %v2062
      %v2071 = vadd.f32 %v1676, %v2063
      %v2072 = vadd.f32 %v1677, %v2064
      %v2073 = vadd.f32 %v1678, %v2065
      %v2074 = vadd.f32 %v1679, %v2066
      %v2075 = vmax.f32 %v2067, 0.0
      %v2076 = vmax.f32 %v2068, 0.0
      %v2077 = vmax.f32 %v2069, 0.0
      %v2078 = vmax.f32 %v2070, 0.0
      %v2079 = vmax.f32 %v2071, 0.0
      %v2080 = vmax.f32 %v2072, 0.0
      %v2081 = vmax.f32 %v2073, 0.0
      %v2082 = vmax.f32 %v2074, 0.0
      %v2083 = vld [vmem:[%s5] sm:$0xf]
      %v2084 = vld [vmem:[%s371] sm:$0xff]
      %v2085 = vld [vmem:[%s371 + $0x8] sm:$0xff]
      %v2086 = vld [vmem:[%s371 + $0x10] sm:$0xff]
      %v2087 = vld [vmem:[%s371 + $0x18] sm:$0xff]
      %v2088 = vld [vmem:[%s371 + $0x20] sm:$0xff]
      %v2089 = vld [vmem:[%s371 + $0x28] sm:$0xff]
      %v2090 = vld [vmem:[%s371 + $0x30] sm:$0xff]
      %v2091 = vld [vmem:[%s371 + $0x38] sm:$0xff]
      %v2093 = vsel %vm567, %v2075, 0
      %v2096 = vsel %vm567, %v2076, 0
      %v2099 = vsel %vm567, %v2077, 0
      %v2102 = vsel %vm567, %v2078, 0
      %v2105 = vsel %vm567, %v2079, 0
      %v2108 = vsel %vm567, %v2080, 0
      %v2111 = vsel %vm567, %v2081, 0
      %v2114 = vsel %vm567, %v2082, 0
      %v2117 = vsel %vm904, %v2083, 0
      %2119 = vmatprep.subr.mxu0 0.0
      %2120 = vmatpush1.msra.mxu0 %v2117
      %2121 = vmatprep.subr.mxu0 0.0
      %2122 = vmatpush1.msra.mxu0 0.0
      %2123 = vmatprep.subr.mxu0 0.0
      %2124 = vmatpush1.msra.mxu0 0.0
      %2125 = vmatprep.subr.mxu0 0.0
      %2126 = vmatpush1.msra.mxu0 0.0
      %2127 = vmatprep.subr.mxu0 0.0
      %2128 = vmatpush1.msra.mxu0 0.0
      %2129 = vmatprep.subr.mxu0 0.0
      %2130 = vmatpush1.msra.mxu0 0.0
      %2131 = vmatprep.subr.mxu0 0.0
      %2132 = vmatpush1.msra.mxu0 0.0
      %2133 = vmatprep.subr.mxu0 0.0
      %2134 = vmatpush1.msra.mxu0 0.0
      %2135 = vmatprep.subr.mxu0 0.0
      %2136 = vmatpush1.msra.mxu0 0.0
      %2137 = vmatprep.subr.mxu0 0.0
      %2138 = vmatpush1.msra.mxu0 0.0
      %2139 = vmatprep.subr.mxu0 0.0
      %2140 = vmatpush1.msra.mxu0 0.0
      %2141 = vmatprep.subr.mxu0 0.0
      %2142 = vmatpush1.msra.mxu0 0.0
      %2143 = vmatprep.subr.mxu0 0.0
      %2144 = vmatpush1.msra.mxu0 0.0
      %2145 = vmatprep.subr.mxu0 0.0
      %2146 = vmatpush1.msra.mxu0 0.0
      %2147 = vmatprep.subr.mxu0 0.0
      %2148 = vmatpush1.msra.mxu0 0.0
      %2149 = vmatprep.subr.mxu0 0.0
      %2150 = vmatpush1.msra.mxu0 0.0
      %2151 = vmatprep.subr.mxu0 0.0
      %2152 = vmatpush1.msra.mxu0 0.0
      %2153 = vmatprep.subr.mxu0 0.0
      %2154 = vmatpush1.msra.mxu0 0.0
      %2155 = vmatprep.subr.mxu0 0.0
      %2156 = vmatpush1.msra.mxu0 0.0
      %2157 = vmatprep.subr.mxu0 0.0
      %2158 = vmatpush1.msra.mxu0 0.0
      %2159 = vmatprep.subr.mxu0 0.0
      %2160 = vmatpush1.msra.mxu0 0.0
      %2161 = vmatprep.subr.mxu0 0.0
      %2162 = vmatpush1.msra.mxu0 0.0
      %2163 = vmatprep.subr.mxu0 0.0
      %2164 = vmatpush1.msra.mxu0 0.0
      %2165 = vmatprep.subr.mxu0 0.0
      %2166 = vmatpush1.msra.mxu0 0.0
      %2167 = vmatprep.subr.mxu0 0.0
      %2168 = vmatpush1.msra.mxu0 0.0
      %2169 = vmatprep.subr.mxu0 0.0
      %2170 = vmatpush1.msra.mxu0 0.0
      %2171 = vmatprep.subr.mxu0 0.0
      %2172 = vmatpush1.msra.mxu0 0.0
      %2173 = vmatprep.subr.mxu0 0.0
      %2174 = vmatpush1.msra.mxu0 0.0
      %2175 = vmatprep.subr.mxu0 0.0
      %2176 = vmatpush1.msra.mxu0 0.0
      %2177 = vmatprep.subr.mxu0 0.0
      %2178 = vmatpush1.msra.mxu0 0.0
      %2179 = vmatprep.subr.mxu0 0.0
      %2180 = vmatpush1.msra.mxu0 0.0
      %2181 = vmatprep.subr.mxu0 0.0
      %2182 = vmatpush1.msra.mxu0 0.0
      %2183 = vmatprep.mubr.f32.mxu0 0.0
      %2184 = vmatmul.mubr.f32.gmra.mrb[0].mxu0 %v2093
      %v2185 = vpop.f32.mrb[0].mxu0
      %v2186 = vadd.f32 %v2084, %v2185
      %v2187 = vpop.f32.mrb[0].mxu0
      %2188 = vmatprep.mubr.f32.mxu0 0.0
      %2189 = vmatmul.mubr.f32.gmra.mrb[0].mxu0 %v2096
      %v2190 = vpop.f32.mrb[0].mxu0
      %v2191 = vadd.f32 %v2085, %v2190
      %v2192 = vpop.f32.mrb[0].mxu0
      %2193 = vmatprep.mubr.f32.mxu0 0.0
      %2194 = vmatmul.mubr.f32.gmra.mrb[0].mxu0 %v2099
      %v2195 = vpop.f32.mrb[0].mxu0
      %v2196 = vadd.f32 %v2086, %v2195
      %v2197 = vpop.f32.mrb[0].mxu0
      %2198 = vmatprep.mubr.f32.mxu0 0.0
      %2199 = vmatmul.mubr.f32.gmra.mrb[0].mxu0 %v2102
      %v2200 = vpop.f32.mrb[0].mxu0
      %v2201 = vadd.f32 %v2087, %v2200
      %v2202 = vpop.f32.mrb[0].mxu0
      %2203 = vmatprep.mubr.f32.mxu0 0.0
      %2204 = vmatmul.mubr.f32.gmra.mrb[0].mxu0 %v2105
      %v2205 = vpop.f32.mrb[0].mxu0
      %v2206 = vadd.f32 %v2088, %v2205
      %v2207 = vpop.f32.mrb[0].mxu0
      %2208 = vmatprep.mubr.f32.mxu0 0.0
      %2209 = vmatmul.mubr.f32.gmra.mrb[0].mxu0 %v2108
      %v2210 = vpop.f32.mrb[0].mxu0
      %v2211 = vadd.f32 %v2089, %v2210
      %v2212 = vpop.f32.mrb[0].mxu0
      %2213 = vmatprep.mubr.f32.mxu0 0.0
      %2214 = vmatmul.mubr.f32.gmra.mrb[0].mxu0 %v2111
      %v2215 = vpop.f32.mrb[0].mxu0
      %v2216 = vadd.f32 %v2090, %v2215
      %v2217 = vpop.f32.mrb[0].mxu0
      %2218 = vmatprep.mubr.f32.mxu0 0.0
      %2219 = vmatmul.mubr.f32.gmra.mrb[0].mxu0 %v2114
      %v2220 = vpop.f32.mrb[0].mxu0
      %v2221 = vadd.f32 %v2091, %v2220
      %v2222 = vpop.f32.mrb[0].mxu0
      %2223 = vdwg.mxu0
      %v2224 = vmax.f32 %v2186, 0.0
      %v2225 = vmax.f32 %v2191, 0.0
      %v2226 = vmax.f32 %v2196, 0.0
      %v2227 = vmax.f32 %v2201, 0.0
      %v2228 = vmax.f32 %v2206, 0.0
      %v2229 = vmax.f32 %v2211, 0.0
      %v2230 = vmax.f32 %v2216, 0.0
      %v2231 = vmax.f32 %v2221, 0.0
      %2232 = vst.msk [vmem:[%s417] sm:$0xff] %vm429, %v2224
      %2233 = vst.msk [vmem:[%s417 + $0x8] sm:$0xff] %vm429, %v2225
      %2234 = vst.msk [vmem:[%s417 + $0x10] sm:$0xff] %vm429, %v2226
      %2235 = vst.msk [vmem:[%s417 + $0x18] sm:$0xff] %vm429, %v2227
      %2236 = vst.msk [vmem:[%s417 + $0x20] sm:$0xff] %vm429, %v2228
      %2237 = vst.msk [vmem:[%s417 + $0x28] sm:$0xff] %vm429, %v2229
      %2238 = vst.msk [vmem:[%s417 + $0x30] sm:$0xff] %vm429, %v2230
      %2239 = vst.msk [vmem:[%s417 + $0x38] sm:$0xff] %vm429, %v2231
      %s2240 = smul.u32 8, %s22
      %p2241 = scmp.lt.s32.totalorder %s21, 1
      %s2242 = scalar_select %p2241, %s21, 1
      %p2243 = scmp.lt.s32.totalorder %s2240, 31
      %s2244 = scalar_select %p2243, %s2240, 31
      %s2245 = smul.addr %s2242, 32
      %s2246 = sadd.s32 %s2244, %s2245
      %s2247 = smul.addr %s2246, 8
      %s2248 = scalar_lea.vmem %s6, %s2247
      // Predicated region
      $region45: #{tpu_custom_call.1} parent=43 // pred_check
        %p2249 = pneg %p212
      $region46: #{tpu_custom_call.1} parent=43 // pred_check_branch
        %2251 = sbr.rel (%p2249) target = $region48
      $region47: #{tpu_custom_call.1} parent=43 // pred_region
        %s2252 = smul.u32 8, %s22
      $region48: #{tpu_custom_call.1} parent=43 // pred_fallthru
        _
    $region44: #{tpu_custom_call.1} parent=5 // pred_fallthru
      _
    %p2253 = scmp.le.s32.totalorder 2, %s12
    // Predicated region
    $region49: #{tpu_custom_call.1} parent=5 // pred_check
      %p2254 = pneg %p2253
    $region50: #{tpu_custom_call.1} parent=5 // pred_check_branch
      %2256 = sbr.rel (%p2254) target = $region52
    $region51: #{tpu_custom_call.1} parent=5 // pred_region
      %s2257 = ssub.s32 %s12, 2
      // Predicated region
      $region53: #{tpu_custom_call.1} parent=51 // pred_check
        %p2258 = pneg %p218
      $region54: #{tpu_custom_call.1} parent=51 // pred_check_branch
        %2260 = sbr.rel (%p2258) target = $region56
      $region55: #{tpu_custom_call.1} parent=51 // pred_region
        %s2261 = smul.u32 8, %s24
        %p2262 = scmp.lt.s32.totalorder %s23, 1
        %s2263 = scalar_select %p2262, %s23, 1
        %p2264 = scmp.lt.s32.totalorder %s2261, 31
        %s2265 = scalar_select %p2264, %s2261, 31
        %s2266 = smul.addr %s2263, 32
        %s2267 = sadd.s32 %s2265, %s2266
        %s2268 = smul.addr %s2267, 8
        %s2269 = scalar_lea.vmem %s6, %s2268
      $region56: #{tpu_custom_call.1} parent=51 // pred_fallthru
        _
    $region52: #{tpu_custom_call.1} parent=5 // pred_fallthru
      _
  $region6: #{tpu_custom_call.1} parent=0 // loop_footer
    %s16 = sadd.s32 1, %s12
  $region7: #{tpu_custom_call.1} parent=0 // loop_footer_branch
    %11 = sbr.rel target = $region3
  $region8: #{tpu_custom_call.1} parent=0 // loop_exit
    _

// kernel: tpu_custom_call.1
$region0: #{tpu_custom_call.1}
  #allocation0 [shape = 'u32[]', space=smem, size = 0x4, offset = 0x4, fixed_abs, tag = 'smem constant byte address 0x4 - core index']
  #allocation1 [shape = 'u32[144,128]{1,0:T(1,128)}', space=vmem, size = 0x12000, scoped, tag = 'internal scratch']
  #allocation2 [shape = 'f32[96,4]{1,0:T(8,128)}', space=vmem, size = 0xc000, scoped, tag = 'scratch operand']
  %s0 = inlined_call_operand.vmem [shape: f32[2,256,16], index: 0, kind: input, shape index: {}]
  %s1 = inlined_call_operand.vmem [shape: f32[2,256,16], index: 1, kind: input, shape index: {}]
  %s2 = inlined_call_operand.vmem [shape: f32[2,256,16], index: 2, kind: input, shape index: {}]
  %s3 = inlined_call_operand.vmem [shape: f32[16,4], index: 3, kind: input, shape index: {}]
  %s4 = inlined_call_operand.vmem [shape: f32[3,3,4,4], index: 4, kind: input, shape index: {}]
  %s5 = inlined_call_operand.vmem [shape: f32[4,16], index: 5, kind: input, shape index: {}]
  %s6 = inlined_call_operand.vmem [shape: f32[2,256,16], index: 6, kind: output, shape index: {}]
  %s7 = sld [smem:[#allocation0]]
  $region57: #{tpu_custom_call.1} parent=0
    _
  %s9 = ssub.s32 1, %s7
  %s10 = scalar_select 0, %s9, %s7
  loop: start=0, step=1, limit=10
  $region2: #{tpu_custom_call.1} parent=0 // loop_pre_header
    _
  $region3: #{tpu_custom_call.1} parent=0 // loop_header
    %s12 = sphi 0, %s16
    %p13 = scmp.ge.s32.totalorder %s12, 10
    %s19 = sphi 0, %s31
    %s20 = sphi 0, %s27
    %s21 = sphi 0, %s19
    %s22 = sphi 0, %s20
    %s23 = sphi 0, %s21
    %s24 = sphi 0, %s22
    %s36 = sphi 0, %s38
    %s39 = sphi 0, %s36
    %s40 = sphi 0, %s39
    %s56 = sphi 0, %s40
    %s72 = sphi 0, %s74
    %s75 = sphi 0, %s72
    %s76 = sphi 0, %s75
    %s92 = sphi 0, %s76
    %s108 = sphi 0, %s110
    %s111 = sphi 0, %s108
    %s112 = sphi 0, %s111
    %s128 = sphi 0, %s112
    %s132 = sphi 0, %s132
    %s134 = sphi 0, %s132
    %s135 = sphi 0, %s134
    %s149 = sphi 0, %s135
    %s153 = sphi 0, %s153
    %s155 = sphi 0, %s153
    %s156 = sphi 0, %s155
    %s170 = sphi 0, %s156
    %s174 = sphi 0, %s174
    %s176 = sphi 0, %s174
    %s177 = sphi 0, %s176
    %s191 = sphi 0, %s177
    %s199 = sphi 0, %s201
    %s202 = sphi 0, %s199
    %s203 = sphi 0, %s202
    %s219 = sphi 0, %s203
  $region4: #{tpu_custom_call.1} parent=0 // loop_header_branch
    %15 = sbr.rel (%p13) target = $region8
  $region5: #{tpu_custom_call.1} parent=0 // loop_body
    %s17 = ssub.s32 %s12, 1
    %s18 = ssub.s32 %s12, 2
    %s25 = sadd.s32 1, %s20
    %p26 = scmp.ge.s32.totalorder %s25, 4
    %s27 = scalar_select %p26, 0, %s25
    %s28 = sadd.s32 1, %s19
    %s29 = scalar_select %p26, %s28, %s19
    %p30 = scmp.ge.s32.totalorder %s29, 2
    %s31 = scalar_select %p30, 0, %s29
    %s32 = ssub.s32 %s19, %s31
    %s33 = ssub.s32 %s20, %s27
    %s34 = sor.u32 %s32, %s33
    %p35 = scmp.eq.s32.totalorder %s34, 0
    %s37 = sadd.s32 %s36, 1
    %s38 = scalar_select %p35, %s36, %s37
    %p41 = pneg %p35
    %p42 = scmp.eq.s32.totalorder %s12, 7
    %p43 = por %p41, %p42
    %p44 = scmp.ne.s32.totalorder %s36, %s39
    %p45 = scmp.eq.s32.totalorder %s12, 0
    %p46 = por %p44, %p45
    %p47 = scmp.ne.s32.totalorder %s36, %s39
    %p48 = scmp.eq.s32.totalorder %s17, 7
    %p49 = por %p47, %p48
    %p50 = scmp.ne.s32.totalorder %s39, %s40
    %p51 = scmp.eq.s32.totalorder %s17, 0
    %p52 = por %p50, %p51
    %p53 = scmp.ne.s32.totalorder %s39, %s40
    %p54 = scmp.eq.s32.totalorder %s18, 7
    %p55 = por %p53, %p54
    %p57 = scmp.ne.s32.totalorder %s40, %s56
    %p58 = scmp.eq.s32.totalorder %s18, 0
    %p59 = por %p57, %p58
    %s60 = smul.u32 %s20, 4
    %s61 = ssub.s32 %s60, 1
    %p62 = scmp.gt.s32.totalorder %s61, 0
    %s63 = scalar_select %p62, %s61, 0
    %s64 = smul.u32 %s27, 4
    %s65 = ssub.s32 %s64, 1
    %p66 = scmp.gt.s32.totalorder %s65, 0
    %s67 = scalar_select %p66, %s65, 0
    %s68 = ssub.s32 %s19, %s31
    %s69 = ssub.s32 %s63, %s67
    %s70 = sor.u32 %s68, %s69
    %p71 = scmp.eq.s32.totalorder %s70, 0
    %s73 = sadd.s32 %s72, 1
    %s74 = scalar_select %p71, %s72, %s73
    %p77 = pneg %p71
    %p78 = scmp.eq.s32.totalorder %s12, 7
    %p79 = por %p77, %p78
    %p80 = scmp.ne.s32.totalorder %s72, %s75
    %p81 = scmp.eq.s32.totalorder %s12, 0
    %p82 = por %p80, %p81
    %p83 = scmp.ne.s32.totalorder %s72, %s75
    %p84 = scmp.eq.s32.totalorder %s17, 7
    %p85 = por %p83, %p84
    %p86 = scmp.ne.s32.totalorder %s75, %s76
    %p87 = scmp.eq.s32.totalorder %s17, 0
    %p88 = por %p86, %p87
    %p89 = scmp.ne.s32.totalorder %s75, %s76
    %p90 = scmp.eq.s32.totalorder %s18, 7
    %p91 = por %p89, %p90
    %p93 = scmp.ne.s32.totalorder %s76, %s92
    %p94 = scmp.eq.s32.totalorder %s18, 0
    %p95 = por %p93, %p94
    %s96 = sadd.s32 %s20, 1
    %s97 = smul.u32 %s96, 4
    %p98 = scmp.lt.s32.totalorder %s97, 15
    %s99 = scalar_select %p98, %s97, 15
    %s100 = sadd.s32 %s27, 1
    %s101 = smul.u32 %s100, 4
    %p102 = scmp.lt.s32.totalorder %s101, 15
    %s103 = scalar_select %p102, %s101, 15
    %s104 = ssub.s32 %s19, %s31
    %s105 = ssub.s32 %s99, %s103
    %s106 = sor.u32 %s104, %s105
    %p107 = scmp.eq.s32.totalorder %s106, 0
    %s109 = sadd.s32 %s108, 1
    %s110 = scalar_select %p107, %s108, %s109
    %p113 = pneg %p107
    %p114 = scmp.eq.s32.totalorder %s12, 7
    %p115 = por %p113, %p114
    %p116 = scmp.ne.s32.totalorder %s108, %s111
    %p117 = scmp.eq.s32.totalorder %s12, 0
    %p118 = por %p116, %p117
    %p119 = scmp.ne.s32.totalorder %s108, %s111
    %p120 = scmp.eq.s32.totalorder %s17, 7
    %p121 = por %p119, %p120
    %p122 = scmp.ne.s32.totalorder %s111, %s112
    %p123 = scmp.eq.s32.totalorder %s17, 0
    %p124 = por %p122, %p123
    %p125 = scmp.ne.s32.totalorder %s111, %s112
    %p126 = scmp.eq.s32.totalorder %s18, 7
    %p127 = por %p125, %p126
    %p129 = scmp.ne.s32.totalorder %s112, %s128
    %p130 = scmp.eq.s32.totalorder %s18, 0
    %p131 = por %p129, %p130
    %s133 = sadd.s32 %s132, 1
    %p136 = scmp.eq.s32.totalorder %s12, 7
    %p137 = scmp.ne.s32.totalorder %s132, %s134
    %p138 = scmp.eq.s32.totalorder %s12, 0
    %p139 = por %p137, %p138
    %p140 = scmp.ne.s32.totalorder %s132, %s134
    %p141 = scmp.eq.s32.totalorder %s17, 7
    %p142 = por %p140, %p141
    %p143 = scmp.ne.s32.totalorder %s134, %s135
    %p144 = scmp.eq.s32.totalorder %s17, 0
    %p145 = por %p143, %p144
    %p146 = scmp.ne.s32.totalorder %s134, %s135
    %p147 = scmp.eq.s32.totalorder %s18, 7
    %p148 = por %p146, %p147
    %p150 = scmp.ne.s32.totalorder %s135, %s149
    %p151 = scmp.eq.s32.totalorder %s18, 0
    %p152 = por %p150, %p151
    %s154 = sadd.s32 %s153, 1
    %p157 = scmp.eq.s32.totalorder %s12, 7
    %p158 = scmp.ne.s32.totalorder %s153, %s155
    %p159 = scmp.eq.s32.totalorder %s12, 0
    %p160 = por %p158, %p159
    %p161 = scmp.ne.s32.totalorder %s153, %s155
    %p162 = scmp.eq.s32.totalorder %s17, 7
    %p163 = por %p161, %p162
    %p164 = scmp.ne.s32.totalorder %s155, %s156
    %p165 = scmp.eq.s32.totalorder %s17, 0
    %p166 = por %p164, %p165
    %p167 = scmp.ne.s32.totalorder %s155, %s156
    %p168 = scmp.eq.s32.totalorder %s18, 7
    %p169 = por %p167, %p168
    %p171 = scmp.ne.s32.totalorder %s156, %s170
    %p172 = scmp.eq.s32.totalorder %s18, 0
    %p173 = por %p171, %p172
    %s175 = sadd.s32 %s174, 1
    %p178 = scmp.eq.s32.totalorder %s12, 7
    %p179 = scmp.ne.s32.totalorder %s174, %s176
    %p180 = scmp.eq.s32.totalorder %s12, 0
    %p181 = por %p179, %p180
    %p182 = scmp.ne.s32.totalorder %s174, %s176
    %p183 = scmp.eq.s32.totalorder %s17, 7
    %p184 = por %p182, %p183
    %p185 = scmp.ne.s32.totalorder %s176, %s177
    %p186 = scmp.eq.s32.totalorder %s17, 0
    %p187 = por %p185, %p186
    %p188 = scmp.ne.s32.totalorder %s176, %s177
    %p189 = scmp.eq.s32.totalorder %s18, 7
    %p190 = por %p188, %p189
    %p192 = scmp.ne.s32.totalorder %s177, %s191
    %p193 = scmp.eq.s32.totalorder %s18, 0
    %p194 = por %p192, %p193
    %s195 = ssub.s32 %s19, %s31
    %s196 = ssub.s32 %s20, %s27
    %s197 = sor.u32 %s195, %s196
    %p198 = scmp.eq.s32.totalorder %s197, 0
    %s200 = sadd.s32 %s199, 1
    %s201 = scalar_select %p198, %s199, %s200
    %p204 = pneg %p198
    %p205 = scmp.eq.s32.totalorder %s12, 7
    %p206 = por %p204, %p205
    %p207 = scmp.ne.s32.totalorder %s199, %s202
    %p208 = scmp.eq.s32.totalorder %s12, 0
    %p209 = por %p207, %p208
    %p210 = scmp.ne.s32.totalorder %s199, %s202
    %p211 = scmp.eq.s32.totalorder %s17, 7
    %p212 = por %p210, %p211
    %p213 = scmp.ne.s32.totalorder %s202, %s203
    %p214 = scmp.eq.s32.totalorder %s17, 0
    %p215 = por %p213, %p214
    %p216 = scmp.ne.s32.totalorder %s202, %s203
    %p217 = scmp.eq.s32.totalorder %s18, 7
    %p218 = por %p216, %p217
    %p220 = scmp.ne.s32.totalorder %s203, %s219
    %p221 = scmp.eq.s32.totalorder %s18, 0
    %p222 = por %p220, %p221
    %p223 = scmp.le.s32.totalorder 1, %s12
    %p224 = scmp.lt.s32.totalorder %s12, 9
    %p225 = pnand %p223, %p224
    %p226 = pneg %p225
    // Predicated region
    $region9: #{tpu_custom_call.1} parent=5 // pred_check
      _
    $region10: #{tpu_custom_call.1} parent=5 // pred_check_branch
      %228 = sbr.rel (%p225) target = $region12
    $region11: #{tpu_custom_call.1} parent=5 // pred_region
      %s229 = ssub.s32 %s12, 1
      // Predicated region
      $region13: #{tpu_custom_call.1} parent=11 // pred_check
        %p230 = pneg %p145
      $region14: #{tpu_custom_call.1} parent=11 // pred_check_branch
        %232 = sbr.rel (%p230) target = $region16
      $region15: #{tpu_custom_call.1} parent=11 // pred_region
        _
      $region16: #{tpu_custom_call.1} parent=11 // pred_fallthru
        _
      // Predicated region
      $region17: #{tpu_custom_call.1} parent=11 // pred_check
        %p233 = pneg %p166
      $region18: #{tpu_custom_call.1} parent=11 // pred_check_branch
        %235 = sbr.rel (%p233) target = $region20
      $region19: #{tpu_custom_call.1} parent=11 // pred_region
        _
      $region20: #{tpu_custom_call.1} parent=11 // pred_fallthru
        _
      // Predicated region
      $region21: #{tpu_custom_call.1} parent=11 // pred_check
        %p236 = pneg %p187
      $region22: #{tpu_custom_call.1} parent=11 // pred_check_branch
        %238 = sbr.rel (%p236) target = $region24
      $region23: #{tpu_custom_call.1} parent=11 // pred_region
        _
      $region24: #{tpu_custom_call.1} parent=11 // pred_fallthru
        _
    $region12: #{tpu_custom_call.1} parent=5 // pred_fallthru
      _
    %p239 = scmp.lt.s32.totalorder %s12, 8
    // Predicated region
    $region25: #{tpu_custom_call.1} parent=5 // pred_check
      %p240 = pneg %p239
    $region26: #{tpu_custom_call.1} parent=5 // pred_check_branch
      %242 = sbr.rel (%p240) target = $region28
    $region27: #{tpu_custom_call.1} parent=5 // pred_region
      // Predicated region
      $region29: #{tpu_custom_call.1} parent=27 // pred_check
        %p243 = pneg %p46
      $region30: #{tpu_custom_call.1} parent=27 // pred_check_branch
        %245 = sbr.rel (%p243) target = $region32
      $region31: #{tpu_custom_call.1} parent=27 // pred_region
        %s246 = smul.u32 8, %s20
        %p247 = scmp.lt.s32.totalorder %s19, 1
        %s248 = scalar_select %p247, %s19, 1
        %p249 = scmp.lt.s32.totalorder %s246, 31
        %s250 = scalar_select %p249, %s246, 31
        %s251 = smul.addr %s248, 32
        %s252 = sadd.s32 %s250, %s251
        %s253 = smul.addr %s252, 8
        %s254 = scalar_lea.vmem %s0, %s253
        %s255 = smul.u32 8, %s20
      $region32: #{tpu_custom_call.1} parent=27 // pred_fallthru
        _
      // Predicated region
      $region33: #{tpu_custom_call.1} parent=27 // pred_check
        %p256 = pneg %p82
      $region34: #{tpu_custom_call.1} parent=27 // pred_check_branch
        %258 = sbr.rel (%p256) target = $region36
      $region35: #{tpu_custom_call.1} parent=27 // pred_region
        %s259 = smul.u32 %s20, 4
        %s260 = ssub.s32 %s259, 1
        %p261 = scmp.gt.s32.totalorder %s260, 0
        %s262 = scalar_select %p261, %s260, 0
        %s263 = smul.u32 2, %s262
        %p264 = scmp.lt.s32.totalorder %s19, 1
        %s265 = scalar_select %p264, %s19, 1
        %p266 = scmp.lt.s32.totalorder %s263, 31
        %s267 = scalar_select %p266, %s263, 31
        %s268 = smul.addr %s265, 32
        %s269 = sadd.s32 %s267, %s268
        %s270 = smul.addr %s269, 8
        %s271 = scalar_lea.vmem %s1, %s270
        %s272 = smul.u32 %s20, 4
        %s273 = ssub.s32 %s272, 1
        %p274 = scmp.gt.s32.totalorder %s273, 0
        %s275 = scalar_select %p274, %s273, 0
        %s276 = smul.u32 2, %s275
      $region36: #{tpu_custom_call.1} parent=27 // pred_fallthru
        _
      // Predicated region
      $region37: #{tpu_custom_call.1} parent=27 // pred_check
        %p277 = pneg %p118
      $region38: #{tpu_custom_call.1} parent=27 // pred_check_branch
        %279 = sbr.rel (%p277) target = $region40
      $region39: #{tpu_custom_call.1} parent=27 // pred_region
        %s280 = sadd.s32 %s20, 1
        %s281 = smul.u32 %s280, 4
        %p282 = scmp.lt.s32.totalorder %s281, 15
        %s283 = scalar_select %p282, %s281, 15
        %s284 = smul.u32 2, %s283
        %p285 = scmp.lt.s32.totalorder %s19, 1
        %s286 = scalar_select %p285, %s19, 1
        %p287 = scmp.lt.s32.totalorder %s284, 31
        %s288 = scalar_select %p287, %s284, 31
        %s289 = smul.addr %s286, 32
        %s290 = sadd.s32 %s288, %s289
        %s291 = smul.addr %s290, 8
        %s292 = scalar_lea.vmem %s2, %s291
        %s293 = sadd.s32 %s20, 1
        %s294 = smul.u32 %s293, 4
        %p295 = scmp.lt.s32.totalorder %s294, 15
        %s296 = scalar_select %p295, %s294, 15
        %s297 = smul.u32 2, %s296
      $region40: #{tpu_custom_call.1} parent=27 // pred_fallthru
        _
    $region28: #{tpu_custom_call.1} parent=5 // pred_fallthru
      _
    %p298 = scmp.le.s32.totalorder 1, %s12
    %p299 = scmp.lt.s32.totalorder %s12, 9
    %p300 = pnand %p298, %p299
    %p301 = pneg %p300
    // Predicated region
    $region41: #{tpu_custom_call.1} parent=5 // pred_check
      _
    $region42: #{tpu_custom_call.1} parent=5 // pred_check_branch
      %303 = sbr.rel (%p300) target = $region44
    $region43: #{tpu_custom_call.1} parent=5 // pred_region
      %s304 = ssub.s32 %s12, 1
      %s305 = smul.u32 8, %s22
      %p306 = scmp.lt.s32.totalorder %s21, 1
      %s307 = scalar_select %p306, %s21, 1
      %p308 = scmp.lt.s32.totalorder %s305, 31
      %s309 = scalar_select %p308, %s305, 31
      %s310 = smul.addr %s307, 32
      %s311 = sadd.s32 %s309, %s310
      %s312 = smul.addr %s311, 8
      %s313 = scalar_lea.vmem %s0, %s312
      %p314 = pneg %p52
      %p315 = pneg %p49
      %s316 = smul.u32 %s22, 4
      %s317 = ssub.s32 %s316, 1
      %p318 = scmp.gt.s32.totalorder %s317, 0
      %s319 = scalar_select %p318, %s317, 0
      %s320 = smul.u32 2, %s319
      %p321 = scmp.lt.s32.totalorder %s21, 1
      %s322 = scalar_select %p321, %s21, 1
      %p323 = scmp.lt.s32.totalorder %s320, 31
      %s324 = scalar_select %p323, %s320, 31
      %s325 = smul.addr %s322, 32
      %s326 = sadd.s32 %s324, %s325
      %s327 = smul.addr %s326, 8
      %s328 = scalar_lea.vmem %s1, %s327
      %p329 = pneg %p88
      %p330 = pneg %p85
      %s331 = sadd.s32 %s22, 1
      %s332 = smul.u32 %s331, 4
      %p333 = scmp.lt.s32.totalorder %s332, 15
      %s334 = scalar_select %p333, %s332, 15
      %s335 = smul.u32 2, %s334
      %p336 = scmp.lt.s32.totalorder %s21, 1
      %s337 = scalar_select %p336, %s21, 1
      %p338 = scmp.lt.s32.totalorder %s335, 31
      %s339 = scalar_select %p338, %s335, 31
      %s340 = smul.addr %s337, 32
      %s341 = sadd.s32 %s339, %s340
      %s342 = smul.addr %s341, 8
      %s343 = scalar_lea.vmem %s2, %s342
      %p344 = pneg %p124
      %p345 = pneg %p121
      %p346 = pneg %p145
      %p347 = pneg %p142
      %p348 = pneg %p166
      %p349 = pneg %p163
      %p350 = pneg %p187
      %p351 = pneg %p184
      %p352 = pneg %p215
      %p353 = pneg %p212
      %s354 = smul.u32 8, %s22
      %p355 = scmp.lt.s32.totalorder %s21, 1
      %s356 = scalar_select %p355, %s21, 1
      %p357 = scmp.lt.s32.totalorder %s354, 31
      %s358 = scalar_select %p357, %s354, 31
      %s359 = smul.addr %s356, 32
      %s360 = sadd.s32 %s358, %s359
      %s361 = smul.addr %s360, 8
      %s362 = scalar_lea.vmem %s6, %s361
      %s363 = smul.u32 8, %s22
      %p364 = scmp.lt.s32.totalorder %s21, 1
      %s365 = scalar_select %p364, %s21, 1
      %p366 = scmp.lt.s32.totalorder %s363, 31
      %s367 = scalar_select %p366, %s363, 31
      %s368 = smul.addr %s365, 32
      %s369 = sadd.s32 %s367, %s368
      %s370 = smul.addr %s369, 8
      %s371 = scalar_lea.vmem %s0, %s370
      %s372 = smul.u32 8, %s22
      %s373 = smul.u32 %s22, 4
      %s374 = ssub.s32 %s373, 1
      %p375 = scmp.gt.s32.totalorder %s374, 0
      %s376 = scalar_select %p375, %s374, 0
      %s377 = smul.u32 2, %s376
      %p378 = scmp.lt.s32.totalorder %s21, 1
      %s379 = scalar_select %p378, %s21, 1
      %p380 = scmp.lt.s32.totalorder %s377, 31
      %s381 = scalar_select %p380, %s377, 31
      %s382 = smul.addr %s379, 32
      %s383 = sadd.s32 %s381, %s382
      %s384 = smul.addr %s383, 8
      %s385 = scalar_lea.vmem %s1, %s384
      %s386 = smul.u32 %s22, 4
      %s387 = ssub.s32 %s386, 1
      %p388 = scmp.gt.s32.totalorder %s387, 0
      %s389 = scalar_select %p388, %s387, 0
      %s390 = smul.u32 2, %s389
      %s391 = sadd.s32 %s22, 1
      %s392 = smul.u32 %s391, 4
      %p393 = scmp.lt.s32.totalorder %s392, 15
      %s394 = scalar_select %p393, %s392, 15
      %s395 = smul.u32 2, %s394
      %p396 = scmp.lt.s32.totalorder %s21, 1
      %s397 = scalar_select %p396, %s21, 1
      %p398 = scmp.lt.s32.totalorder %s395, 31
      %s399 = scalar_select %p398, %s395, 31
      %s400 = smul.addr %s397, 32
      %s401 = sadd.s32 %s399, %s400
      %s402 = smul.addr %s401, 8
      %s403 = scalar_lea.vmem %s2, %s402
      %s404 = sadd.s32 %s22, 1
      %s405 = smul.u32 %s404, 4
      %p406 = scmp.lt.s32.totalorder %s405, 15
      %s407 = scalar_select %p406, %s405, 15
      %s408 = smul.u32 2, %s407
      %s409 = smul.u32 8, %s22
      %p410 = scmp.lt.s32.totalorder %s21, 1
      %s411 = scalar_select %p410, %s21, 1
      %p412 = scmp.lt.s32.totalorder %s409, 31
      %s413 = scalar_select %p412, %s409, 31
      %s414 = smul.addr %s411, 32
      %s415 = sadd.s32 %s413, %s414
      %s416 = smul.addr %s415, 8
      %s417 = scalar_lea.vmem %s6, %s416
      %s418 = smul.u32 8, %s22
      %v419 = vld [vmem:[%s3] sm:$0xff]
      %v420 = vld [vmem:[%s3 + $0x8] sm:$0xff]
      %v421 = vld [vmem:[%s371] sm:$0xff]
      %v422 = vld [vmem:[%s371 + $0x8] sm:$0xff]
      %v423 = vld [vmem:[%s371 + $0x10] sm:$0xff]
      %v424 = vld [vmem:[%s371 + $0x18] sm:$0xff]
      %v425 = vld [vmem:[%s371 + $0x20] sm:$0xff]
      %v426 = vld [vmem:[%s371 + $0x28] sm:$0xff]
      %v427 = vld [vmem:[%s371 + $0x30] sm:$0xff]
      %v428 = vld [vmem:[%s371 + $0x38] sm:$0xff]
      %vm429 = vcmask 130048
      %v431 = vsel %vm429, %v421, 0
      %v434 = vsel %vm429, %v422, 0
      %v437 = vsel %vm429, %v423, 0
      %v440 = vsel %vm429, %v424, 0
      %v443 = vsel %vm429, %v425, 0
      %v446 = vsel %vm429, %v426, 0
      %v449 = vsel %vm429, %v427, 0
      %v452 = vsel %vm429, %v428, 0
      %454 = vmatprep.subr.mxu0 0.0
      %455 = vmatpush1.msra.mxu0 %v419
      %456 = vmatprep.subr.mxu0 0.0
      %457 = vmatpush1.msra.mxu0 %v420
      %458 = vmatprep.subr.mxu0 0.0
      %459 = vmatpush1.msra.mxu0 0.0
      %460 = vmatprep.subr.mxu0 0.0
      %461 = vmatpush1.msra.mxu0 0.0
      %462 = vmatprep.subr.mxu0 0.0
      %463 = vmatpush1.msra.mxu0 0.0
      %464 = vmatprep.subr.mxu0 0.0
      %465 = vmatpush1.msra.mxu0 0.0
      %466 = vmatprep.subr.mxu0 0.0
      %467 = vmatpush1.msra.mxu0 0.0
      %468 = vmatprep.subr.mxu0 0.0
      %469 = vmatpush1.msra.mxu0 0.0
      %470 = vmatprep.subr.mxu0 0.0
      %471 = vmatpush1.msra.mxu0 0.0
      %472 = vmatprep.subr.mxu0 0.0
      %473 = vmatpush1.msra.mxu0 0.0
      %474 = vmatprep.subr.mxu0 0.0
      %475 = vmatpush1.msra.mxu0 0.0
      %476 = vmatprep.subr.mxu0 0.0
      %477 = vmatpush1.msra.mxu0 0.0
      %478 = vmatprep.subr.mxu0 0.0
      %479 = vmatpush1.msra.mxu0 0.0
      %480 = vmatprep.subr.mxu0 0.0
      %481 = vmatpush1.msra.mxu0 0.0
      %482 = vmatprep.subr.mxu0 0.0
      %483 = vmatpush1.msra.mxu0 0.0
      %484 = vmatprep.subr.mxu0 0.0
      %485 = vmatpush1.msra.mxu0 0.0
      %486 = vmatprep.subr.mxu0 0.0
      %487 = vmatpush1.msra.mxu0 0.0
      %488 = vmatprep.subr.mxu0 0.0
      %489 = vmatpush1.msra.mxu0 0.0
      %490 = vmatprep.subr.mxu0 0.0
      %491 = vmatpush1.msra.mxu0 0.0
      %492 = vmatprep.subr.mxu0 0.0
      %493 = vmatpush1.msra.mxu0 0.0
      %494 = vmatprep.subr.mxu0 0.0
      %495 = vmatpush1.msra.mxu0 0.0
      %496 = vmatprep.subr.mxu0 0.0
      %497 = vmatpush1.msra.mxu0 0.0
      %498 = vmatprep.subr.mxu0 0.0
      %499 = vmatpush1.msra.mxu0 0.0
      %500 = vmatprep.subr.mxu0 0.0
      %501 = vmatpush1.msra.mxu0 0.0
      %502 = vmatprep.subr.mxu0 0.0
      %503 = vmatpush1.msra.mxu0 0.0
      %504 = vmatprep.subr.mxu0 0.0
      %505 = vmatpush1.msra.mxu0 0.0
      %506 = vmatprep.subr.mxu0 0.0
      %507 = vmatpush1.msra.mxu0 0.0
      %508 = vmatprep.subr.mxu0 0.0
      %509 = vmatpush1.msra.mxu0 0.0
      %510 = vmatprep.subr.mxu0 0.0
      %511 = vmatpush1.msra.mxu0 0.0
      %512 = vmatprep.subr.mxu0 0.0
      %513 = vmatpush1.msra.mxu0 0.0
      %514 = vmatprep.subr.mxu0 0.0
      %515 = vmatpush1.msra.mxu0 0.0
      %516 = vmatprep.subr.mxu0 0.0
      %517 = vmatpush1.msra.mxu0 0.0
      %518 = vmatprep.mubr.f32.mxu0 0.0
      %519 = vmatmul.mubr.f32.gmra.mrb[0].mxu0 %v431
      %v520 = vpop.f32.mrb[0].mxu0
      %v521 = vadd.f32 0.0, %v520
      %v522 = vpop.f32.mrb[0].mxu0
      %523 = vmatprep.mubr.f32.mxu0 0.0
      %524 = vmatmul.mubr.f32.gmra.mrb[0].mxu0 %v434
      %v525 = vpop.f32.mrb[0].mxu0
      %v526 = vadd.f32 0.0, %v525
      %v527 = vpop.f32.mrb[0].mxu0
      %528 = vmatprep.mubr.f32.mxu0 0.0
      %529 = vmatmul.mubr.f32.gmra.mrb[0].mxu0 %v437
      %v530 = vpop.f32.mrb[0].mxu0
      %v531 = vadd.f32 0.0, %v530
      %v532 = vpop.f32.mrb[0].mxu0
      %533 = vmatprep.mubr.f32.mxu0 0.0
      %534 = vmatmul.mubr.f32.gmra.mrb[0].mxu0 %v440
      %v535 = vpop.f32.mrb[0].mxu0
      %v536 = vadd.f32 0.0, %v535
      %v537 = vpop.f32.mrb[0].mxu0
      %538 = vmatprep.mubr.f32.mxu0 0.0
      %539 = vmatmul.mubr.f32.gmra.mrb[0].mxu0 %v443
      %v540 = vpop.f32.mrb[0].mxu0
      %v541 = vadd.f32 0.0, %v540
      %v542 = vpop.f32.mrb[0].mxu0
      %543 = vmatprep.mubr.f32.mxu0 0.0
      %544 = vmatmul.mubr.f32.gmra.mrb[0].mxu0 %v446
      %v545 = vpop.f32.mrb[0].mxu0
      %v546 = vadd.f32 0.0, %v545
      %v547 = vpop.f32.mrb[0].mxu0
      %548 = vmatprep.mubr.f32.mxu0 0.0
      %549 = vmatmul.mubr.f32.gmra.mrb[0].mxu0 %v449
      %v550 = vpop.f32.mrb[0].mxu0
      %v551 = vadd.f32 0.0, %v550
      %v552 = vpop.f32.mrb[0].mxu0
      %553 = vmatprep.mubr.f32.mxu0 0.0
      %554 = vmatmul.mubr.f32.gmra.mrb[0].mxu0 %v452
      %v555 = vpop.f32.mrb[0].mxu0
      %v556 = vadd.f32 0.0, %v555
      %v557 = vpop.f32.mrb[0].mxu0
      %558 = vdwg.mxu0
      %v559 = vmax.f32 %v521, 0.0
      %v560 = vmax.f32 %v526, 0.0
      %v561 = vmax.f32 %v531, 0.0
      %v562 = vmax.f32 %v536, 0.0
      %v563 = vmax.f32 %v541, 0.0
      %v564 = vmax.f32 %v546, 0.0
      %v565 = vmax.f32 %v551, 0.0
      %v566 = vmax.f32 %v556, 0.0
      %vm567 = vcmask 31744
      %568 = vst.msk [vmem:[#allocation2 + $0x10] sm:$0xff] %vm567, %v559
      %569 = vst.msk [vmem:[#allocation2 + $0x18] sm:$0xff] %vm567, %v560
      %570 = vst.msk [vmem:[#allocation2 + $0x20] sm:$0xff] %vm567, %v561
      %571 = vst.msk [vmem:[#allocation2 + $0x28] sm:$0xff] %vm567, %v562
      %572 = vst.msk [vmem:[#allocation2 + $0x30] sm:$0xff] %vm567, %v563
      %573 = vst.msk [vmem:[#allocation2 + $0x38] sm:$0xff] %vm567, %v564
      %574 = vst.msk [vmem:[#allocation2 + $0x40] sm:$0xff] %vm567, %v565
      %575 = vst.msk [vmem:[#allocation2 + $0x48] sm:$0xff] %vm567, %v566
      %p576 = scmp.gt.s32.totalorder %s22, 0
      %s577 = scalar_select %p576, 1, 0
      %s578 = scvt.s32.f32 %s577
      %p579 = scmp.lt.s32.totalorder %s22, 3
      %s580 = scalar_select %p579, 1, 0
      %s581 = scvt.s32.f32 %s580
      %v582 = vld [vmem:[%s385] sm:$0xff]
      %v583 = vld [vmem:[%s385 + $0x8] sm:$0xff]
      %v585 = vsel %vm429, %v582, 0
      %v588 = vsel %vm429, %v583, 0
      %590 = vmatprep.subr.mxu0 0.0
      %591 = vmatpush1.msra.mxu0 %v419
      %592 = vmatprep.subr.mxu0 0.0
      %593 = vmatpush1.msra.mxu0 %v420
      %594 = vmatprep.subr.mxu0 0.0
      %595 = vmatpush1.msra.mxu0 0.0
      %596 = vmatprep.subr.mxu0 0.0
      %597 = vmatpush1.msra.mxu0 0.0
      %598 = vmatprep.subr.mxu0 0.0
      %599 = vmatpush1.msra.mxu0 0.0
      %600 = vmatprep.subr.mxu0 0.0
      %601 = vmatpush1.msra.mxu0 0.0
      %602 = vmatprep.subr.mxu0 0.0
      %603 = vmatpush1.msra.mxu0 0.0
      %604 = vmatprep.subr.mxu0 0.0
      %605 = vmatpush1.msra.mxu0 0.0
      %606 = vmatprep.subr.mxu0 0.0
      %607 = vmatpush1.msra.mxu0 0.0
      %608 = vmatprep.subr.mxu0 0.0
      %609 = vmatpush1.msra.mxu0 0.0
      %610 = vmatprep.subr.mxu0 0.0
      %611 = vmatpush1.msra.mxu0 0.0
      %612 = vmatprep.subr.mxu0 0.0
      %613 = vmatpush1.msra.mxu0 0.0
      %614 = vmatprep.subr.mxu0 0.0
      %615 = vmatpush1.msra.mxu0 0.0
      %616 = vmatprep.subr.mxu0 0.0
      %617 = vmatpush1.msra.mxu0 0.0
      %618 = vmatprep.subr.mxu0 0.0
      %619 = vmatpush1.msra.mxu0 0.0
      %620 = vmatprep.subr.mxu0 0.0
      %621 = vmatpush1.msra.mxu0 0.0
      %622 = vmatprep.subr.mxu0 0.0
      %623 = vmatpush1.msra.mxu0 0.0
      %624 = vmatprep.subr.mxu0 0.0
      %625 = vmatpush1.msra.mxu0 0.0
      %626 = vmatprep.subr.mxu0 0.0
      %627 = vmatpush1.msra.mxu0 0.0
      %628 = vmatprep.subr.mxu0 0.0
      %629 = vmatpush1.msra.mxu0 0.0
      %630 = vmatprep.subr.mxu0 0.0
      %631 = vmatpush1.msra.mxu0 0.0
      %632 = vmatprep.subr.mxu0 0.0
      %633 = vmatpush1.msra.mxu0 0.0
      %634 = vmatprep.subr.mxu0 0.0
      %635 = vmatpush1.msra.mxu0 0.0
      %636 = vmatprep.subr.mxu0 0.0
      %637 = vmatpush1.msra.mxu0 0.0
      %638 = vmatprep.subr.mxu0 0.0
      %639 = vmatpush1.msra.mxu0 0.0
      %640 = vmatprep.subr.mxu0 0.0
      %641 = vmatpush1.msra.mxu0 0.0
      %642 = vmatprep.subr.mxu0 0.0
      %643 = vmatpush1.msra.mxu0 0.0
      %644 = vmatprep.subr.mxu0 0.0
      %645 = vmatpush1.msra.mxu0 0.0
      %646 = vmatprep.subr.mxu0 0.0
      %647 = vmatpush1.msra.mxu0 0.0
      %648 = vmatprep.subr.mxu0 0.0
      %649 = vmatpush1.msra.mxu0 0.0
      %650 = vmatprep.subr.mxu0 0.0
      %651 = vmatpush1.msra.mxu0 0.0
      %652 = vmatprep.subr.mxu0 0.0
      %653 = vmatpush1.msra.mxu0 0.0
      %654 = vmatprep.mubr.f32.mxu0 0.0
      %655 = vmatmul.mubr.f32.gmra.mrb[0].mxu0 %v585
      %v656 = vpop.f32.mrb[0].mxu0
      %v657 = vadd.f32 0.0, %v656
      %v658 = vpop.f32.mrb[0].mxu0
      %659 = vmatprep.mubr.f32.mxu0 0.0
      %660 = vmatmul.mubr.f32.gmra.mrb[0].mxu0 %v588
      %v661 = vpop.f32.mrb[0].mxu0
      %v662 = vadd.f32 0.0, %v661
      %v663 = vpop.f32.mrb[0].mxu0
      %664 = vdwg.mxu0
      %v665 = vmax.f32 %v657, 0.0
      %v666 = vmax.f32 %v662, 0.0
      %v667 = vstv %s578
      %v668 = vmul.f32 %v665, %v667
      %v669 = vmul.f32 %v666, %v667
      %670 = vst.msk [vmem:[#allocation2] sm:$0xff] %vm567, %v668
      %671 = vst.msk [vmem:[#allocation2 + $0x8] sm:$0xff] %vm567, %v669
      %v672 = vld [vmem:[%s403] sm:$0xff]
      %v673 = vld [vmem:[%s403 + $0x8] sm:$0xff]
      %v675 = vsel %vm429, %v672, 0
      %v678 = vsel %vm429, %v673, 0
      %680 = vmatprep.subr.mxu0 0.0
      %681 = vmatpush1.msra.mxu0 %v419
      %682 = vmatprep.subr.mxu0 0.0
      %683 = vmatpush1.msra.mxu0 %v420
      %684 = vmatprep.subr.mxu0 0.0
      %685 = vmatpush1.msra.mxu0 0.0
      %686 = vmatprep.subr.mxu0 0.0
      %687 = vmatpush1.msra.mxu0 0.0
      %688 = vmatprep.subr.mxu0 0.0
      %689 = vmatpush1.msra.mxu0 0.0
      %690 = vmatprep.subr.mxu0 0.0
      %691 = vmatpush1.msra.mxu0 0.0
      %692 = vmatprep.subr.mxu0 0.0
      %693 = vmatpush1.msra.mxu0 0.0
      %694 = vmatprep.subr.mxu0 0.0
      %695 = vmatpush1.msra.mxu0 0.0
      %696 = vmatprep.subr.mxu0 0.0
      %697 = vmatpush1.msra.mxu0 0.0
      %698 = vmatprep.subr.mxu0 0.0
      %699 = vmatpush1.msra.mxu0 0.0
      %700 = vmatprep.subr.mxu0 0.0
      %701 = vmatpush1.msra.mxu0 0.0
      %702 = vmatprep.subr.mxu0 0.0
      %703 = vmatpush1.msra.mxu0 0.0
      %704 = vmatprep.subr.mxu0 0.0
      %705 = vmatpush1.msra.mxu0 0.0
      %706 = vmatprep.subr.mxu0 0.0
      %707 = vmatpush1.msra.mxu0 0.0
      %708 = vmatprep.subr.mxu0 0.0
      %709 = vmatpush1.msra.mxu0 0.0
      %710 = vmatprep.subr.mxu0 0.0
      %711 = vmatpush1.msra.mxu0 0.0
      %712 = vmatprep.subr.mxu0 0.0
      %713 = vmatpush1.msra.mxu0 0.0
      %714 = vmatprep.subr.mxu0 0.0
      %715 = vmatpush1.msra.mxu0 0.0
      %716 = vmatprep.subr.mxu0 0.0
      %717 = vmatpush1.msra.mxu0 0.0
      %718 = vmatprep.subr.mxu0 0.0
      %719 = vmatpush1.msra.mxu0 0.0
      %720 = vmatprep.subr.mxu0 0.0
      %721 = vmatpush1.msra.mxu0 0.0
      %722 = vmatprep.subr.mxu0 0.0
      %723 = vmatpush1.msra.mxu0 0.0
      %724 = vmatprep.subr.mxu0 0.0
      %725 = vmatpush1.msra.mxu0 0.0
      %726 = vmatprep.subr.mxu0 0.0
      %727 = vmatpush1.msra.mxu0 0.0
      %728 = vmatprep.subr.mxu0 0.0
      %729 = vmatpush1.msra.mxu0 0.0
      %730 = vmatprep.subr.mxu0 0.0
      %731 = vmatpush1.msra.mxu0 0.0
      %732 = vmatprep.subr.mxu0 0.0
      %733 = vmatpush1.msra.mxu0 0.0
      %734 = vmatprep.subr.mxu0 0.0
      %735 = vmatpush1.msra.mxu0 0.0
      %736 = vmatprep.subr.mxu0 0.0
      %737 = vmatpush1.msra.mxu0 0.0
      %738 = vmatprep.subr.mxu0 0.0
      %739 = vmatpush1.msra.mxu0 0.0
      %740 = vmatprep.subr.mxu0 0.0
      %741 = vmatpush1.msra.mxu0 0.0
      %742 = vmatprep.subr.mxu0 0.0
      %743 = vmatpush1.msra.mxu0 0.0
      %744 = vmatprep.mubr.f32.mxu0 0.0
      %745 = vmatmul.mubr.f32.gmra.mrb[0].mxu0 %v675
      %v746 = vpop.f32.mrb[0].mxu0
      %v747 = vadd.f32 0.0, %v746
      %v748 = vpop.f32.mrb[0].mxu0
      %749 = vmatprep.mubr.f32.mxu0 0.0
      %750 = vmatmul.mubr.f32.gmra.mrb[0].mxu0 %v678
      %v751 = vpop.f32.mrb[0].mxu0
      %v752 = vadd.f32 0.0, %v751
      %v753 = vpop.f32.mrb[0].mxu0
      %754 = vdwg.mxu0
      %v755 = vmax.f32 %v747, 0.0
      %v756 = vmax.f32 %v752, 0.0
      %v757 = vstv %s581
      %v758 = vmul.f32 %v755, %v757
      %v759 = vmul.f32 %v756, %v757
      %760 = vst.msk [vmem:[#allocation2 + $0x50] sm:$0xff] %vm567, %v758
      %761 = vst.msk [vmem:[#allocation2 + $0x58] sm:$0xff] %vm567, %v759
      %v762 = vlaneseq
      %v763 = vshrl.u32 %v762, 7
      %v764 = vadd.s32 %v763, 8
      %v765 = vadd.s32 %v763, 16
      %v766 = vadd.s32 %v763, 24
      %v767 = vadd.s32 %v763, 32
      %v768 = vadd.s32 %v763, 40
      %v769 = vadd.s32 %v763, 48
      %v770 = vadd.s32 %v763, 56
      %vm771 = vcmp.lt.s32.totalorder %v763, 0
      %v772 = vsub.s32 0, %v763
      %v773 = vsel %vm771, %v772, %v763
      %v774 = vshrl.u32 %v773, 4
      %v775 = vand.u32 %v773, 15
      %v776 = vsub.s32 0, %v775
      %v777 = vsel %vm771, %v776, %v775
      %vm778 = vcmp.lt.s32.totalorder %v764, 0
      %v779 = vsub.s32 0, %v764
      %v780 = vsel %vm778, %v779, %v764
      %v781 = vshrl.u32 %v780, 4
      %v782 = vand.u32 %v780, 15
      %v783 = vsub.s32 0, %v782
      %v784 = vsel %vm778, %v783, %v782
      %vm785 = vcmp.lt.s32.totalorder %v765, 0
      %v786 = vsub.s32 0, %v765
      %v787 = vsel %vm785, %v786, %v765
      %v788 = vshrl.u32 %v787, 4
      %v789 = vand.u32 %v787, 15
      %v790 = vsub.s32 0, %v789
      %v791 = vsel %vm785, %v790, %v789
      %vm792 = vcmp.lt.s32.totalorder %v766, 0
      %v793 = vsub.s32 0, %v766
      %v794 = vsel %vm792, %v793, %v766
      %v795 = vshrl.u32 %v794, 4
      %v796 = vand.u32 %v794, 15
      %v797 = vsub.s32 0, %v796
      %v798 = vsel %vm792, %v797, %v796
      %vm799 = vcmp.lt.s32.totalorder %v767, 0
      %v800 = vsub.s32 0, %v767
      %v801 = vsel %vm799, %v800, %v767
      %v802 = vshrl.u32 %v801, 4
      %v803 = vand.u32 %v801, 15
      %v804 = vsub.s32 0, %v803
      %v805 = vsel %vm799, %v804, %v803
      %vm806 = vcmp.lt.s32.totalorder %v768, 0
      %v807 = vsub.s32 0, %v768
      %v808 = vsel %vm806, %v807, %v768
      %v809 = vshrl.u32 %v808, 4
      %v810 = vand.u32 %v808, 15
      %v811 = vsub.s32 0, %v810
      %v812 = vsel %vm806, %v811, %v810
      %vm813 = vcmp.lt.s32.totalorder %v769, 0
      %v814 = vsub.s32 0, %v769
      %v815 = vsel %vm813, %v814, %v769
      %v816 = vshrl.u32 %v815, 4
      %v817 = vand.u32 %v815, 15
      %v818 = vsub.s32 0, %v817
      %v819 = vsel %vm813, %v818, %v817
      %vm820 = vcmp.lt.s32.totalorder %v770, 0
      %v821 = vsub.s32 0, %v770
      %v822 = vsel %vm820, %v821, %v770
      %v823 = vshrl.u32 %v822, 4
      %v824 = vand.u32 %v822, 15
      %v825 = vsub.s32 0, %v824
      %v826 = vsel %vm820, %v825, %v824
      %vm827 = vcmp.ne.s32.totalorder %v777, 0
      %vm828 = vcmp.ne.s32.totalorder %v784, 0
      %vm829 = vcmp.ne.s32.totalorder %v791, 0
      %vm830 = vcmp.ne.s32.totalorder %v798, 0
      %vm831 = vcmp.ne.s32.totalorder %v805, 0
      %vm832 = vcmp.ne.s32.totalorder %v812, 0
      %vm833 = vcmp.ne.s32.totalorder %v819, 0
      %vm834 = vcmp.ne.s32.totalorder %v826, 0
      %vm835 = vcmp.lt.s32.totalorder %v777, 0
      %vm836 = vcmp.lt.s32.totalorder %v784, 0
      %vm837 = vcmp.lt.s32.totalorder %v791, 0
      %vm838 = vcmp.lt.s32.totalorder %v798, 0
      %vm839 = vcmp.lt.s32.totalorder %v805, 0
      %vm840 = vcmp.lt.s32.totalorder %v812, 0
      %vm841 = vcmp.lt.s32.totalorder %v819, 0
      %vm842 = vcmp.lt.s32.totalorder %v826, 0
      %vm843 = vmand %vm835, %vm827
      %vm844 = vmand %vm836, %vm828
      %vm845 = vmand %vm837, %vm829
      %vm846 = vmand %vm838, %vm830
      %vm847 = vmand %vm839, %vm831
      %vm848 = vmand %vm840, %vm832
      %vm849 = vmand %vm841, %vm833
      %vm850 = vmand %vm842, %vm834
      %v851 = vadd.s32 %v777, 16
      %v852 = vadd.s32 %v784, 16
      %v853 = vadd.s32 %v791, 16
      %v854 = vadd.s32 %v798, 16
      %v855 = vadd.s32 %v805, 16
      %v856 = vadd.s32 %v812, 16
      %v857 = vadd.s32 %v819, 16
      %v858 = vadd.s32 %v826, 16
      %v859 = vsel %vm843, %v851, %v777
      %v860 = vsel %vm844, %v852, %v784
      %v861 = vsel %vm845, %v853, %v791
      %v862 = vsel %vm846, %v854, %v798
      %v863 = vsel %vm847, %v855, %v805
      %v864 = vsel %vm848, %v856, %v812
      %v865 = vsel %vm849, %v857, %v819
      %v866 = vsel %vm850, %v858, %v826
      %v867 = vld [vmem:[#allocation2] sm:$0xff]
      %v868 = vld [vmem:[#allocation2 + $0x8] sm:$0xff]
      %v869 = vld [vmem:[#allocation2 + $0x10] sm:$0xff]
      %v870 = vld [vmem:[#allocation2 + $0x18] sm:$0xff]
      %v871 = vld [vmem:[#allocation2 + $0x20] sm:$0xff]
      %v872 = vld [vmem:[#allocation2 + $0x28] sm:$0xff]
      %v873 = vld [vmem:[#allocation2 + $0x30] sm:$0xff]
      %v874 = vld [vmem:[#allocation2 + $0x38] sm:$0xff]
      %v875 = vld [vmem:[%s4] sm:$0xf]
      %v876 = vld [vmem:[#allocation2 + $0x40] sm:$0xff]
      %v877 = vld [vmem:[#allocation2 + $0x48] sm:$0xff]
      %s878 = scalar_lea.vmem %s4, 12
      %v879 = vld [vmem:[%s878] sm:$0xf]
      %v881 = vsel %vm567, %v869, 0
      %v884 = vsel %vm567, %v870, 0
      %v887 = vsel %vm567, %v871, 0
      %v890 = vsel %vm567, %v872, 0
      %v893 = vsel %vm567, %v873, 0
      %v896 = vsel %vm567, %v874, 0
      %v899 = vsel %vm567, %v876, 0
      %v902 = vsel %vm567, %v877, 0
      %vm904 = vcmask 1043456
      %v906 = vsel %vm904, %v879, 0
      %908 = vmatprep.subr.mxu0 0.0
      %909 = vmatpush1.msra.mxu0 %v906
      %910 = vmatprep.subr.mxu0 0.0
      %911 = vmatpush1.msra.mxu0 0.0
      %912 = vmatprep.subr.mxu0 0.0
      %913 = vmatpush1.msra.mxu0 0.0
      %914 = vmatprep.subr.mxu0 0.0
      %915 = vmatpush1.msra.mxu0 0.0
      %916 = vmatprep.subr.mxu0 0.0
      %917 = vmatpush1.msra.mxu0 0.0
      %918 = vmatprep.subr.mxu0 0.0
      %919 = vmatpush1.msra.mxu0 0.0
      %920 = vmatprep.subr.mxu0 0.0
      %921 = vmatpush1.msra.mxu0 0.0
      %922 = vmatprep.subr.mxu0 0.0
      %923 = vmatpush1.msra.mxu0 0.0
      %924 = vmatprep.subr.mxu0 0.0
      %925 = vmatpush1.msra.mxu0 0.0
      %926 = vmatprep.subr.mxu0 0.0
      %927 = vmatpush1.msra.mxu0 0.0
      %928 = vmatprep.subr.mxu0 0.0
      %929 = vmatpush1.msra.mxu0 0.0
      %930 = vmatprep.subr.mxu0 0.0
      %931 = vmatpush1.msra.mxu0 0.0
      %932 = vmatprep.subr.mxu0 0.0
      %933 = vmatpush1.msra.mxu0 0.0
      %934 = vmatprep.subr.mxu0 0.0
      %935 = vmatpush1.msra.mxu0 0.0
      %936 = vmatprep.subr.mxu0 0.0
      %937 = vmatpush1.msra.mxu0 0.0
      %938 = vmatprep.subr.mxu0 0.0
      %939 = vmatpush1.msra.mxu0 0.0
      %940 = vmatprep.subr.mxu0 0.0
      %941 = vmatpush1.msra.mxu0 0.0
      %942 = vmatprep.subr.mxu0 0.0
      %943 = vmatpush1.msra.mxu0 0.0
      %944 = vmatprep.subr.mxu0 0.0
      %945 = vmatpush1.msra.mxu0 0.0
      %946 = vmatprep.subr.mxu0 0.0
      %947 = vmatpush1.msra.mxu0 0.0
      %948 = vmatprep.subr.mxu0 0.0
      %949 = vmatpush1.msra.mxu0 0.0
      %950 = vmatprep.subr.mxu0 0.0
      %951 = vmatpush1.msra.mxu0 0.0
      %952 = vmatprep.subr.mxu0 0.0
      %953 = vmatpush1.msra.mxu0 0.0
      %954 = vmatprep.subr.mxu0 0.0
      %955 = vmatpush1.msra.mxu0 0.0
      %956 = vmatprep.subr.mxu0 0.0
      %957 = vmatpush1.msra.mxu0 0.0
      %958 = vmatprep.subr.mxu0 0.0
      %959 = vmatpush1.msra.mxu0 0.0
      %960 = vmatprep.subr.mxu0 0.0
      %961 = vmatpush1.msra.mxu0 0.0
      %962 = vmatprep.subr.mxu0 0.0
      %963 = vmatpush1.msra.mxu0 0.0
      %964 = vmatprep.subr.mxu0 0.0
      %965 = vmatpush1.msra.mxu0 0.0
      %966 = vmatprep.subr.mxu0 0.0
      %967 = vmatpush1.msra.mxu0 0.0
      %968 = vmatprep.subr.mxu0 0.0
      %969 = vmatpush1.msra.mxu0 0.0
      %970 = vmatprep.subr.mxu0 0.0
      %971 = vmatpush1.msra.mxu0 0.0
      %972 = vmatprep.mubr.f32.mxu0 0.0
      %973 = vmatmul.mubr.f32.gmra.mrb[0].mxu0 %v881
      %v974 = vpop.f32.mrb[0].mxu0
      %v975 = vadd.f32 0.0, %v974
      %v976 = vpop.f32.mrb[0].mxu0
      %977 = vmatprep.mubr.f32.mxu0 0.0
      %978 = vmatmul.mubr.f32.gmra.mrb[0].mxu0 %v884
      %v979 = vpop.f32.mrb[0].mxu0
      %v980 = vadd.f32 0.0, %v979
      %v981 = vpop.f32.mrb[0].mxu0
      %982 = vmatprep.mubr.f32.mxu0 0.0
      %983 = vmatmul.mubr.f32.gmra.mrb[0].mxu0 %v887
      %v984 = vpop.f32.mrb[0].mxu0
      %v985 = vadd.f32 0.0, %v984
      %v986 = vpop.f32.mrb[0].mxu0
      %987 = vmatprep.mubr.f32.mxu0 0.0
      %988 = vmatmul.mubr.f32.gmra.mrb[0].mxu0 %v890
      %v989 = vpop.f32.mrb[0].mxu0
      %v990 = vadd.f32 0.0, %v989
      %v991 = vpop.f32.mrb[0].mxu0
      %992 = vmatprep.mubr.f32.mxu0 0.0
      %993 = vmatmul.mubr.f32.gmra.mrb[0].mxu0 %v893
      %v994 = vpop.f32.mrb[0].mxu0
      %v995 = vadd.f32 0.0, %v994
      %v996 = vpop.f32.mrb[0].mxu0
      %997 = vmatprep.mubr.f32.mxu0 0.0
      %998 = vmatmul.mubr.f32.gmra.mrb[0].mxu0 %v896
      %v999 = vpop.f32.mrb[0].mxu0
      %v1000 = vadd.f32 0.0, %v999
      %v1001 = vpop.f32.mrb[0].mxu0
      %1002 = vmatprep.mubr.f32.mxu0 0.0
      %1003 = vmatmul.mubr.f32.gmra.mrb[0].mxu0 %v899
      %v1004 = vpop.f32.mrb[0].mxu0
      %v1005 = vadd.f32 0.0, %v1004
      %v1006 = vpop.f32.mrb[0].mxu0
      %1007 = vmatprep.mubr.f32.mxu0 0.0
      %1008 = vmatmul.mubr.f32.gmra.mrb[0].mxu0 %v902
      %v1009 = vpop.f32.mrb[0].mxu0
      %v1010 = vadd.f32 0.0, %v1009
      %v1011 = vpop.f32.mrb[0].mxu0
      %1012 = vdwg.mxu0
      %v1014 = vsel %vm567, %v867, 0
      %v1017 = vsel %vm567, %v868, 0
      %v1020 = vsel %vm904, %v875, 0
      %1022 = vmatprep.subr.mxu0 0.0
      %1023 = vmatpush1.msra.mxu0 %v1020
      %1024 = vmatprep.subr.mxu0 0.0
      %1025 = vmatpush1.msra.mxu0 0.0
      %1026 = vmatprep.subr.mxu0 0.0
      %1027 = vmatpush1.msra.mxu0 0.0
      %1028 = vmatprep.subr.mxu0 0.0
      %1029 = vmatpush1.msra.mxu0 0.0
      %1030 = vmatprep.subr.mxu0 0.0
      %1031 = vmatpush1.msra.mxu0 0.0
      %1032 = vmatprep.subr.mxu0 0.0
      %1033 = vmatpush1.msra.mxu0 0.0
      %1034 = vmatprep.subr.mxu0 0.0
      %1035 = vmatpush1.msra.mxu0 0.0
      %1036 = vmatprep.subr.mxu0 0.0
      %1037 = vmatpush1.msra.mxu0 0.0
      %1038 = vmatprep.subr.mxu0 0.0
      %1039 = vmatpush1.msra.mxu0 0.0
      %1040 = vmatprep.subr.mxu0 0.0
      %1041 = vmatpush1.msra.mxu0 0.0
      %1042 = vmatprep.subr.mxu0 0.0
      %1043 = vmatpush1.msra.mxu0 0.0
      %1044 = vmatprep.subr.mxu0 0.0
      %1045 = vmatpush1.msra.mxu0 0.0
      %1046 = vmatprep.subr.mxu0 0.0
      %1047 = vmatpush1.msra.mxu0 0.0
      %1048 = vmatprep.subr.mxu0 0.0
      %1049 = vmatpush1.msra.mxu0 0.0
      %1050 = vmatprep.subr.mxu0 0.0
      %1051 = vmatpush1.msra.mxu0 0.0
      %1052 = vmatprep.subr.mxu0 0.0
      %1053 = vmatpush1.msra.mxu0 0.0
      %1054 = vmatprep.subr.mxu0 0.0
      %1055 = vmatpush1.msra.mxu0 0.0
      %1056 = vmatprep.subr.mxu0 0.0
      %1057 = vmatpush1.msra.mxu0 0.0
      %1058 = vmatprep.subr.mxu0 0.0
      %1059 = vmatpush1.msra.mxu0 0.0
      %1060 = vmatprep.subr.mxu0 0.0
      %1061 = vmatpush1.msra.mxu0 0.0
      %1062 = vmatprep.subr.mxu0 0.0
      %1063 = vmatpush1.msra.mxu0 0.0
      %1064 = vmatprep.subr.mxu0 0.0
      %1065 = vmatpush1.msra.mxu0 0.0
      %1066 = vmatprep.subr.mxu0 0.0
      %1067 = vmatpush1.msra.mxu0 0.0
      %1068 = vmatprep.subr.mxu0 0.0
      %1069 = vmatpush1.msra.mxu0 0.0
      %1070 = vmatprep.subr.mxu0 0.0
      %1071 = vmatpush1.msra.mxu0 0.0
      %1072 = vmatprep.subr.mxu0 0.0
      %1073 = vmatpush1.msra.mxu0 0.0
      %1074 = vmatprep.subr.mxu0 0.0
      %1075 = vmatpush1.msra.mxu0 0.0
      %1076 = vmatprep.subr.mxu0 0.0
      %1077 = vmatpush1.msra.mxu0 0.0
      %1078 = vmatprep.subr.mxu0 0.0
      %1079 = vmatpush1.msra.mxu0 0.0
      %1080 = vmatprep.subr.mxu0 0.0
      %1081 = vmatpush1.msra.mxu0 0.0
      %1082 = vmatprep.subr.mxu0 0.0
      %1083 = vmatpush1.msra.mxu0 0.0
      %1084 = vmatprep.subr.mxu0 0.0
      %1085 = vmatpush1.msra.mxu0 0.0
      %1086 = vmatprep.mubr.f32.mxu0 0.0
      %1087 = vmatmul.mubr.f32.gmra.mrb[0].mxu0 %v1014
      %v1088 = vpop.f32.mrb[0].mxu0
      %v1089 = vadd.f32 %v975, %v1088
      %v1090 = vpop.f32.mrb[0].mxu0
      %1091 = vmatprep.mubr.f32.mxu0 0.0
      %1092 = vmatmul.mubr.f32.gmra.mrb[0].mxu0 %v1017
      %v1093 = vpop.f32.mrb[0].mxu0
      %v1094 = vadd.f32 %v980, %v1093
      %v1095 = vpop.f32.mrb[0].mxu0
      %1096 = vmatprep.mubr.f32.mxu0 0.0
      %1097 = vmatmul.mubr.f32.gmra.mrb[0].mxu0 %v881
      %v1098 = vpop.f32.mrb[0].mxu0
      %v1099 = vadd.f32 %v985, %v1098
      %v1100 = vpop.f32.mrb[0].mxu0
      %1101 = vmatprep.mubr.f32.mxu0 0.0
      %1102 = vmatmul.mubr.f32.gmra.mrb[0].mxu0 %v884
      %v1103 = vpop.f32.mrb[0].mxu0
      %v1104 = vadd.f32 %v990, %v1103
      %v1105 = vpop.f32.mrb[0].mxu0
      %1106 = vmatprep.mubr.f32.mxu0 0.0
      %1107 = vmatmul.mubr.f32.gmra.mrb[0].mxu0 %v887
      %v1108 = vpop.f32.mrb[0].mxu0
      %v1109 = vadd.f32 %v995, %v1108
      %v1110 = vpop.f32.mrb[0].mxu0
      %1111 = vmatprep.mubr.f32.mxu0 0.0
      %1112 = vmatmul.mubr.f32.gmra.mrb[0].mxu0 %v890
      %v1113 = vpop.f32.mrb[0].mxu0
      %v1114 = vadd.f32 %v1000, %v1113
      %v1115 = vpop.f32.mrb[0].mxu0
      %1116 = vmatprep.mubr.f32.mxu0 0.0
      %1117 = vmatmul.mubr.f32.gmra.mrb[0].mxu0 %v893
      %v1118 = vpop.f32.mrb[0].mxu0
      %v1119 = vadd.f32 %v1005, %v1118
      %v1120 = vpop.f32.mrb[0].mxu0
      %1121 = vmatprep.mubr.f32.mxu0 0.0
      %1122 = vmatmul.mubr.f32.gmra.mrb[0].mxu0 %v896
      %v1123 = vpop.f32.mrb[0].mxu0
      %v1124 = vadd.f32 %v1010, %v1123
      %v1125 = vpop.f32.mrb[0].mxu0
      %1126 = vdwg.mxu0
      %v1127 = vld [vmem:[#allocation2 + $0x20] sm:$0xff]
      %v1128 = vld [vmem:[#allocation2 + $0x28] sm:$0xff]
      %v1129 = vld [vmem:[#allocation2 + $0x30] sm:$0xff]
      %v1130 = vld [vmem:[#allocation2 + $0x38] sm:$0xff]
      %v1131 = vld [vmem:[#allocation2 + $0x40] sm:$0xff]
      %v1132 = vld [vmem:[#allocation2 + $0x48] sm:$0xff]
      %v1133 = vld [vmem:[#allocation2 + $0x50] sm:$0xff]
      %v1134 = vld [vmem:[#allocation2 + $0x58] sm:$0xff]
      %s1135 = scalar_lea.vmem %s4, 24
      %v1136 = vld [vmem:[%s1135] sm:$0xf]
      %v1138 = vsel %vm567, %v1127, 0
      %v1141 = vsel %vm567, %v1128, 0
      %v1144 = vsel %vm567, %v1129, 0
      %v1147 = vsel %vm567, %v1130, 0
      %v1150 = vsel %vm567, %v1131, 0
      %v1153 = vsel %vm567, %v1132, 0
      %v1156 = vsel %vm567, %v1133, 0
      %v1159 = vsel %vm567, %v1134, 0
      %v1162 = vsel %vm904, %v1136, 0
      %1164 = vmatprep.subr.mxu0 0.0
      %1165 = vmatpush1.msra.mxu0 %v1162
      %1166 = vmatprep.subr.mxu0 0.0
      %1167 = vmatpush1.msra.mxu0 0.0
      %1168 = vmatprep.subr.mxu0 0.0
      %1169 = vmatpush1.msra.mxu0 0.0
      %1170 = vmatprep.subr.mxu0 0.0
      %1171 = vmatpush1.msra.mxu0 0.0
      %1172 = vmatprep.subr.mxu0 0.0
      %1173 = vmatpush1.msra.mxu0 0.0
      %1174 = vmatprep.subr.mxu0 0.0
      %1175 = vmatpush1.msra.mxu0 0.0
      %1176 = vmatprep.subr.mxu0 0.0
      %1177 = vmatpush1.msra.mxu0 0.0
      %1178 = vmatprep.subr.mxu0 0.0
      %1179 = vmatpush1.msra.mxu0 0.0
      %1180 = vmatprep.subr.mxu0 0.0
      %1181 = vmatpush1.msra.mxu0 0.0
      %1182 = vmatprep.subr.mxu0 0.0
      %1183 = vmatpush1.msra.mxu0 0.0
      %1184 = vmatprep.subr.mxu0 0.0
      %1185 = vmatpush1.msra.mxu0 0.0
      %1186 = vmatprep.subr.mxu0 0.0
      %1187 = vmatpush1.msra.mxu0 0.0
      %1188 = vmatprep.subr.mxu0 0.0
      %1189 = vmatpush1.msra.mxu0 0.0
      %1190 = vmatprep.subr.mxu0 0.0
      %1191 = vmatpush1.msra.mxu0 0.0
      %1192 = vmatprep.subr.mxu0 0.0
      %1193 = vmatpush1.msra.mxu0 0.0
      %1194 = vmatprep.subr.mxu0 0.0
      %1195 = vmatpush1.msra.mxu0 0.0
      %1196 = vmatprep.subr.mxu0 0.0
      %1197 = vmatpush1.msra.mxu0 0.0
      %1198 = vmatprep.subr.mxu0 0.0
      %1199 = vmatpush1.msra.mxu0 0.0
      %1200 = vmatprep.subr.mxu0 0.0
      %1201 = vmatpush1.msra.mxu0 0.0
      %1202 = vmatprep.subr.mxu0 0.0
      %1203 = vmatpush1.msra.mxu0 0.0
      %1204 = vmatprep.subr.mxu0 0.0
      %1205 = vmatpush1.msra.mxu0 0.0
      %1206 = vmatprep.subr.mxu0 0.0
      %1207 = vmatpush1.msra.mxu0 0.0
      %1208 = vmatprep.subr.mxu0 0.0
      %1209 = vmatpush1.msra.mxu0 0.0
      %1210 = vmatprep.subr.mxu0 0.0
      %1211 = vmatpush1.msra.mxu0 0.0
      %1212 = vmatprep.subr.mxu0 0.0
      %1213 = vmatpush1.msra.mxu0 0.0
      %1214 = vmatprep.subr.mxu0 0.0
      %1215 = vmatpush1.msra.mxu0 0.0
      %1216 = vmatprep.subr.mxu0 0.0
      %1217 = vmatpush1.msra.mxu0 0.0
      %1218 = vmatprep.subr.mxu0 0.0
      %1219 = vmatpush1.msra.mxu0 0.0
      %1220 = vmatprep.subr.mxu0 0.0
      %1221 = vmatpush1.msra.mxu0 0.0
      %1222 = vmatprep.subr.mxu0 0.0
      %1223 = vmatpush1.msra.mxu0 0.0
      %1224 = vmatprep.subr.mxu0 0.0
      %1225 = vmatpush1.msra.mxu0 0.0
      %1226 = vmatprep.subr.mxu0 0.0
      %1227 = vmatpush1.msra.mxu0 0.0
      %1228 = vmatprep.mubr.f32.mxu0 0.0
      %1229 = vmatmul.mubr.f32.gmra.mrb[0].mxu0 %v1138
      %v1230 = vpop.f32.mrb[0].mxu0
      %v1231 = vadd.f32 0.0, %v1230
      %v1232 = vpop.f32.mrb[0].mxu0
      %1233 = vmatprep.mubr.f32.mxu0 0.0
      %1234 = vmatmul.mubr.f32.gmra.mrb[0].mxu0 %v1141
      %v1235 = vpop.f32.mrb[0].mxu0
      %v1236 = vadd.f32 0.0, %v1235
      %v1237 = vpop.f32.mrb[0].mxu0
      %1238 = vmatprep.mubr.f32.mxu0 0.0
      %1239 = vmatmul.mubr.f32.gmra.mrb[0].mxu0 %v1144
      %v1240 = vpop.f32.mrb[0].mxu0
      %v1241 = vadd.f32 0.0, %v1240
      %v1242 = vpop.f32.mrb[0].mxu0
      %1243 = vmatprep.mubr.f32.mxu0 0.0
      %1244 = vmatmul.mubr.f32.gmra.mrb[0].mxu0 %v1147
      %v1245 = vpop.f32.mrb[0].mxu0
      %v1246 = vadd.f32 0.0, %v1245
      %v1247 = vpop.f32.mrb[0].mxu0
      %1248 = vmatprep.mubr.f32.mxu0 0.0
      %1249 = vmatmul.mubr.f32.gmra.mrb[0].mxu0 %v1150
      %v1250 = vpop.f32.mrb[0].mxu0
      %v1251 = vadd.f32 0.0, %v1250
      %v1252 = vpop.f32.mrb[0].mxu0
      %1253 = vmatprep.mubr.f32.mxu0 0.0
      %1254 = vmatmul.mubr.f32.gmra.mrb[0].mxu0 %v1153
      %v1255 = vpop.f32.mrb[0].mxu0
      %v1256 = vadd.f32 0.0, %v1255
      %v1257 = vpop.f32.mrb[0].mxu0
      %1258 = vmatprep.mubr.f32.mxu0 0.0
      %1259 = vmatmul.mubr.f32.gmra.mrb[0].mxu0 %v1156
      %v1260 = vpop.f32.mrb[0].mxu0
      %v1261 = vadd.f32 0.0, %v1260
      %v1262 = vpop.f32.mrb[0].mxu0
      %1263 = vmatprep.mubr.f32.mxu0 0.0
      %1264 = vmatmul.mubr.f32.gmra.mrb[0].mxu0 %v1159
      %v1265 = vpop.f32.mrb[0].mxu0
      %v1266 = vadd.f32 0.0, %v1265
      %v1267 = vpop.f32.mrb[0].mxu0
      %1268 = vdwg.mxu0
      %v1269 = vadd.f32 %v1089, %v1231
      %v1270 = vadd.f32 %v1094, %v1236
      %v1271 = vadd.f32 %v1099, %v1241
      %v1272 = vadd.f32 %v1104, %v1246
      %v1273 = vadd.f32 %v1109, %v1251
      %v1274 = vadd.f32 %v1114, %v1256
      %v1275 = vadd.f32 %v1119, %v1261
      %v1276 = vadd.f32 %v1124, %v1266
      %v1277 = vrot.slane %v1269, 7
      %v1278 = vrot.slane %v1270, 7
      %v1279 = vrot.slane %v1271, 7
      %v1280 = vrot.slane %v1272, 7
      %v1281 = vrot.slane %v1273, 7
      %v1282 = vrot.slane %v1274, 7
      %v1283 = vrot.slane %v1275, 7
      %v1284 = vrot.slane %v1276, 7
      %vm1285 = vcmp.lt.s32.totalorder %v763, 1
      %v1286 = vsel %vm1285, %v1283, %v1284
      %v1287 = vsel %vm1285, %v1282, %v1283
      %v1288 = vsel %vm1285, %v1281, %v1282
      %v1289 = vsel %vm1285, %v1280, %v1281
      %v1290 = vsel %vm1285, %v1279, %v1280
      %v1291 = vsel %vm1285, %v1278, %v1279
      %v1292 = vsel %vm1285, %v1277, %v1278
      %v1293 = vsel %vm1285, %v1284, %v1277
      %vm1294 = vcmp.ge.s32.totalorder %v859, 1
      %vm1295 = vcmp.ge.s32.totalorder %v860, 1
      %vm1296 = vcmp.ge.s32.totalorder %v861, 1
      %vm1297 = vcmp.ge.s32.totalorder %v862, 1
      %vm1298 = vcmp.ge.s32.totalorder %v863, 1
      %vm1299 = vcmp.ge.s32.totalorder %v864, 1
      %vm1300 = vcmp.ge.s32.totalorder %v865, 1
      %vm1301 = vcmp.ge.s32.totalorder %v866, 1
      %v1302 = vsel %vm1294, 1, 0
      %v1303 = vsel %vm1295, 1, 0
      %v1304 = vsel %vm1296, 1, 0
      %v1305 = vsel %vm1297, 1, 0
      %v1306 = vsel %vm1298, 1, 0
      %v1307 = vsel %vm1299, 1, 0
      %v1308 = vsel %vm1300, 1, 0
      %v1309 = vsel %vm1301, 1, 0
      %vm1310 = vcmp.eq.s32.totalorder %v1302, 1
      %vm1311 = vcmp.eq.s32.totalorder %v1303, 1
      %vm1312 = vcmp.eq.s32.totalorder %v1304, 1
      %vm1313 = vcmp.eq.s32.totalorder %v1305, 1
      %vm1314 = vcmp.eq.s32.totalorder %v1306, 1
      %vm1315 = vcmp.eq.s32.totalorder %v1307, 1
      %vm1316 = vcmp.eq.s32.totalorder %v1308, 1
      %vm1317 = vcmp.eq.s32.totalorder %v1309, 1
      %v1318 = vsel %vm1310, %v1293, 0.0
      %v1319 = vsel %vm1311, %v1292, 0.0
      %v1320 = vsel %vm1312, %v1291, 0.0
      %v1321 = vsel %vm1313, %v1290, 0.0
      %v1322 = vsel %vm1314, %v1289, 0.0
      %v1323 = vsel %vm1315, %v1288, 0.0
      %v1324 = vsel %vm1316, %v1287, 0.0
      %v1325 = vsel %vm1317, %v1286, 0.0
      %v1326 = vadd.f32 %v1318, 0.0
      %v1327 = vadd.f32 %v1319, 0.0
      %v1328 = vadd.f32 %v1320, 0.0
      %v1329 = vadd.f32 %v1321, 0.0
      %v1330 = vadd.f32 %v1322, 0.0
      %v1331 = vadd.f32 %v1323, 0.0
      %v1332 = vadd.f32 %v1324, 0.0
      %v1333 = vadd.f32 %v1325, 0.0
      %s1334 = scalar_lea.vmem %s4, 4
      %v1335 = vld [vmem:[%s1334] sm:$0xf]
      %s1336 = scalar_lea.vmem %s4, 16
      %v1337 = vld [vmem:[%s1336] sm:$0xf]
      %v1339 = vsel %vm904, %v1337, 0
      %1341 = vmatprep.subr.mxu0 0.0
      %1342 = vmatpush1.msra.mxu0 %v1339
      %1343 = vmatprep.subr.mxu0 0.0
      %1344 = vmatpush1.msra.mxu0 0.0
      %1345 = vmatprep.subr.mxu0 0.0
      %1346 = vmatpush1.msra.mxu0 0.0
      %1347 = vmatprep.subr.mxu0 0.0
      %1348 = vmatpush1.msra.mxu0 0.0
      %1349 = vmatprep.subr.mxu0 0.0
      %1350 = vmatpush1.msra.mxu0 0.0
      %1351 = vmatprep.subr.mxu0 0.0
      %1352 = vmatpush1.msra.mxu0 0.0
      %1353 = vmatprep.subr.mxu0 0.0
      %1354 = vmatpush1.msra.mxu0 0.0
      %1355 = vmatprep.subr.mxu0 0.0
      %1356 = vmatpush1.msra.mxu0 0.0
      %1357 = vmatprep.subr.mxu0 0.0
      %1358 = vmatpush1.msra.mxu0 0.0
      %1359 = vmatprep.subr.mxu0 0.0
      %1360 = vmatpush1.msra.mxu0 0.0
      %1361 = vmatprep.subr.mxu0 0.0
      %1362 = vmatpush1.msra.mxu0 0.0
      %1363 = vmatprep.subr.mxu0 0.0
      %1364 = vmatpush1.msra.mxu0 0.0
      %1365 = vmatprep.subr.mxu0 0.0
      %1366 = vmatpush1.msra.mxu0 0.0
      %1367 = vmatprep.subr.mxu0 0.0
      %1368 = vmatpush1.msra.mxu0 0.0
      %1369 = vmatprep.subr.mxu0 0.0
      %1370 = vmatpush1.msra.mxu0 0.0
      %1371 = vmatprep.subr.mxu0 0.0
      %1372 = vmatpush1.msra.mxu0 0.0
      %1373 = vmatprep.subr.mxu0 0.0
      %1374 = vmatpush1.msra.mxu0 0.0
      %1375 = vmatprep.subr.mxu0 0.0
      %1376 = vmatpush1.msra.mxu0 0.0
      %1377 = vmatprep.subr.mxu0 0.0
      %1378 = vmatpush1.msra.mxu0 0.0
      %1379 = vmatprep.subr.mxu0 0.0
      %1380 = vmatpush1.msra.mxu0 0.0
      %1381 = vmatprep.subr.mxu0 0.0
      %1382 = vmatpush1.msra.mxu0 0.0
      %1383 = vmatprep.subr.mxu0 0.0
      %1384 = vmatpush1.msra.mxu0 0.0
      %1385 = vmatprep.subr.mxu0 0.0
      %1386 = vmatpush1.msra.mxu0 0.0
      %1387 = vmatprep.subr.mxu0 0.0
      %1388 = vmatpush1.msra.mxu0 0.0
      %1389 = vmatprep.subr.mxu0 0.0
      %1390 = vmatpush1.msra.mxu0 0.0
      %1391 = vmatprep.subr.mxu0 0.0
      %1392 = vmatpush1.msra.mxu0 0.0
      %1393 = vmatprep.subr.mxu0 0.0
      %1394 = vmatpush1.msra.mxu0 0.0
      %1395 = vmatprep.subr.mxu0 0.0
      %1396 = vmatpush1.msra.mxu0 0.0
      %1397 = vmatprep.subr.mxu0 0.0
      %1398 = vmatpush1.msra.mxu0 0.0
      %1399 = vmatprep.subr.mxu0 0.0
      %1400 = vmatpush1.msra.mxu0 0.0
      %1401 = vmatprep.subr.mxu0 0.0
      %1402 = vmatpush1.msra.mxu0 0.0
      %1403 = vmatprep.subr.mxu0 0.0
      %1404 = vmatpush1.msra.mxu0 0.0
      %1405 = vmatprep.mubr.f32.mxu0 0.0
      %1406 = vmatmul.mubr.f32.gmra.mrb[0].mxu0 %v881
      %v1407 = vpop.f32.mrb[0].mxu0
      %v1408 = vadd.f32 0.0, %v1407
      %v1409 = vpop.f32.mrb[0].mxu0
      %1410 = vmatprep.mubr.f32.mxu0 0.0
      %1411 = vmatmul.mubr.f32.gmra.mrb[0].mxu0 %v884
      %v1412 = vpop.f32.mrb[0].mxu0
      %v1413 = vadd.f32 0.0, %v1412
      %v1414 = vpop.f32.mrb[0].mxu0
      %1415 = vmatprep.mubr.f32.mxu0 0.0
      %1416 = vmatmul.mubr.f32.gmra.mrb[0].mxu0 %v887
      %v1417 = vpop.f32.mrb[0].mxu0
      %v1418 = vadd.f32 0.0, %v1417
      %v1419 = vpop.f32.mrb[0].mxu0
      %1420 = vmatprep.mubr.f32.mxu0 0.0
      %1421 = vmatmul.mubr.f32.gmra.mrb[0].mxu0 %v890
      %v1422 = vpop.f32.mrb[0].mxu0
      %v1423 = vadd.f32 0.0, %v1422
      %v1424 = vpop.f32.mrb[0].mxu0
      %1425 = vmatprep.mubr.f32.mxu0 0.0
      %1426 = vmatmul.mubr.f32.gmra.mrb[0].mxu0 %v893
      %v1427 = vpop.f32.mrb[0].mxu0
      %v1428 = vadd.f32 0.0, %v1427
      %v1429 = vpop.f32.mrb[0].mxu0
      %1430 = vmatprep.mubr.f32.mxu0 0.0
      %1431 = vmatmul.mubr.f32.gmra.mrb[0].mxu0 %v896
      %v1432 = vpop.f32.mrb[0].mxu0
      %v1433 = vadd.f32 0.0, %v1432
      %v1434 = vpop.f32.mrb[0].mxu0
      %1435 = vmatprep.mubr.f32.mxu0 0.0
      %1436 = vmatmul.mubr.f32.gmra.mrb[0].mxu0 %v899
      %v1437 = vpop.f32.mrb[0].mxu0
      %v1438 = vadd.f32 0.0, %v1437
      %v1439 = vpop.f32.mrb[0].mxu0
      %1440 = vmatprep.mubr.f32.mxu0 0.0
      %1441 = vmatmul.mubr.f32.gmra.mrb[0].mxu0 %v902
      %v1442 = vpop.f32.mrb[0].mxu0
      %v1443 = vadd.f32 0.0, %v1442
      %v1444 = vpop.f32.mrb[0].mxu0
      %1445 = vdwg.mxu0
      %v1447 = vsel %vm904, %v1335, 0
      %1449 = vmatprep.subr.mxu0 0.0
      %1450 = vmatpush1.msra.mxu0 %v1447
      %1451 = vmatprep.subr.mxu0 0.0
      %1452 = vmatpush1.msra.mxu0 0.0
      %1453 = vmatprep.subr.mxu0 0.0
      %1454 = vmatpush1.msra.mxu0 0.0
      %1455 = vmatprep.subr.mxu0 0.0
      %1456 = vmatpush1.msra.mxu0 0.0
      %1457 = vmatprep.subr.mxu0 0.0
      %1458 = vmatpush1.msra.mxu0 0.0
      %1459 = vmatprep.subr.mxu0 0.0
      %1460 = vmatpush1.msra.mxu0 0.0
      %1461 = vmatprep.subr.mxu0 0.0
      %1462 = vmatpush1.msra.mxu0 0.0
      %1463 = vmatprep.subr.mxu0 0.0
      %1464 = vmatpush1.msra.mxu0 0.0
      %1465 = vmatprep.subr.mxu0 0.0
      %1466 = vmatpush1.msra.mxu0 0.0
      %1467 = vmatprep.subr.mxu0 0.0
      %1468 = vmatpush1.msra.mxu0 0.0
      %1469 = vmatprep.subr.mxu0 0.0
      %1470 = vmatpush1.msra.mxu0 0.0
      %1471 = vmatprep.subr.mxu0 0.0
      %1472 = vmatpush1.msra.mxu0 0.0
      %1473 = vmatprep.subr.mxu0 0.0
      %1474 = vmatpush1.msra.mxu0 0.0
      %1475 = vmatprep.subr.mxu0 0.0
      %1476 = vmatpush1.msra.mxu0 0.0
      %1477 = vmatprep.subr.mxu0 0.0
      %1478 = vmatpush1.msra.mxu0 0.0
      %1479 = vmatprep.subr.mxu0 0.0
      %1480 = vmatpush1.msra.mxu0 0.0
      %1481 = vmatprep.subr.mxu0 0.0
      %1482 = vmatpush1.msra.mxu0 0.0
      %1483 = vmatprep.subr.mxu0 0.0
      %1484 = vmatpush1.msra.mxu0 0.0
      %1485 = vmatprep.subr.mxu0 0.0
      %1486 = vmatpush1.msra.mxu0 0.0
      %1487 = vmatprep.subr.mxu0 0.0
      %1488 = vmatpush1.msra.mxu0 0.0
      %1489 = vmatprep.subr.mxu0 0.0
      %1490 = vmatpush1.msra.mxu0 0.0
      %1491 = vmatprep.subr.mxu0 0.0
      %1492 = vmatpush1.msra.mxu0 0.0
      %1493 = vmatprep.subr.mxu0 0.0
      %1494 = vmatpush1.msra.mxu0 0.0
      %1495 = vmatprep.subr.mxu0 0.0
      %1496 = vmatpush1.msra.mxu0 0.0
      %1497 = vmatprep.subr.mxu0 0.0
      %1498 = vmatpush1.msra.mxu0 0.0
      %1499 = vmatprep.subr.mxu0 0.0
      %1500 = vmatpush1.msra.mxu0 0.0
      %1501 = vmatprep.subr.mxu0 0.0
      %1502 = vmatpush1.msra.mxu0 0.0
      %1503 = vmatprep.subr.mxu0 0.0
      %1504 = vmatpush1.msra.mxu0 0.0
      %1505 = vmatprep.subr.mxu0 0.0
      %1506 = vmatpush1.msra.mxu0 0.0
      %1507 = vmatprep.subr.mxu0 0.0
      %1508 = vmatpush1.msra.mxu0 0.0
      %1509 = vmatprep.subr.mxu0 0.0
      %1510 = vmatpush1.msra.mxu0 0.0
      %1511 = vmatprep.subr.mxu0 0.0
      %1512 = vmatpush1.msra.mxu0 0.0
      %1513 = vmatprep.mubr.f32.mxu0 0.0
      %1514 = vmatmul.mubr.f32.gmra.mrb[0].mxu0 %v1014
      %v1515 = vpop.f32.mrb[0].mxu0
      %v1516 = vadd.f32 %v1408, %v1515
      %v1517 = vpop.f32.mrb[0].mxu0
      %1518 = vmatprep.mubr.f32.mxu0 0.0
      %1519 = vmatmul.mubr.f32.gmra.mrb[0].mxu0 %v1017
      %v1520 = vpop.f32.mrb[0].mxu0
      %v1521 = vadd.f32 %v1413, %v1520
      %v1522 = vpop.f32.mrb[0].mxu0
      %1523 = vmatprep.mubr.f32.mxu0 0.0
      %1524 = vmatmul.mubr.f32.gmra.mrb[0].mxu0 %v881
      %v1525 = vpop.f32.mrb[0].mxu0
      %v1526 = vadd.f32 %v1418, %v1525
      %v1527 = vpop.f32.mrb[0].mxu0
      %1528 = vmatprep.mubr.f32.mxu0 0.0
      %1529 = vmatmul.mubr.f32.gmra.mrb[0].mxu0 %v884
      %v1530 = vpop.f32.mrb[0].mxu0
      %v1531 = vadd.f32 %v1423, %v1530
      %v1532 = vpop.f32.mrb[0].mxu0
      %1533 = vmatprep.mubr.f32.mxu0 0.0
      %1534 = vmatmul.mubr.f32.gmra.mrb[0].mxu0 %v887
      %v1535 = vpop.f32.mrb[0].mxu0
      %v1536 = vadd.f32 %v1428, %v1535
      %v1537 = vpop.f32.mrb[0].mxu0
      %1538 = vmatprep.mubr.f32.mxu0 0.0
      %1539 = vmatmul.mubr.f32.gmra.mrb[0].mxu0 %v890
      %v1540 = vpop.f32.mrb[0].mxu0
      %v1541 = vadd.f32 %v1433, %v1540
      %v1542 = vpop.f32.mrb[0].mxu0
      %1543 = vmatprep.mubr.f32.mxu0 0.0
      %1544 = vmatmul.mubr.f32.gmra.mrb[0].mxu0 %v893
      %v1545 = vpop.f32.mrb[0].mxu0
      %v1546 = vadd.f32 %v1438, %v1545
      %v1547 = vpop.f32.mrb[0].mxu0
      %1548 = vmatprep.mubr.f32.mxu0 0.0
      %1549 = vmatmul.mubr.f32.gmra.mrb[0].mxu0 %v896
      %v1550 = vpop.f32.mrb[0].mxu0
      %v1551 = vadd.f32 %v1443, %v1550
      %v1552 = vpop.f32.mrb[0].mxu0
      %1553 = vdwg.mxu0
      %s1554 = scalar_lea.vmem %s4, 28
      %v1555 = vld [vmem:[%s1554] sm:$0xf]
      %v1557 = vsel %vm904, %v1555, 0
      %1559 = vmatprep.subr.mxu0 0.0
      %1560 = vmatpush1.msra.mxu0 %v1557
      %1561 = vmatprep.subr.mxu0 0.0
      %1562 = vmatpush1.msra.mxu0 0.0
      %1563 = vmatprep.subr.mxu0 0.0
      %1564 = vmatpush1.msra.mxu0 0.0
      %1565 = vmatprep.subr.mxu0 0.0
      %1566 = vmatpush1.msra.mxu0 0.0
      %1567 = vmatprep.subr.mxu0 0.0
      %1568 = vmatpush1.msra.mxu0 0.0
      %1569 = vmatprep.subr.mxu0 0.0
      %1570 = vmatpush1.msra.mxu0 0.0
      %1571 = vmatprep.subr.mxu0 0.0
      %1572 = vmatpush1.msra.mxu0 0.0
      %1573 = vmatprep.subr.mxu0 0.0
      %1574 = vmatpush1.msra.mxu0 0.0
      %1575 = vmatprep.subr.mxu0 0.0
      %1576 = vmatpush1.msra.mxu0 0.0
      %1577 = vmatprep.subr.mxu0 0.0
      %1578 = vmatpush1.msra.mxu0 0.0
      %1579 = vmatprep.subr.mxu0 0.0
      %1580 = vmatpush1.msra.mxu0 0.0
      %1581 = vmatprep.subr.mxu0 0.0
      %1582 = vmatpush1.msra.mxu0 0.0
      %1583 = vmatprep.subr.mxu0 0.0
      %1584 = vmatpush1.msra.mxu0 0.0
      %1585 = vmatprep.subr.mxu0 0.0
      %1586 = vmatpush1.msra.mxu0 0.0
      %1587 = vmatprep.subr.mxu0 0.0
      %1588 = vmatpush1.msra.mxu0 0.0
      %1589 = vmatprep.subr.mxu0 0.0
      %1590 = vmatpush1.msra.mxu0 0.0
      %1591 = vmatprep.subr.mxu0 0.0
      %1592 = vmatpush1.msra.mxu0 0.0
      %1593 = vmatprep.subr.mxu0 0.0
      %1594 = vmatpush1.msra.mxu0 0.0
      %1595 = vmatprep.subr.mxu0 0.0
      %1596 = vmatpush1.msra.mxu0 0.0
      %1597 = vmatprep.subr.mxu0 0.0
      %1598 = vmatpush1.msra.mxu0 0.0
      %1599 = vmatprep.subr.mxu0 0.0
      %1600 = vmatpush1.msra.mxu0 0.0
      %1601 = vmatprep.subr.mxu0 0.0
      %1602 = vmatpush1.msra.mxu0 0.0
      %1603 = vmatprep.subr.mxu0 0.0
      %1604 = vmatpush1.msra.mxu0 0.0
      %1605 = vmatprep.subr.mxu0 0.0
      %1606 = vmatpush1.msra.mxu0 0.0
      %1607 = vmatprep.subr.mxu0 0.0
      %1608 = vmatpush1.msra.mxu0 0.0
      %1609 = vmatprep.subr.mxu0 0.0
      %1610 = vmatpush1.msra.mxu0 0.0
      %1611 = vmatprep.subr.mxu0 0.0
      %1612 = vmatpush1.msra.mxu0 0.0
      %1613 = vmatprep.subr.mxu0 0.0
      %1614 = vmatpush1.msra.mxu0 0.0
      %1615 = vmatprep.subr.mxu0 0.0
      %1616 = vmatpush1.msra.mxu0 0.0
      %1617 = vmatprep.subr.mxu0 0.0
      %1618 = vmatpush1.msra.mxu0 0.0
      %1619 = vmatprep.subr.mxu0 0.0
      %1620 = vmatpush1.msra.mxu0 0.0
      %1621 = vmatprep.subr.mxu0 0.0
      %1622 = vmatpush1.msra.mxu0 0.0
      %1623 = vmatprep.mubr.f32.mxu0 0.0
      %1624 = vmatmul.mubr.f32.gmra.mrb[0].mxu0 %v1138
      %v1625 = vpop.f32.mrb[0].mxu0
      %v1626 = vadd.f32 0.0, %v1625
      %v1627 = vpop.f32.mrb[0].mxu0
      %1628 = vmatprep.mubr.f32.mxu0 0.0
      %1629 = vmatmul.mubr.f32.gmra.mrb[0].mxu0 %v1141
      %v1630 = vpop.f32.mrb[0].mxu0
      %v1631 = vadd.f32 0.0, %v1630
      %v1632 = vpop.f32.mrb[0].mxu0
      %1633 = vmatprep.mubr.f32.mxu0 0.0
      %1634 = vmatmul.mubr.f32.gmra.mrb[0].mxu0 %v1144
      %v1635 = vpop.f32.mrb[0].mxu0
      %v1636 = vadd.f32 0.0, %v1635
      %v1637 = vpop.f32.mrb[0].mxu0
      %1638 = vmatprep.mubr.f32.mxu0 0.0
      %1639 = vmatmul.mubr.f32.gmra.mrb[0].mxu0 %v1147
      %v1640 = vpop.f32.mrb[0].mxu0
      %v1641 = vadd.f32 0.0, %v1640
      %v1642 = vpop.f32.mrb[0].mxu0
      %1643 = vmatprep.mubr.f32.mxu0 0.0
      %1644 = vmatmul.mubr.f32.gmra.mrb[0].mxu0 %v1150
      %v1645 = vpop.f32.mrb[0].mxu0
      %v1646 = vadd.f32 0.0, %v1645
      %v1647 = vpop.f32.mrb[0].mxu0
      %1648 = vmatprep.mubr.f32.mxu0 0.0
      %1649 = vmatmul.mubr.f32.gmra.mrb[0].mxu0 %v1153
      %v1650 = vpop.f32.mrb[0].mxu0
      %v1651 = vadd.f32 0.0, %v1650
      %v1652 = vpop.f32.mrb[0].mxu0
      %1653 = vmatprep.mubr.f32.mxu0 0.0
      %1654 = vmatmul.mubr.f32.gmra.mrb[0].mxu0 %v1156
      %v1655 = vpop.f32.mrb[0].mxu0
      %v1656 = vadd.f32 0.0, %v1655
      %v1657 = vpop.f32.mrb[0].mxu0
      %1658 = vmatprep.mubr.f32.mxu0 0.0
      %1659 = vmatmul.mubr.f32.gmra.mrb[0].mxu0 %v1159
      %v1660 = vpop.f32.mrb[0].mxu0
      %v1661 = vadd.f32 0.0, %v1660
      %v1662 = vpop.f32.mrb[0].mxu0
      %1663 = vdwg.mxu0
      %v1664 = vadd.f32 %v1516, %v1626
      %v1665 = vadd.f32 %v1521, %v1631
      %v1666 = vadd.f32 %v1526, %v1636
      %v1667 = vadd.f32 %v1531, %v1641
      %v1668 = vadd.f32 %v1536, %v1646
      %v1669 = vadd.f32 %v1541, %v1651
      %v1670 = vadd.f32 %v1546, %v1656
      %v1671 = vadd.f32 %v1551, %v1661
      %v1672 = vadd.f32 %v1326, %v1664
      %v1673 = vadd.f32 %v1327, %v1665
      %v1674 = vadd.f32 %v1328, %v1666
      %v1675 = vadd.f32 %v1329, %v1667
      %v1676 = vadd.f32 %v1330, %v1668
      %v1677 = vadd.f32 %v1331, %v1669
      %v1678 = vadd.f32 %v1332, %v1670
      %v1679 = vadd.f32 %v1333, %v1671
      %s1680 = scalar_lea.vmem %s4, 8
      %v1681 = vld [vmem:[%s1680] sm:$0xf]
      %s1682 = scalar_lea.vmem %s4, 20
      %v1683 = vld [vmem:[%s1682] sm:$0xf]
      %v1685 = vsel %vm904, %v1683, 0
      %1687 = vmatprep.subr.mxu0 0.0
      %1688 = vmatpush1.msra.mxu0 %v1685
      %1689 = vmatprep.subr.mxu0 0.0
      %1690 = vmatpush1.msra.mxu0 0.0
      %1691 = vmatprep.subr.mxu0 0.0
      %1692 = vmatpush1.msra.mxu0 0.0
      %1693 = vmatprep.subr.mxu0 0.0
      %1694 = vmatpush1.msra.mxu0 0.0
      %1695 = vmatprep.subr.mxu0 0.0
      %1696 = vmatpush1.msra.mxu0 0.0
      %1697 = vmatprep.subr.mxu0 0.0
      %1698 = vmatpush1.msra.mxu0 0.0
      %1699 = vmatprep.subr.mxu0 0.0
      %1700 = vmatpush1.msra.mxu0 0.0
      %1701 = vmatprep.subr.mxu0 0.0
      %1702 = vmatpush1.msra.mxu0 0.0
      %1703 = vmatprep.subr.mxu0 0.0
      %1704 = vmatpush1.msra.mxu0 0.0
      %1705 = vmatprep.subr.mxu0 0.0
      %1706 = vmatpush1.msra.mxu0 0.0
      %1707 = vmatprep.subr.mxu0 0.0
      %1708 = vmatpush1.msra.mxu0 0.0
      %1709 = vmatprep.subr.mxu0 0.0
      %1710 = vmatpush1.msra.mxu0 0.0
      %1711 = vmatprep.subr.mxu0 0.0
      %1712 = vmatpush1.msra.mxu0 0.0
      %1713 = vmatprep.subr.mxu0 0.0
      %1714 = vmatpush1.msra.mxu0 0.0
      %1715 = vmatprep.subr.mxu0 0.0
      %1716 = vmatpush1.msra.mxu0 0.0
      %1717 = vmatprep.subr.mxu0 0.0
      %1718 = vmatpush1.msra.mxu0 0.0
      %1719 = vmatprep.subr.mxu0 0.0
      %1720 = vmatpush1.msra.mxu0 0.0
      %1721 = vmatprep.subr.mxu0 0.0
      %1722 = vmatpush1.msra.mxu0 0.0
      %1723 = vmatprep.subr.mxu0 0.0
      %1724 = vmatpush1.msra.mxu0 0.0
      %1725 = vmatprep.subr.mxu0 0.0
      %1726 = vmatpush1.msra.mxu0 0.0
      %1727 = vmatprep.subr.mxu0 0.0
      %1728 = vmatpush1.msra.mxu0 0.0
      %1729 = vmatprep.subr.mxu0 0.0
      %1730 = vmatpush1.msra.mxu0 0.0
      %1731 = vmatprep.subr.mxu0 0.0
      %1732 = vmatpush1.msra.mxu0 0.0
      %1733 = vmatprep.subr.mxu0 0.0
      %1734 = vmatpush1.msra.mxu0 0.0
      %1735 = vmatprep.subr.mxu0 0.0
      %1736 = vmatpush1.msra.mxu0 0.0
      %1737 = vmatprep.subr.mxu0 0.0
      %1738 = vmatpush1.msra.mxu0 0.0
      %1739 = vmatprep.subr.mxu0 0.0
      %1740 = vmatpush1.msra.mxu0 0.0
      %1741 = vmatprep.subr.mxu0 0.0
      %1742 = vmatpush1.msra.mxu0 0.0
      %1743 = vmatprep.subr.mxu0 0.0
      %1744 = vmatpush1.msra.mxu0 0.0
      %1745 = vmatprep.subr.mxu0 0.0
      %1746 = vmatpush1.msra.mxu0 0.0
      %1747 = vmatprep.subr.mxu0 0.0
      %1748 = vmatpush1.msra.mxu0 0.0
      %1749 = vmatprep.subr.mxu0 0.0
      %1750 = vmatpush1.msra.mxu0 0.0
      %1751 = vmatprep.mubr.f32.mxu0 0.0
      %1752 = vmatmul.mubr.f32.gmra.mrb[0].mxu0 %v881
      %v1753 = vpop.f32.mrb[0].mxu0
      %v1754 = vadd.f32 0.0, %v1753
      %v1755 = vpop.f32.mrb[0].mxu0
      %1756 = vmatprep.mubr.f32.mxu0 0.0
      %1757 = vmatmul.mubr.f32.gmra.mrb[0].mxu0 %v884
      %v1758 = vpop.f32.mrb[0].mxu0
      %v1759 = vadd.f32 0.0, %v1758
      %v1760 = vpop.f32.mrb[0].mxu0
      %1761 = vmatprep.mubr.f32.mxu0 0.0
      %1762 = vmatmul.mubr.f32.gmra.mrb[0].mxu0 %v887
      %v1763 = vpop.f32.mrb[0].mxu0
      %v1764 = vadd.f32 0.0, %v1763
      %v1765 = vpop.f32.mrb[0].mxu0
      %1766 = vmatprep.mubr.f32.mxu0 0.0
      %1767 = vmatmul.mubr.f32.gmra.mrb[0].mxu0 %v890
      %v1768 = vpop.f32.mrb[0].mxu0
      %v1769 = vadd.f32 0.0, %v1768
      %v1770 = vpop.f32.mrb[0].mxu0
      %1771 = vmatprep.mubr.f32.mxu0 0.0
      %1772 = vmatmul.mubr.f32.gmra.mrb[0].mxu0 %v893
      %v1773 = vpop.f32.mrb[0].mxu0
      %v1774 = vadd.f32 0.0, %v1773
      %v1775 = vpop.f32.mrb[0].mxu0
      %1776 = vmatprep.mubr.f32.mxu0 0.0
      %1777 = vmatmul.mubr.f32.gmra.mrb[0].mxu0 %v896
      %v1778 = vpop.f32.mrb[0].mxu0
      %v1779 = vadd.f32 0.0, %v1778
      %v1780 = vpop.f32.mrb[0].mxu0
      %1781 = vmatprep.mubr.f32.mxu0 0.0
      %1782 = vmatmul.mubr.f32.gmra.mrb[0].mxu0 %v899
      %v1783 = vpop.f32.mrb[0].mxu0
      %v1784 = vadd.f32 0.0, %v1783
      %v1785 = vpop.f32.mrb[0].mxu0
      %1786 = vmatprep.mubr.f32.mxu0 0.0
      %1787 = vmatmul.mubr.f32.gmra.mrb[0].mxu0 %v902
      %v1788 = vpop.f32.mrb[0].mxu0
      %v1789 = vadd.f32 0.0, %v1788
      %v1790 = vpop.f32.mrb[0].mxu0
      %1791 = vdwg.mxu0
      %v1793 = vsel %vm904, %v1681, 0
      %1795 = vmatprep.subr.mxu0 0.0
      %1796 = vmatpush1.msra.mxu0 %v1793
      %1797 = vmatprep.subr.mxu0 0.0
      %1798 = vmatpush1.msra.mxu0 0.0
      %1799 = vmatprep.subr.mxu0 0.0
      %1800 = vmatpush1.msra.mxu0 0.0
      %1801 = vmatprep.subr.mxu0 0.0
      %1802 = vmatpush1.msra.mxu0 0.0
      %1803 = vmatprep.subr.mxu0 0.0
      %1804 = vmatpush1.msra.mxu0 0.0
      %1805 = vmatprep.subr.mxu0 0.0
      %1806 = vmatpush1.msra.mxu0 0.0
      %1807 = vmatprep.subr.mxu0 0.0
      %1808 = vmatpush1.msra.mxu0 0.0
      %1809 = vmatprep.subr.mxu0 0.0
      %1810 = vmatpush1.msra.mxu0 0.0
      %1811 = vmatprep.subr.mxu0 0.0
      %1812 = vmatpush1.msra.mxu0 0.0
      %1813 = vmatprep.subr.mxu0 0.0
      %1814 = vmatpush1.msra.mxu0 0.0
      %1815 = vmatprep.subr.mxu0 0.0
      %1816 = vmatpush1.msra.mxu0 0.0
      %1817 = vmatprep.subr.mxu0 0.0
      %1818 = vmatpush1.msra.mxu0 0.0
      %1819 = vmatprep.subr.mxu0 0.0
      %1820 = vmatpush1.msra.mxu0 0.0
      %1821 = vmatprep.subr.mxu0 0.0
      %1822 = vmatpush1.msra.mxu0 0.0
      %1823 = vmatprep.subr.mxu0 0.0
      %1824 = vmatpush1.msra.mxu0 0.0
      %1825 = vmatprep.subr.mxu0 0.0
      %1826 = vmatpush1.msra.mxu0 0.0
      %1827 = vmatprep.subr.mxu0 0.0
      %1828 = vmatpush1.msra.mxu0 0.0
      %1829 = vmatprep.subr.mxu0 0.0
      %1830 = vmatpush1.msra.mxu0 0.0
      %1831 = vmatprep.subr.mxu0 0.0
      %1832 = vmatpush1.msra.mxu0 0.0
      %1833 = vmatprep.subr.mxu0 0.0
      %1834 = vmatpush1.msra.mxu0 0.0
      %1835 = vmatprep.subr.mxu0 0.0
      %1836 = vmatpush1.msra.mxu0 0.0
      %1837 = vmatprep.subr.mxu0 0.0
      %1838 = vmatpush1.msra.mxu0 0.0
      %1839 = vmatprep.subr.mxu0 0.0
      %1840 = vmatpush1.msra.mxu0 0.0
      %1841 = vmatprep.subr.mxu0 0.0
      %1842 = vmatpush1.msra.mxu0 0.0
      %1843 = vmatprep.subr.mxu0 0.0
      %1844 = vmatpush1.msra.mxu0 0.0
      %1845 = vmatprep.subr.mxu0 0.0
      %1846 = vmatpush1.msra.mxu0 0.0
      %1847 = vmatprep.subr.mxu0 0.0
      %1848 = vmatpush1.msra.mxu0 0.0
      %1849 = vmatprep.subr.mxu0 0.0
      %1850 = vmatpush1.msra.mxu0 0.0
      %1851 = vmatprep.subr.mxu0 0.0
      %1852 = vmatpush1.msra.mxu0 0.0
      %1853 = vmatprep.subr.mxu0 0.0
      %1854 = vmatpush1.msra.mxu0 0.0
      %1855 = vmatprep.subr.mxu0 0.0
      %1856 = vmatpush1.msra.mxu0 0.0
      %1857 = vmatprep.subr.mxu0 0.0
      %1858 = vmatpush1.msra.mxu0 0.0
      %1859 = vmatprep.mubr.f32.mxu0 0.0
      %1860 = vmatmul.mubr.f32.gmra.mrb[0].mxu0 %v1014
      %v1861 = vpop.f32.mrb[0].mxu0
      %v1862 = vadd.f32 %v1754, %v1861
      %v1863 = vpop.f32.mrb[0].mxu0
      %1864 = vmatprep.mubr.f32.mxu0 0.0
      %1865 = vmatmul.mubr.f32.gmra.mrb[0].mxu0 %v1017
      %v1866 = vpop.f32.mrb[0].mxu0
      %v1867 = vadd.f32 %v1759, %v1866
      %v1868 = vpop.f32.mrb[0].mxu0
      %1869 = vmatprep.mubr.f32.mxu0 0.0
      %1870 = vmatmul.mubr.f32.gmra.mrb[0].mxu0 %v881
      %v1871 = vpop.f32.mrb[0].mxu0
      %v1872 = vadd.f32 %v1764, %v1871
      %v1873 = vpop.f32.mrb[0].mxu0
      %1874 = vmatprep.mubr.f32.mxu0 0.0
      %1875 = vmatmul.mubr.f32.gmra.mrb[0].mxu0 %v884
      %v1876 = vpop.f32.mrb[0].mxu0
      %v1877 = vadd.f32 %v1769, %v1876
      %v1878 = vpop.f32.mrb[0].mxu0
      %1879 = vmatprep.mubr.f32.mxu0 0.0
      %1880 = vmatmul.mubr.f32.gmra.mrb[0].mxu0 %v887
      %v1881 = vpop.f32.mrb[0].mxu0
      %v1882 = vadd.f32 %v1774, %v1881
      %v1883 = vpop.f32.mrb[0].mxu0
      %1884 = vmatprep.mubr.f32.mxu0 0.0
      %1885 = vmatmul.mubr.f32.gmra.mrb[0].mxu0 %v890
      %v1886 = vpop.f32.mrb[0].mxu0
      %v1887 = vadd.f32 %v1779, %v1886
      %v1888 = vpop.f32.mrb[0].mxu0
      %1889 = vmatprep.mubr.f32.mxu0 0.0
      %1890 = vmatmul.mubr.f32.gmra.mrb[0].mxu0 %v893
      %v1891 = vpop.f32.mrb[0].mxu0
      %v1892 = vadd.f32 %v1784, %v1891
      %v1893 = vpop.f32.mrb[0].mxu0
      %1894 = vmatprep.mubr.f32.mxu0 0.0
      %1895 = vmatmul.mubr.f32.gmra.mrb[0].mxu0 %v896
      %v1896 = vpop.f32.mrb[0].mxu0
      %v1897 = vadd.f32 %v1789, %v1896
      %v1898 = vpop.f32.mrb[0].mxu0
      %1899 = vdwg.mxu0
      %s1900 = scalar_lea.vmem %s4, 32
      %v1901 = vld [vmem:[%s1900] sm:$0xf]
      %v1903 = vsel %vm904, %v1901, 0
      %1905 = vmatprep.subr.mxu0 0.0
      %1906 = vmatpush1.msra.mxu0 %v1903
      %1907 = vmatprep.subr.mxu0 0.0
      %1908 = vmatpush1.msra.mxu0 0.0
      %1909 = vmatprep.subr.mxu0 0.0
      %1910 = vmatpush1.msra.mxu0 0.0
      %1911 = vmatprep.subr.mxu0 0.0
      %1912 = vmatpush1.msra.mxu0 0.0
      %1913 = vmatprep.subr.mxu0 0.0
      %1914 = vmatpush1.msra.mxu0 0.0
      %1915 = vmatprep.subr.mxu0 0.0
      %1916 = vmatpush1.msra.mxu0 0.0
      %1917 = vmatprep.subr.mxu0 0.0
      %1918 = vmatpush1.msra.mxu0 0.0
      %1919 = vmatprep.subr.mxu0 0.0
      %1920 = vmatpush1.msra.mxu0 0.0
      %1921 = vmatprep.subr.mxu0 0.0
      %1922 = vmatpush1.msra.mxu0 0.0
      %1923 = vmatprep.subr.mxu0 0.0
      %1924 = vmatpush1.msra.mxu0 0.0
      %1925 = vmatprep.subr.mxu0 0.0
      %1926 = vmatpush1.msra.mxu0 0.0
      %1927 = vmatprep.subr.mxu0 0.0
      %1928 = vmatpush1.msra.mxu0 0.0
      %1929 = vmatprep.subr.mxu0 0.0
      %1930 = vmatpush1.msra.mxu0 0.0
      %1931 = vmatprep.subr.mxu0 0.0
      %1932 = vmatpush1.msra.mxu0 0.0
      %1933 = vmatprep.subr.mxu0 0.0
      %1934 = vmatpush1.msra.mxu0 0.0
      %1935 = vmatprep.subr.mxu0 0.0
      %1936 = vmatpush1.msra.mxu0 0.0
      %1937 = vmatprep.subr.mxu0 0.0
      %1938 = vmatpush1.msra.mxu0 0.0
      %1939 = vmatprep.subr.mxu0 0.0
      %1940 = vmatpush1.msra.mxu0 0.0
      %1941 = vmatprep.subr.mxu0 0.0
      %1942 = vmatpush1.msra.mxu0 0.0
      %1943 = vmatprep.subr.mxu0 0.0
      %1944 = vmatpush1.msra.mxu0 0.0
      %1945 = vmatprep.subr.mxu0 0.0
      %1946 = vmatpush1.msra.mxu0 0.0
      %1947 = vmatprep.subr.mxu0 0.0
      %1948 = vmatpush1.msra.mxu0 0.0
      %1949 = vmatprep.subr.mxu0 0.0
      %1950 = vmatpush1.msra.mxu0 0.0
      %1951 = vmatprep.subr.mxu0 0.0
      %1952 = vmatpush1.msra.mxu0 0.0
      %1953 = vmatprep.subr.mxu0 0.0
      %1954 = vmatpush1.msra.mxu0 0.0
      %1955 = vmatprep.subr.mxu0 0.0
      %1956 = vmatpush1.msra.mxu0 0.0
      %1957 = vmatprep.subr.mxu0 0.0
      %1958 = vmatpush1.msra.mxu0 0.0
      %1959 = vmatprep.subr.mxu0 0.0
      %1960 = vmatpush1.msra.mxu0 0.0
      %1961 = vmatprep.subr.mxu0 0.0
      %1962 = vmatpush1.msra.mxu0 0.0
      %1963 = vmatprep.subr.mxu0 0.0
      %1964 = vmatpush1.msra.mxu0 0.0
      %1965 = vmatprep.subr.mxu0 0.0
      %1966 = vmatpush1.msra.mxu0 0.0
      %1967 = vmatprep.subr.mxu0 0.0
      %1968 = vmatpush1.msra.mxu0 0.0
      %1969 = vmatprep.mubr.f32.mxu0 0.0
      %1970 = vmatmul.mubr.f32.gmra.mrb[0].mxu0 %v1138
      %v1971 = vpop.f32.mrb[0].mxu0
      %v1972 = vadd.f32 0.0, %v1971
      %v1973 = vpop.f32.mrb[0].mxu0
      %1974 = vmatprep.mubr.f32.mxu0 0.0
      %1975 = vmatmul.mubr.f32.gmra.mrb[0].mxu0 %v1141
      %v1976 = vpop.f32.mrb[0].mxu0
      %v1977 = vadd.f32 0.0, %v1976
      %v1978 = vpop.f32.mrb[0].mxu0
      %1979 = vmatprep.mubr.f32.mxu0 0.0
      %1980 = vmatmul.mubr.f32.gmra.mrb[0].mxu0 %v1144
      %v1981 = vpop.f32.mrb[0].mxu0
      %v1982 = vadd.f32 0.0, %v1981
      %v1983 = vpop.f32.mrb[0].mxu0
      %1984 = vmatprep.mubr.f32.mxu0 0.0
      %1985 = vmatmul.mubr.f32.gmra.mrb[0].mxu0 %v1147
      %v1986 = vpop.f32.mrb[0].mxu0
      %v1987 = vadd.f32 0.0, %v1986
      %v1988 = vpop.f32.mrb[0].mxu0
      %1989 = vmatprep.mubr.f32.mxu0 0.0
      %1990 = vmatmul.mubr.f32.gmra.mrb[0].mxu0 %v1150
      %v1991 = vpop.f32.mrb[0].mxu0
      %v1992 = vadd.f32 0.0, %v1991
      %v1993 = vpop.f32.mrb[0].mxu0
      %1994 = vmatprep.mubr.f32.mxu0 0.0
      %1995 = vmatmul.mubr.f32.gmra.mrb[0].mxu0 %v1153
      %v1996 = vpop.f32.mrb[0].mxu0
      %v1997 = vadd.f32 0.0, %v1996
      %v1998 = vpop.f32.mrb[0].mxu0
      %1999 = vmatprep.mubr.f32.mxu0 0.0
      %2000 = vmatmul.mubr.f32.gmra.mrb[0].mxu0 %v1156
      %v2001 = vpop.f32.mrb[0].mxu0
      %v2002 = vadd.f32 0.0, %v2001
      %v2003 = vpop.f32.mrb[0].mxu0
      %2004 = vmatprep.mubr.f32.mxu0 0.0
      %2005 = vmatmul.mubr.f32.gmra.mrb[0].mxu0 %v1159
      %v2006 = vpop.f32.mrb[0].mxu0
      %v2007 = vadd.f32 0.0, %v2006
      %v2008 = vpop.f32.mrb[0].mxu0
      %2009 = vdwg.mxu0
      %v2010 = vadd.f32 %v1862, %v1972
      %v2011 = vadd.f32 %v1867, %v1977
      %v2012 = vadd.f32 %v1872, %v1982
      %v2013 = vadd.f32 %v1877, %v1987
      %v2014 = vadd.f32 %v1882, %v1992
      %v2015 = vadd.f32 %v1887, %v1997
      %v2016 = vadd.f32 %v1892, %v2002
      %v2017 = vadd.f32 %v1897, %v2007
      %v2018 = vrot.slane %v2010, 1
      %v2019 = vrot.slane %v2011, 1
      %v2020 = vrot.slane %v2012, 1
      %v2021 = vrot.slane %v2013, 1
      %v2022 = vrot.slane %v2014, 1
      %v2023 = vrot.slane %v2015, 1
      %v2024 = vrot.slane %v2016, 1
      %v2025 = vrot.slane %v2017, 1
      %vm2026 = vcmp.lt.s32.totalorder %v763, 7
      %v2027 = vsel %vm2026, %v2024, %v2025
      %v2028 = vsel %vm2026, %v2023, %v2024
      %v2029 = vsel %vm2026, %v2022, %v2023
      %v2030 = vsel %vm2026, %v2021, %v2022
      %v2031 = vsel %vm2026, %v2020, %v2021
      %v2032 = vsel %vm2026, %v2019, %v2020
      %v2033 = vsel %vm2026, %v2018, %v2019
      %v2034 = vsel %vm2026, %v2025, %v2018
      %vm2035 = vcmp.lt.s32.totalorder %v859, 15
      %vm2036 = vcmp.lt.s32.totalorder %v860, 15
      %vm2037 = vcmp.lt.s32.totalorder %v861, 15
      %vm2038 = vcmp.lt.s32.totalorder %v862, 15
      %vm2039 = vcmp.lt.s32.totalorder %v863, 15
      %vm2040 = vcmp.lt.s32.totalorder %v864, 15
      %vm2041 = vcmp.lt.s32.totalorder %v865, 15
      %vm2042 = vcmp.lt.s32.totalorder %v866, 15
      %v2043 = vsel %vm2035, 1, 0
      %v2044 = vsel %vm2036, 1, 0
      %v2045 = vsel %vm2037, 1, 0
      %v2046 = vsel %vm2038, 1, 0
      %v2047 = vsel %vm2039, 1, 0
      %v2048 = vsel %vm2040, 1, 0
      %v2049 = vsel %vm2041, 1, 0
      %v2050 = vsel %vm2042, 1, 0
      %vm2051 = vcmp.eq.s32.totalorder %v2043, 1
      %vm2052 = vcmp.eq.s32.totalorder %v2044, 1
      %vm2053 = vcmp.eq.s32.totalorder %v2045, 1
      %vm2054 = vcmp.eq.s32.totalorder %v2046, 1
      %vm2055 = vcmp.eq.s32.totalorder %v2047, 1
      %vm2056 = vcmp.eq.s32.totalorder %v2048, 1
      %vm2057 = vcmp.eq.s32.totalorder %v2049, 1
      %vm2058 = vcmp.eq.s32.totalorder %v2050, 1
      %v2059 = vsel %vm2051, %v2033, 0.0
      %v2060 = vsel %vm2052, %v2032, 0.0
      %v2061 = vsel %vm2053, %v2031, 0.0
      %v2062 = vsel %vm2054, %v2030, 0.0
      %v2063 = vsel %vm2055, %v2029, 0.0
      %v2064 = vsel %vm2056, %v2028, 0.0
      %v2065 = vsel %vm2057, %v2027, 0.0
      %v2066 = vsel %vm2058, %v2034, 0.0
      %v2067 = vadd.f32 %v1672, %v2059
      %v2068 = vadd.f32 %v1673, %v2060
      %v2069 = vadd.f32 %v1674, %v2061
      %v2070 = vadd.f32 %v1675, %v2062
      %v2071 = vadd.f32 %v1676, %v2063
      %v2072 = vadd.f32 %v1677, %v2064
      %v2073 = vadd.f32 %v1678, %v2065
      %v2074 = vadd.f32 %v1679, %v2066
      %v2075 = vmax.f32 %v2067, 0.0
      %v2076 = vmax.f32 %v2068, 0.0
      %v2077 = vmax.f32 %v2069, 0.0
      %v2078 = vmax.f32 %v2070, 0.0
      %v2079 = vmax.f32 %v2071, 0.0
      %v2080 = vmax.f32 %v2072, 0.0
      %v2081 = vmax.f32 %v2073, 0.0
      %v2082 = vmax.f32 %v2074, 0.0
      %v2083 = vld [vmem:[%s5] sm:$0xf]
      %v2084 = vld [vmem:[%s371] sm:$0xff]
      %v2085 = vld [vmem:[%s371 + $0x8] sm:$0xff]
      %v2086 = vld [vmem:[%s371 + $0x10] sm:$0xff]
      %v2087 = vld [vmem:[%s371 + $0x18] sm:$0xff]
      %v2088 = vld [vmem:[%s371 + $0x20] sm:$0xff]
      %v2089 = vld [vmem:[%s371 + $0x28] sm:$0xff]
      %v2090 = vld [vmem:[%s371 + $0x30] sm:$0xff]
      %v2091 = vld [vmem:[%s371 + $0x38] sm:$0xff]
      %v2093 = vsel %vm567, %v2075, 0
      %v2096 = vsel %vm567, %v2076, 0
      %v2099 = vsel %vm567, %v2077, 0
      %v2102 = vsel %vm567, %v2078, 0
      %v2105 = vsel %vm567, %v2079, 0
      %v2108 = vsel %vm567, %v2080, 0
      %v2111 = vsel %vm567, %v2081, 0
      %v2114 = vsel %vm567, %v2082, 0
      %v2117 = vsel %vm904, %v2083, 0
      %2119 = vmatprep.subr.mxu0 0.0
      %2120 = vmatpush1.msra.mxu0 %v2117
      %2121 = vmatprep.subr.mxu0 0.0
      %2122 = vmatpush1.msra.mxu0 0.0
      %2123 = vmatprep.subr.mxu0 0.0
      %2124 = vmatpush1.msra.mxu0 0.0
      %2125 = vmatprep.subr.mxu0 0.0
      %2126 = vmatpush1.msra.mxu0 0.0
      %2127 = vmatprep.subr.mxu0 0.0
      %2128 = vmatpush1.msra.mxu0 0.0
      %2129 = vmatprep.subr.mxu0 0.0
      %2130 = vmatpush1.msra.mxu0 0.0
      %2131 = vmatprep.subr.mxu0 0.0
      %2132 = vmatpush1.msra.mxu0 0.0
      %2133 = vmatprep.subr.mxu0 0.0
      %2134 = vmatpush1.msra.mxu0 0.0
      %2135 = vmatprep.subr.mxu0 0.0
      %2136 = vmatpush1.msra.mxu0 0.0
      %2137 = vmatprep.subr.mxu0 0.0
      %2138 = vmatpush1.msra.mxu0 0.0
      %2139 = vmatprep.subr.mxu0 0.0
      %2140 = vmatpush1.msra.mxu0 0.0
      %2141 = vmatprep.subr.mxu0 0.0
      %2142 = vmatpush1.msra.mxu0 0.0
      %2143 = vmatprep.subr.mxu0 0.0
      %2144 = vmatpush1.msra.mxu0 0.0
      %2145 = vmatprep.subr.mxu0 0.0
      %2146 = vmatpush1.msra.mxu0 0.0
      %2147 = vmatprep.subr.mxu0 0.0
      %2148 = vmatpush1.msra.mxu0 0.0
      %2149 = vmatprep.subr.mxu0 0.0
      %2150 = vmatpush1.msra.mxu0 0.0
      %2151 = vmatprep.subr.mxu0 0.0
      %2152 = vmatpush1.msra.mxu0 0.0
      %2153 = vmatprep.subr.mxu0 0.0
      %2154 = vmatpush1.msra.mxu0 0.0
      %2155 = vmatprep.subr.mxu0 0.0
      %2156 = vmatpush1.msra.mxu0 0.0
      %2157 = vmatprep.subr.mxu0 0.0
      %2158 = vmatpush1.msra.mxu0 0.0
      %2159 = vmatprep.subr.mxu0 0.0
      %2160 = vmatpush1.msra.mxu0 0.0
      %2161 = vmatprep.subr.mxu0 0.0
      %2162 = vmatpush1.msra.mxu0 0.0
      %2163 = vmatprep.subr.mxu0 0.0
      %2164 = vmatpush1.msra.mxu0 0.0
      %2165 = vmatprep.subr.mxu0 0.0
      %2166 = vmatpush1.msra.mxu0 0.0
      %2167 = vmatprep.subr.mxu0 0.0
      %2168 = vmatpush1.msra.mxu0 0.0
      %2169 = vmatprep.subr.mxu0 0.0
      %2170 = vmatpush1.msra.mxu0 0.0
      %2171 = vmatprep.subr.mxu0 0.0
      %2172 = vmatpush1.msra.mxu0 0.0
      %2173 = vmatprep.subr.mxu0 0.0
      %2174 = vmatpush1.msra.mxu0 0.0
      %2175 = vmatprep.subr.mxu0 0.0
      %2176 = vmatpush1.msra.mxu0 0.0
      %2177 = vmatprep.subr.mxu0 0.0
      %2178 = vmatpush1.msra.mxu0 0.0
      %2179 = vmatprep.subr.mxu0 0.0
      %2180 = vmatpush1.msra.mxu0 0.0
      %2181 = vmatprep.subr.mxu0 0.0
      %2182 = vmatpush1.msra.mxu0 0.0
      %2183 = vmatprep.mubr.f32.mxu0 0.0
      %2184 = vmatmul.mubr.f32.gmra.mrb[0].mxu0 %v2093
      %v2185 = vpop.f32.mrb[0].mxu0
      %v2186 = vadd.f32 %v2084, %v2185
      %v2187 = vpop.f32.mrb[0].mxu0
      %2188 = vmatprep.mubr.f32.mxu0 0.0
      %2189 = vmatmul.mubr.f32.gmra.mrb[0].mxu0 %v2096
      %v2190 = vpop.f32.mrb[0].mxu0
      %v2191 = vadd.f32 %v2085, %v2190
      %v2192 = vpop.f32.mrb[0].mxu0
      %2193 = vmatprep.mubr.f32.mxu0 0.0
      %2194 = vmatmul.mubr.f32.gmra.mrb[0].mxu0 %v2099
      %v2195 = vpop.f32.mrb[0].mxu0
      %v2196 = vadd.f32 %v2086, %v2195
      %v2197 = vpop.f32.mrb[0].mxu0
      %2198 = vmatprep.mubr.f32.mxu0 0.0
      %2199 = vmatmul.mubr.f32.gmra.mrb[0].mxu0 %v2102
      %v2200 = vpop.f32.mrb[0].mxu0
      %v2201 = vadd.f32 %v2087, %v2200
      %v2202 = vpop.f32.mrb[0].mxu0
      %2203 = vmatprep.mubr.f32.mxu0 0.0
      %2204 = vmatmul.mubr.f32.gmra.mrb[0].mxu0 %v2105
      %v2205 = vpop.f32.mrb[0].mxu0
      %v2206 = vadd.f32 %v2088, %v2205
      %v2207 = vpop.f32.mrb[0].mxu0
      %2208 = vmatprep.mubr.f32.mxu0 0.0
      %2209 = vmatmul.mubr.f32.gmra.mrb[0].mxu0 %v2108
      %v2210 = vpop.f32.mrb[0].mxu0
      %v2211 = vadd.f32 %v2089, %v2210
      %v2212 = vpop.f32.mrb[0].mxu0
      %2213 = vmatprep.mubr.f32.mxu0 0.0
      %2214 = vmatmul.mubr.f32.gmra.mrb[0].mxu0 %v2111
      %v2215 = vpop.f32.mrb[0].mxu0
      %v2216 = vadd.f32 %v2090, %v2215
      %v2217 = vpop.f32.mrb[0].mxu0
      %2218 = vmatprep.mubr.f32.mxu0 0.0
      %2219 = vmatmul.mubr.f32.gmra.mrb[0].mxu0 %v2114
      %v2220 = vpop.f32.mrb[0].mxu0
      %v2221 = vadd.f32 %v2091, %v2220
      %v2222 = vpop.f32.mrb[0].mxu0
      %2223 = vdwg.mxu0
      %v2224 = vmax.f32 %v2186, 0.0
      %v2225 = vmax.f32 %v2191, 0.0
      %v2226 = vmax.f32 %v2196, 0.0
      %v2227 = vmax.f32 %v2201, 0.0
      %v2228 = vmax.f32 %v2206, 0.0
      %v2229 = vmax.f32 %v2211, 0.0
      %v2230 = vmax.f32 %v2216, 0.0
      %v2231 = vmax.f32 %v2221, 0.0
      %2232 = vst.msk [vmem:[%s417] sm:$0xff] %vm429, %v2224
      %2233 = vst.msk [vmem:[%s417 + $0x8] sm:$0xff] %vm429, %v2225
      %2234 = vst.msk [vmem:[%s417 + $0x10] sm:$0xff] %vm429, %v2226
      %2235 = vst.msk [vmem:[%s417 + $0x18] sm:$0xff] %vm429, %v2227
      %2236 = vst.msk [vmem:[%s417 + $0x20] sm:$0xff] %vm429, %v2228
      %2237 = vst.msk [vmem:[%s417 + $0x28] sm:$0xff] %vm429, %v2229
      %2238 = vst.msk [vmem:[%s417 + $0x30] sm:$0xff] %vm429, %v2230
      %2239 = vst.msk [vmem:[%s417 + $0x38] sm:$0xff] %vm429, %v2231
      %s2240 = smul.u32 8, %s22
      %p2241 = scmp.lt.s32.totalorder %s21, 1
      %s2242 = scalar_select %p2241, %s21, 1
      %p2243 = scmp.lt.s32.totalorder %s2240, 31
      %s2244 = scalar_select %p2243, %s2240, 31
      %s2245 = smul.addr %s2242, 32
      %s2246 = sadd.s32 %s2244, %s2245
      %s2247 = smul.addr %s2246, 8
      %s2248 = scalar_lea.vmem %s6, %s2247
      // Predicated region
      $region45: #{tpu_custom_call.1} parent=43 // pred_check
        %p2249 = pneg %p212
      $region46: #{tpu_custom_call.1} parent=43 // pred_check_branch
        %2251 = sbr.rel (%p2249) target = $region48
      $region47: #{tpu_custom_call.1} parent=43 // pred_region
        %s2252 = smul.u32 8, %s22
      $region48: #{tpu_custom_call.1} parent=43 // pred_fallthru
        _
    $region44: #{tpu_custom_call.1} parent=5 // pred_fallthru
      _
    %p2253 = scmp.le.s32.totalorder 2, %s12
    // Predicated region
    $region49: #{tpu_custom_call.1} parent=5 // pred_check
      %p2254 = pneg %p2253
    $region50: #{tpu_custom_call.1} parent=5 // pred_check_branch
      %2256 = sbr.rel (%p2254) target = $region52
    $region51: #{tpu_custom_call.1} parent=5 // pred_region
      %s2257 = ssub.s32 %s12, 2
      // Predicated region
      $region53: #{tpu_custom_call.1} parent=51 // pred_check
        %p2258 = pneg %p218
      $region54: #{tpu_custom_call.1} parent=51 // pred_check_branch
        %2260 = sbr.rel (%p2258) target = $region56
      $region55: #{tpu_custom_call.1} parent=51 // pred_region
        %s2261 = smul.u32 8, %s24
        %p2262 = scmp.lt.s32.totalorder %s23, 1
        %s2263 = scalar_select %p2262, %s23, 1
        %p2264 = scmp.lt.s32.totalorder %s2261, 31
        %s2265 = scalar_select %p2264, %s2261, 31
        %s2266 = smul.addr %s2263, 32
        %s2267 = sadd.s32 %s2265, %s2266
        %s2268 = smul.addr %s2267, 8
        %s2269 = scalar_lea.vmem %s6, %s2268
      $region56: #{tpu_custom_call.1} parent=51 // pred_fallthru
        _
    $region52: #{tpu_custom_call.1} parent=5 // pred_fallthru
      _
  $region6: #{tpu_custom_call.1} parent=0 // loop_footer
    %s16 = sadd.s32 1, %s12
  $region7: #{tpu_custom_call.1} parent=0 // loop_footer_branch
    %11 = sbr.rel target = $region3
  $region8: #{tpu_custom_call.1} parent=0 // loop_exit
    _

</llo_original>
